<compile_context>
chip_gen: v6e
topology: v6e:2x2x1
jax: 0.10.0
libtpu: 0.0.40
codegen_flags: <defaults>
</compile_context>

<pallas_src>
import numpy as np
import jax
import jax.numpy as jnp
from jax import lax
from jax.experimental import pallas as pl
from jax.experimental.pallas import tpu as pltpu

_LANE = 128  # lane width of a vreg; each gate block is padded to one vreg.


def _qem_kernel(x2d_ref, maskc_ref, mask2_ref, wih_ref, whh_ref, b_ref,
                wlin_ref, blin_ref, out_ref, gx_s, hs_s, hsr_s):
    """Whole problem lives in VMEM (a few hundred KiB at most).

    x2d_ref:   (T*Bp, F)      padded inputs, time-major, flattened rows
    maskc_ref: (T, Bp, 2H)    per-loop-step carry mask: fwd lanes = 1,
                              bwd lanes = (T-1-i < length)
    mask2_ref: (T, Bp)        validity mask for the time-softmax
    wih_ref:   (F, 2*GW)      x->gates, [0:GW) fwd-lane slab, [GW:2GW) bwd-lane slab
    whh_ref:   (2H, GW)       block-diagonal fused h->gates weight
    b_ref:     (1, 2*GW)      gate biases laid out like wih
    wlin_ref:  (2, 2H)        row 0 = [w_lin_fwd, 0], row 1 = [0, w_lin_bwd]
    blin_ref:  (1, 1)         linear bias
    out_ref:   (T, Bp)        padded log-softmax over the time axis
    gx_s:      (T*Bp, 2*GW)   scratch: precomputed x->gate contributions
    hs_s:      (T, Bp, 2H)    scratch: fused h stored at loop index i   (fwd lanes valid at time i)
    hsr_s:     (T, Bp, 2H)    scratch: fused h stored at time T-1-i     (bwd lanes valid at time t)
    """
    T, Bp, H2 = maskc_ref.shape
    GW = whh_ref.shape[1]          # 4 gate blocks x 128 lanes
    LANE = GW // 4

    # ---- hoisted: ONE MXU matmul for all x->gate terms (both dirs, all T) ----
    gx_s[...] = (jnp.dot(x2d_ref[...], wih_ref[...],
                         preferred_element_type=jnp.float32)
                 + b_ref[...])

    whh = whh_ref[...]                                 # (2H, GW), loaded once

    zeros = jnp.zeros((Bp, H2), jnp.float32)

    def step(i, carry):
        # Fused fwd (time i) + bwd (time T-1-i) LSTM cell.
        h, c = carry                                   # (Bp, 2H) each
        tb = T - 1 - i
        rf = pl.multiple_of(i * Bp, Bp)                # sublane-aligned row offsets
        rb = pl.multiple_of(tb * Bp, Bp)
        gates = (gx_s[pl.ds(rf, Bp), 0:GW]
                 + gx_s[pl.ds(rb, Bp), GW:2 * GW]
                 + jnp.dot(h, whh, preferred_element_type=jnp.float32))  # (Bp, GW)
        # Gate blocks start at 0 / 128 / 256 / 384: lane-aligned, no rotations.
        i_g = jax.nn.sigmoid(gates[:, 0:H2])
        f_g = jax.nn.sigmoid(gates[:, LANE:LANE + H2])
        g_g = jnp.tanh(gates[:, 2 * LANE:2 * LANE + H2])
        o_g = jax.nn.sigmoid(gates[:, 3 * LANE:3 * LANE + H2])
        c_new = f_g * c + i_g * g_g
        h_new = o_g * jnp.tanh(c_new)
        # Zero the bwd lanes while t >= length (fwd lanes of the mask are 1):
        # keeps the reverse state at zero until t == length-1, reproducing
        # PackedSequence reverse processing exactly.
        m = maskc_ref[i]
        h_new = h_new * m
        c_new = c_new * m
        hs_s[i] = h_new        # fwd half valid at time i
        hsr_s[tb] = h_new      # bwd half valid at time tb
        return h_new, c_new

    lax.fori_loop(0, T, step, (zeros, zeros), unroll=True)

    # ---- linear head + masked log-softmax over time (one-shot epilogue) ----
    wl = wlin_ref[...]                                          # (2, 2H)
    lf = jnp.sum(hs_s[...] * wl[0:1, :][None, :, :], axis=2)    # (T, Bp)
    lb = jnp.sum(hsr_s[...] * wl[1:2, :][None, :, :], axis=2)   # (T, Bp)
    lg = lf + lb + blin_ref[...]

    mask2 = mask2_ref[...]                                      # (T, Bp)
    lg = jnp.where(mask2 > 0.0, lg, jnp.float32(-1e10))         # pad value of
    mx = jnp.max(lg, axis=0, keepdims=True)                     # pad_packed_sequence
    e = jnp.exp(lg - mx)
    s = jnp.sum(e, axis=0, keepdims=True)
    out_ref[...] = (lg - mx) - jnp.log(s)                       # log(softmax(.))


def _packed_indices(lengths, T):
    """(t, b) gather indices in pack_padded_sequence(enforce_sorted=False)
    order, built fully vectorized."""
    lengths = np.asarray(lengths)
    order = np.argsort(-lengths, kind="stable")              # descending, stable
    sorted_lens = lengths[order]
    valid = np.arange(T)[:, None] < sorted_lens[None, :]     # (T, B) sorted cols
    t_idx, s_idx = np.nonzero(valid)                         # row-major == time-major
    return t_idx.astype(np.int32), order[s_idx].astype(np.int32)


def _build_slabs(params):
    """Pack the LSTM / linear parameters into lane-aligned weight slabs."""
    wih_f = np.asarray(params["wih_f"], np.float32)   # (4H, F)
    whh_f = np.asarray(params["whh_f"], np.float32)   # (4H, H)
    wih_b = np.asarray(params["wih_b"], np.float32)
    whh_b = np.asarray(params["whh_b"], np.float32)
    bf4 = np.asarray(params["bih_f"], np.float32) + np.asarray(params["bhh_f"], np.float32)
    bb4 = np.asarray(params["bih_b"], np.float32) + np.asarray(params["bhh_b"], np.float32)
    H = whh_f.shape[1]
    F = wih_f.shape[1]
    assert 2 * H <= _LANE, "gate layout assumes 2H <= 128"
    GW = 4 * _LANE

    wih_slab = np.zeros((F, 2 * GW), np.float32)
    whh_slab = np.zeros((2 * H, GW), np.float32)
    b_slab = np.zeros((1, 2 * GW), np.float32)
    for k in range(4):                                # gate order i, f, g, o
        c0 = k * _LANE
        rows = slice(k * H, (k + 1) * H)
        # fwd direction lives in lanes [c0, c0+H); bwd in [c0+H, c0+2H).
        wih_slab[:, c0:c0 + H] = wih_f[rows, :].T
        wih_slab[:, GW + c0 + H:GW + c0 + 2 * H] = wih_b[rows, :].T
        whh_slab[0:H, c0:c0 + H] = whh_f[rows, :].T
        whh_slab[H:2 * H, c0 + H:c0 + 2 * H] = whh_b[rows, :].T
        b_slab[0, c0:c0 + H] = bf4[rows]
        b_slab[0, GW + c0 + H:GW + c0 + 2 * H] = bb4[rows]

    w_lin = np.asarray(params["w_lin"], np.float32)   # (1, 2H) = [fwd | bwd]
    wlin2 = np.zeros((2, 2 * H), np.float32)
    wlin2[0, :H] = w_lin[0, :H]
    wlin2[1, H:] = w_lin[0, H:]
    blin = np.asarray(params["b_lin"], np.float32).reshape(1, 1)
    return wih_slab, whh_slab, b_slab, wlin2, blin


@jax.jit
def _qem_run(x2d, maskc, mask2, wih_slab, whh_slab, b_slab, wlin2, blin, flat_idx):
    T, Bp, H2 = maskc.shape
    GW = whh_slab.shape[1]
    TB = x2d.shape[0]
    vmem = pl.BlockSpec(memory_space=pltpu.MemorySpace.VMEM)
    padded = pl.pallas_call(
        _qem_kernel,
        out_shape=jax.ShapeDtypeStruct((T, Bp), jnp.float32),
        in_specs=[vmem] * 8,
        out_specs=vmem,
        scratch_shapes=[
            pltpu.VMEM((TB, 2 * GW), jnp.float32),   # precomputed x->gates
            pltpu.VMEM((T, Bp, H2), jnp.float32),    # fused h at loop index
            pltpu.VMEM((T, Bp, H2), jnp.float32),    # fused h at bwd time index
        ],
    )(x2d, maskc, mask2, wih_slab, whh_slab, b_slab, wlin2, blin)
    # packed-sequence gather as a cheap 1-D take, fused into the same jit
    return jnp.take(padded.reshape(-1), flat_idx)


def qem_forward(data, lengths, params):
    """data: (T, B, F) float32, zero-padded, time-major.
    lengths: host numpy int array (B,), all >= 1.
    Returns the flat packed log-probabilities, length = sum(lengths), in
    pack_padded_sequence(enforce_sorted=False) order — same as QEM.forward.
    """
    T, B, F = data.shape
    H = params["whh_f"].shape[1]
    lengths = np.asarray(lengths)
    assert np.all(lengths >= 1) and np.all(lengths <= T), "bad lengths"

    Bp = ((B + 7) // 8) * 8                       # sublane-pad the batch
    lengths_p = np.zeros((Bp,), np.int64)
    lengths_p[:B] = lengths

    mask_np = (np.arange(T)[:, None] < lengths_p[None, :]).astype(np.float32)  # (T, Bp)
    maskc_np = np.ones((T, Bp, 2 * H), np.float32)
    maskc_np[:, :, H:] = mask_np[::-1, :, None]   # at loop step i, bwd time is T-1-i

    data_np = np.asarray(data, np.float32)
    data_p = np.zeros((T, Bp, F), np.float32)
    data_p[:, :B, :] = data_np
    x2d = data_p.reshape(T * Bp, F)

    wih_slab, whh_slab, b_slab, wlin2, blin = _build_slabs(params)

    idx_t, idx_b = _packed_indices(lengths, T)
    flat_idx = (idx_t.astype(np.int32) * np.int32(Bp) + idx_b.astype(np.int32))

    return _qem_run(jnp.asarray(x2d), jnp.asarray(maskc_np), jnp.asarray(mask_np),
                    jnp.asarray(wih_slab), jnp.asarray(whh_slab), jnp.asarray(b_slab),
                    jnp.asarray(wlin2), jnp.asarray(blin), jnp.asarray(flat_idx))


def init_params(key, num_qubits):
    H = 2 * num_qubits
    F = num_qubits + 1
    ks = jax.random.split(key, 11)
    scale = 1.0 / np.sqrt(H)
    u = lambda k, shape: jax.random.uniform(k, shape, jnp.float32, -scale, scale)
    return {
        "wih_f": u(ks[0], (4 * H, F)),
        "whh_f": u(ks[1], (4 * H, H)),
        "bih_f": u(ks[2], (4 * H,)),
        "bhh_f": u(ks[3], (4 * H,)),
        "wih_b": u(ks[4], (4 * H, F)),
        "whh_b": u(ks[5], (4 * H, H)),
        "bih_b": u(ks[6], (4 * H,)),
        "bhh_b": u(ks[7], (4 * H,)),
        "w_lin": u(ks[8], (1, 2 * H)),
        "b_lin": u(ks[9], (1,)),
    }


if __name__ == "__main__":
    num_qubits = 6
    H = 2 * num_qubits          # 12
    F = num_qubits + 1          # 7
    B = 3
    T = 8
    lengths = np.array([8, 5, 6], dtype=np.int32)

    key = jax.random.PRNGKey(0)
    k_par, k_dat = jax.random.split(key)
    params = init_params(k_par, num_qubits)

    data = jax.random.normal(k_dat, (T, B, F), jnp.float32)
    # Packed sequences carry no data beyond each length: zero the padding.
    valid = (np.arange(T)[:, None] < lengths[None, :]).astype(np.float32)
    data = data * jnp.asarray(valid[:, :, None])

    out = qem_forward(data, lengths, params)
    out = jax.block_until_ready(out)

    assert out.shape == (int(lengths.sum()),), out.shape
    assert bool(jnp.all(jnp.isfinite(out)))
    assert bool(jnp.all(out <= 0.0))        # log of probabilities
    print("KERNEL_OK")
</pallas_src>

<mosaic_0001>
module attributes {stable_mosaic.version = 11 : i64} {
  func.func @_qem_kernel(%arg0: memref<64x7xf32, #tpu.memory_space<vmem>>, %arg1: memref<8x8x24xf32, #tpu.memory_space<vmem>>, %arg2: memref<8x8xf32, #tpu.memory_space<vmem>>, %arg3: memref<7x1024xf32, #tpu.memory_space<vmem>>, %arg4: memref<24x512xf32, #tpu.memory_space<vmem>>, %arg5: memref<1x1024xf32, #tpu.memory_space<vmem>>, %arg6: memref<2x24xf32, #tpu.memory_space<vmem>>, %arg7: memref<1x1xf32, #tpu.memory_space<vmem>>, %arg8: memref<8x8xf32, #tpu.memory_space<vmem>>, %arg9: memref<64x1024xf32, #tpu.memory_space<vmem>>, %arg10: memref<8x8x24xf32, #tpu.memory_space<vmem>>, %arg11: memref<8x8x24xf32, #tpu.memory_space<vmem>>) attributes {dimension_semantics = [], scalar_prefetch = 0 : i64, scratch_operands = 3 : i64, tpu.core_type = #tpu.core_type<tc>} {
    %c0 = arith.constant 0 : index
    %c0_0 = arith.constant 0 : index
    %0 = vector.load %arg0[%c0, %c0_0] : memref<64x7xf32, #tpu.memory_space<vmem>>, vector<64x7xf32>
    %c0_1 = arith.constant 0 : index
    %c0_2 = arith.constant 0 : index
    %1 = vector.load %arg3[%c0_1, %c0_2] : memref<7x1024xf32, #tpu.memory_space<vmem>>, vector<7x1024xf32>
    %cst = arith.constant dense<0.000000e+00> : vector<64x1024xf32>
    %2 = tpu.matmul %0, %1, %cst {dimension_numbers = #tpu.dot_dimension_numbers<[1], [0], [0], [1], [0, 0, 1, 1], [], []>} : vector<64x7xf32>, vector<7x1024xf32>, vector<64x1024xf32> -> vector<64x1024xf32>
    %c0_3 = arith.constant 0 : index
    %c0_4 = arith.constant 0 : index
    %3 = vector.load %arg5[%c0_3, %c0_4] : memref<1x1024xf32, #tpu.memory_space<vmem>>, vector<1x1024xf32>
    %4 = vector.broadcast %3 : vector<1x1024xf32> to vector<64x1024xf32>
    %5 = arith.addf %2, %4 : vector<64x1024xf32>
    %c0_5 = arith.constant 0 : index
    %c0_6 = arith.constant 0 : index
    %6 = vector.load %arg9[%c0_5, %c0_6] : memref<64x1024xf32, #tpu.memory_space<vmem>>, vector<64x1024xf32>
    tpu.vector_store %arg9[%c0_5, %c0_6], %5 {strides = array<i32>} : memref<64x1024xf32, #tpu.memory_space<vmem>>, vector<64x1024xf32>,
    %c0_7 = arith.constant 0 : index
    %c0_8 = arith.constant 0 : index
    %7 = vector.load %arg4[%c0_7, %c0_8] : memref<24x512xf32, #tpu.memory_space<vmem>>, vector<24x512xf32>
    %cst_9 = arith.constant 0.000000e+00 : f32
    %8 = vector.broadcast %cst_9 : f32 to vector<8x24xf32>
    %c0_i32 = arith.constant 0 : i32
    %c7_i32 = arith.constant 7 : i32
    %9 = arith.subi %c7_i32, %c0_i32 : i32
    %c8_i32 = arith.constant 8 : i32
    %10 = arith.muli %c0_i32, %c8_i32 : i32
    %11 = tpu.assume_multiple %10, 8 : i32
    %c8_i32_10 = arith.constant 8 : i32
    %12 = arith.muli %9, %c8_i32_10 : i32
    %13 = tpu.assume_multiple %12, 8 : i32
    %14 = arith.index_cast %11 : i32 to index
    %c0_11 = arith.constant 0 : index
    %15 = vector.load %arg9[%14, %c0_11] : memref<64x1024xf32, #tpu.memory_space<vmem>>, vector<8x512xf32>
    %16 = arith.index_cast %13 : i32 to index
    %c512 = arith.constant 512 : index
    %17 = vector.load %arg9[%16, %c512] : memref<64x1024xf32, #tpu.memory_space<vmem>>, vector<8x512xf32>
    %18 = arith.addf %15, %17 : vector<8x512xf32>
    %cst_12 = arith.constant dense<0.000000e+00> : vector<8x512xf32>
    %19 = tpu.matmul %8, %7, %cst_12 {dimension_numbers = #tpu.dot_dimension_numbers<[1], [0], [0], [1], [0, 0, 1, 1], [], []>} : vector<8x24xf32>, vector<24x512xf32>, vector<8x512xf32> -> vector<8x512xf32>
    %20 = arith.addf %18, %19 : vector<8x512xf32>
    %21 = vector.extract_strided_slice %20 {offsets = [0, 0], sizes = [8, 24], strides = [1, 1]} : vector<8x512xf32> to vector<8x24xf32>
    %22 = arith.negf %21 : vector<8x24xf32>
    %23 = math.exp %22 : vector<8x24xf32>
    %cst_13 = arith.constant 1.000000e+00 : f32
    %24 = vector.broadcast %cst_13 : f32 to vector<8x24xf32>
    %25 = arith.addf %24, %23 : vector<8x24xf32>
    %26 = arith.divf %24, %25 : vector<8x24xf32>
    %27 = vector.extract_strided_slice %20 {offsets = [0, 128], sizes = [8, 24], strides = [1, 1]} : vector<8x512xf32> to vector<8x24xf32>
    %28 = arith.negf %27 : vector<8x24xf32>
    %29 = math.exp %28 : vector<8x24xf32>
    %cst_14 = arith.constant 1.000000e+00 : f32
    %30 = vector.broadcast %cst_14 : f32 to vector<8x24xf32>
    %31 = arith.addf %30, %29 : vector<8x24xf32>
    %32 = arith.divf %30, %31 : vector<8x24xf32>
    %33 = vector.extract_strided_slice %20 {offsets = [0, 256], sizes = [8, 24], strides = [1, 1]} : vector<8x512xf32> to vector<8x24xf32>
    %34 = math.tanh %33 : vector<8x24xf32>
    %35 = vector.extract_strided_slice %20 {offsets = [0, 384], sizes = [8, 24], strides = [1, 1]} : vector<8x512xf32> to vector<8x24xf32>
    %36 = arith.negf %35 : vector<8x24xf32>
    %37 = math.exp %36 : vector<8x24xf32>
    %cst_15 = arith.constant 1.000000e+00 : f32
    %38 = vector.broadcast %cst_15 : f32 to vector<8x24xf32>
    %39 = arith.addf %38, %37 : vector<8x24xf32>
    %40 = arith.divf %38, %39 : vector<8x24xf32>
    %41 = arith.mulf %32, %8 : vector<8x24xf32>
    %42 = arith.mulf %26, %34 : vector<8x24xf32>
    %43 = arith.addf %41, %42 : vector<8x24xf32>
    %44 = math.tanh %43 : vector<8x24xf32>
    %45 = arith.mulf %40, %44 : vector<8x24xf32>
    %46 = arith.index_cast %c0_i32 : i32 to index
    %c0_16 = arith.constant 0 : index
    %c0_17 = arith.constant 0 : index
    %47 = vector.load %arg1[%46, %c0_16, %c0_17] : memref<8x8x24xf32, #tpu.memory_space<vmem>>, vector<1x8x24xf32>
    %48 = vector.shape_cast %47 : vector<1x8x24xf32> to vector<8x24xf32>
    %49 = arith.mulf %45, %48 : vector<8x24xf32>
    %50 = arith.mulf %43, %48 : vector<8x24xf32>
    %51 = arith.index_cast %c0_i32 : i32 to index
    %c0_18 = arith.constant 0 : index
    %c0_19 = arith.constant 0 : index
    %52 = vector.load %arg10[%51, %c0_18, %c0_19] : memref<8x8x24xf32, #tpu.memory_space<vmem>>, vector<1x8x24xf32>
    %53 = vector.shape_cast %52 : vector<1x8x24xf32> to vector<8x24xf32>
    %54 = vector.shape_cast %49 : vector<8x24xf32> to vector<1x8x24xf32>
    tpu.vector_store %arg10[%51, %c0_18, %c0_19], %54 {strides = array<i32>} : memref<8x8x24xf32, #tpu.memory_space<vmem>>, vector<1x8x24xf32>,
    %55 = arith.index_cast %9 : i32 to index
    %c0_20 = arith.constant 0 : index
    %c0_21 = arith.constant 0 : index
    %56 = vector.load %arg11[%55, %c0_20, %c0_21] : memref<8x8x24xf32, #tpu.memory_space<vmem>>, vector<1x8x24xf32>
    %57 = vector.shape_cast %56 : vector<1x8x24xf32> to vector<8x24xf32>
    %58 = vector.shape_cast %49 : vector<8x24xf32> to vector<1x8x24xf32>
    tpu.vector_store %arg11[%55, %c0_20, %c0_21], %58 {strides = array<i32>} : memref<8x8x24xf32, #tpu.memory_space<vmem>>, vector<1x8x24xf32>,
    %c1_i32 = arith.constant 1 : i32
    %c7_i32_22 = arith.constant 7 : i32
    %59 = arith.subi %c7_i32_22, %c1_i32 : i32
    %c8_i32_23 = arith.constant 8 : i32
    %60 = arith.muli %c1_i32, %c8_i32_23 : i32
    %61 = tpu.assume_multiple %60, 8 : i32
    %c8_i32_24 = arith.constant 8 : i32
    %62 = arith.muli %59, %c8_i32_24 : i32
    %63 = tpu.assume_multiple %62, 8 : i32
    %64 = arith.index_cast %61 : i32 to index
    %c0_25 = arith.constant 0 : index
    %65 = vector.load %arg9[%64, %c0_25] : memref<64x1024xf32, #tpu.memory_space<vmem>>, vector<8x512xf32>
    %66 = arith.index_cast %63 : i32 to index
    %c512_26 = arith.constant 512 : index
    %67 = vector.load %arg9[%66, %c512_26] : memref<64x1024xf32, #tpu.memory_space<vmem>>, vector<8x512xf32>
    %68 = arith.addf %65, %67 : vector<8x512xf32>
    %cst_27 = arith.constant dense<0.000000e+00> : vector<8x512xf32>
    %69 = tpu.matmul %49, %7, %cst_27 {dimension_numbers = #tpu.dot_dimension_numbers<[1], [0], [0], [1], [0, 0, 1, 1], [], []>} : vector<8x24xf32>, vector<24x512xf32>, vector<8x512xf32> -> vector<8x512xf32>
    %70 = arith.addf %68, %69 : vector<8x512xf32>
    %71 = vector.extract_strided_slice %70 {offsets = [0, 0], sizes = [8, 24], strides = [1, 1]} : vector<8x512xf32> to vector<8x24xf32>
    %72 = arith.negf %71 : vector<8x24xf32>
    %73 = math.exp %72 : vector<8x24xf32>
    %cst_28 = arith.constant 1.000000e+00 : f32
    %74 = vector.broadcast %cst_28 : f32 to vector<8x24xf32>
    %75 = arith.addf %74, %73 : vector<8x24xf32>
    %76 = arith.divf %74, %75 : vector<8x24xf32>
    %77 = vector.extract_strided_slice %70 {offsets = [0, 128], sizes = [8, 24], strides = [1, 1]} : vector<8x512xf32> to vector<8x24xf32>
    %78 = arith.negf %77 : vector<8x24xf32>
    %79 = math.exp %78 : vector<8x24xf32>
    %cst_29 = arith.constant 1.000000e+00 : f32
    %80 = vector.broadcast %cst_29 : f32 to vector<8x24xf32>
    %81 = arith.addf %80, %79 : vector<8x24xf32>
    %82 = arith.divf %80, %81 : vector<8x24xf32>
    %83 = vector.extract_strided_slice %70 {offsets = [0, 256], sizes = [8, 24], strides = [1, 1]} : vector<8x512xf32> to vector<8x24xf32>
    %84 = math.tanh %83 : vector<8x24xf32>
    %85 = vector.extract_strided_slice %70 {offsets = [0, 384], sizes = [8, 24], strides = [1, 1]} : vector<8x512xf32> to vector<8x24xf32>
    %86 = arith.negf %85 : vector<8x24xf32>
    %87 = math.exp %86 : vector<8x24xf32>
    %cst_30 = arith.constant 1.000000e+00 : f32
    %88 = vector.broadcast %cst_30 : f32 to vector<8x24xf32>
    %89 = arith.addf %88, %87 : vector<8x24xf32>
    %90 = arith.divf %88, %89 : vector<8x24xf32>
    %91 = arith.mulf %82, %50 : vector<8x24xf32>
    %92 = arith.mulf %76, %84 : vector<8x24xf32>
    %93 = arith.addf %91, %92 : vector<8x24xf32>
    %94 = math.tanh %93 : vector<8x24xf32>
    %95 = arith.mulf %90, %94 : vector<8x24xf32>
    %96 = arith.index_cast %c1_i32 : i32 to index
    %c0_31 = arith.constant 0 : index
    %c0_32 = arith.constant 0 : index
    %97 = vector.load %arg1[%96, %c0_31, %c0_32] : memref<8x8x24xf32, #tpu.memory_space<vmem>>, vector<1x8x24xf32>
    %98 = vector.shape_cast %97 : vector<1x8x24xf32> to vector<8x24xf32>
    %99 = arith.mulf %95, %98 : vector<8x24xf32>
    %100 = arith.mulf %93, %98 : vector<8x24xf32>
    %101 = arith.index_cast %c1_i32 : i32 to index
    %c0_33 = arith.constant 0 : index
    %c0_34 = arith.constant 0 : index
    %102 = vector.load %arg10[%101, %c0_33, %c0_34] : memref<8x8x24xf32, #tpu.memory_space<vmem>>, vector<1x8x24xf32>
    %103 = vector.shape_cast %102 : vector<1x8x24xf32> to vector<8x24xf32>
    %104 = vector.shape_cast %99 : vector<8x24xf32> to vector<1x8x24xf32>
    tpu.vector_store %arg10[%101, %c0_33, %c0_34], %104 {strides = array<i32>} : memref<8x8x24xf32, #tpu.memory_space<vmem>>, vector<1x8x24xf32>,
    %105 = arith.index_cast %59 : i32 to index
    %c0_35 = arith.constant 0 : index
    %c0_36 = arith.constant 0 : index
    %106 = vector.load %arg11[%105, %c0_35, %c0_36] : memref<8x8x24xf32, #tpu.memory_space<vmem>>, vector<1x8x24xf32>
    %107 = vector.shape_cast %106 : vector<1x8x24xf32> to vector<8x24xf32>
    %108 = vector.shape_cast %99 : vector<8x24xf32> to vector<1x8x24xf32>
    tpu.vector_store %arg11[%105, %c0_35, %c0_36], %108 {strides = array<i32>} : memref<8x8x24xf32, #tpu.memory_space<vmem>>, vector<1x8x24xf32>,
    %c2_i32 = arith.constant 2 : i32
    %c7_i32_37 = arith.constant 7 : i32
    %109 = arith.subi %c7_i32_37, %c2_i32 : i32
    %c8_i32_38 = arith.constant 8 : i32
    %110 = arith.muli %c2_i32, %c8_i32_38 : i32
    %111 = tpu.assume_multiple %110, 8 : i32
    %c8_i32_39 = arith.constant 8 : i32
    %112 = arith.muli %109, %c8_i32_39 : i32
    %113 = tpu.assume_multiple %112, 8 : i32
    %114 = arith.index_cast %111 : i32 to index
    %c0_40 = arith.constant 0 : index
    %115 = vector.load %arg9[%114, %c0_40] : memref<64x1024xf32, #tpu.memory_space<vmem>>, vector<8x512xf32>
    %116 = arith.index_cast %113 : i32 to index
    %c512_41 = arith.constant 512 : index
    %117 = vector.load %arg9[%116, %c512_41] : memref<64x1024xf32, #tpu.memory_space<vmem>>, vector<8x512xf32>
    %118 = arith.addf %115, %117 : vector<8x512xf32>
    %cst_42 = arith.constant dense<0.000000e+00> : vector<8x512xf32>
    %119 = tpu.matmul %99, %7, %cst_42 {dimension_numbers = #tpu.dot_dimension_numbers<[1], [0], [0], [1], [0, 0, 1, 1], [], []>} : vector<8x24xf32>, vector<24x512xf32>, vector<8x512xf32> -> vector<8x512xf32>
    %120 = arith.addf %118, %119 : vector<8x512xf32>
    %121 = vector.extract_strided_slice %120 {offsets = [0, 0], sizes = [8, 24], strides = [1, 1]} : vector<8x512xf32> to vector<8x24xf32>
    %122 = arith.negf %121 : vector<8x24xf32>
    %123 = math.exp %122 : vector<8x24xf32>
    %cst_43 = arith.constant 1.000000e+00 : f32
    %124 = vector.broadcast %cst_43 : f32 to vector<8x24xf32>
    %125 = arith.addf %124, %123 : vector<8x24xf32>
    %126 = arith.divf %124, %125 : vector<8x24xf32>
    %127 = vector.extract_strided_slice %120 {offsets = [0, 128], sizes = [8, 24], strides = [1, 1]} : vector<8x512xf32> to vector<8x24xf32>
    %128 = arith.negf %127 : vector<8x24xf32>
    %129 = math.exp %128 : vector<8x24xf32>
    %cst_44 = arith.constant 1.000000e+00 : f32
    %130 = vector.broadcast %cst_44 : f32 to vector<8x24xf32>
    %131 = arith.addf %130, %129 : vector<8x24xf32>
    %132 = arith.divf %130, %131 : vector<8x24xf32>
    %133 = vector.extract_strided_slice %120 {offsets = [0, 256], sizes = [8, 24], strides = [1, 1]} : vector<8x512xf32> to vector<8x24xf32>
    %134 = math.tanh %133 : vector<8x24xf32>
    %135 = vector.extract_strided_slice %120 {offsets = [0, 384], sizes = [8, 24], strides = [1, 1]} : vector<8x512xf32> to vector<8x24xf32>
    %136 = arith.negf %135 : vector<8x24xf32>
    %137 = math.exp %136 : vector<8x24xf32>
    %cst_45 = arith.constant 1.000000e+00 : f32
    %138 = vector.broadcast %cst_45 : f32 to vector<8x24xf32>
    %139 = arith.addf %138, %137 : vector<8x24xf32>
    %140 = arith.divf %138, %139 : vector<8x24xf32>
    %141 = arith.mulf %132, %100 : vector<8x24xf32>
    %142 = arith.mulf %126, %134 : vector<8x24xf32>
    %143 = arith.addf %141, %142 : vector<8x24xf32>
    %144 = math.tanh %143 : vector<8x24xf32>
    %145 = arith.mulf %140, %144 : vector<8x24xf32>
    %146 = arith.index_cast %c2_i32 : i32 to index
    %c0_46 = arith.constant 0 : index
    %c0_47 = arith.constant 0 : index
    %147 = vector.load %arg1[%146, %c0_46, %c0_47] : memref<8x8x24xf32, #tpu.memory_space<vmem>>, vector<1x8x24xf32>
    %148 = vector.shape_cast %147 : vector<1x8x24xf32> to vector<8x24xf32>
    %149 = arith.mulf %145, %148 : vector<8x24xf32>
    %150 = arith.mulf %143, %148 : vector<8x24xf32>
    %151 = arith.index_cast %c2_i32 : i32 to index
    %c0_48 = arith.constant 0 : index
    %c0_49 = arith.constant 0 : index
    %152 = vector.load %arg10[%151, %c0_48, %c0_49] : memref<8x8x24xf32, #tpu.memory_space<vmem>>, vector<1x8x24xf32>
    %153 = vector.shape_cast %152 : vector<1x8x24xf32> to vector<8x24xf32>
    %154 = vector.shape_cast %149 : vector<8x24xf32> to vector<1x8x24xf32>
    tpu.vector_store %arg10[%151, %c0_48, %c0_49], %154 {strides = array<i32>} : memref<8x8x24xf32, #tpu.memory_space<vmem>>, vector<1x8x24xf32>,
    %155 = arith.index_cast %109 : i32 to index
    %c0_50 = arith.constant 0 : index
    %c0_51 = arith.constant 0 : index
    %156 = vector.load %arg11[%155, %c0_50, %c0_51] : memref<8x8x24xf32, #tpu.memory_space<vmem>>, vector<1x8x24xf32>
    %157 = vector.shape_cast %156 : vector<1x8x24xf32> to vector<8x24xf32>
    %158 = vector.shape_cast %149 : vector<8x24xf32> to vector<1x8x24xf32>
    tpu.vector_store %arg11[%155, %c0_50, %c0_51], %158 {strides = array<i32>} : memref<8x8x24xf32, #tpu.memory_space<vmem>>, vector<1x8x24xf32>,
    %c3_i32 = arith.constant 3 : i32
    %c7_i32_52 = arith.constant 7 : i32
    %159 = arith.subi %c7_i32_52, %c3_i32 : i32
    %c8_i32_53 = arith.constant 8 : i32
    %160 = arith.muli %c3_i32, %c8_i32_53 : i32
    %161 = tpu.assume_multiple %160, 8 : i32
    %c8_i32_54 = arith.constant 8 : i32
    %162 = arith.muli %159, %c8_i32_54 : i32
    %163 = tpu.assume_multiple %162, 8 : i32
    %164 = arith.index_cast %161 : i32 to index
    %c0_55 = arith.constant 0 : index
    %165 = vector.load %arg9[%164, %c0_55] : memref<64x1024xf32, #tpu.memory_space<vmem>>, vector<8x512xf32>
    %166 = arith.index_cast %163 : i32 to index
    %c512_56 = arith.constant 512 : index
    %167 = vector.load %arg9[%166, %c512_56] : memref<64x1024xf32, #tpu.memory_space<vmem>>, vector<8x512xf32>
    %168 = arith.addf %165, %167 : vector<8x512xf32>
    %cst_57 = arith.constant dense<0.000000e+00> : vector<8x512xf32>
    %169 = tpu.matmul %149, %7, %cst_57 {dimension_numbers = #tpu.dot_dimension_numbers<[1], [0], [0], [1], [0, 0, 1, 1], [], []>} : vector<8x24xf32>, vector<24x512xf32>, vector<8x512xf32> -> vector<8x512xf32>
    %170 = arith.addf %168, %169 : vector<8x512xf32>
    %171 = vector.extract_strided_slice %170 {offsets = [0, 0], sizes = [8, 24], strides = [1, 1]} : vector<8x512xf32> to vector<8x24xf32>
    %172 = arith.negf %171 : vector<8x24xf32>
    %173 = math.exp %172 : vector<8x24xf32>
    %cst_58 = arith.constant 1.000000e+00 : f32
    %174 = vector.broadcast %cst_58 : f32 to vector<8x24xf32>
    %175 = arith.addf %174, %173 : vector<8x24xf32>
    %176 = arith.divf %174, %175 : vector<8x24xf32>
    %177 = vector.extract_strided_slice %170 {offsets = [0, 128], sizes = [8, 24], strides = [1, 1]} : vector<8x512xf32> to vector<8x24xf32>
    %178 = arith.negf %177 : vector<8x24xf32>
    %179 = math.exp %178 : vector<8x24xf32>
    %cst_59 = arith.constant 1.000000e+00 : f32
    %180 = vector.broadcast %cst_59 : f32 to vector<8x24xf32>
    %181 = arith.addf %180, %179 : vector<8x24xf32>
    %182 = arith.divf %180, %181 : vector<8x24xf32>
    %183 = vector.extract_strided_slice %170 {offsets = [0, 256], sizes = [8, 24], strides = [1, 1]} : vector<8x512xf32> to vector<8x24xf32>
    %184 = math.tanh %183 : vector<8x24xf32>
    %185 = vector.extract_strided_slice %170 {offsets = [0, 384], sizes = [8, 24], strides = [1, 1]} : vector<8x512xf32> to vector<8x24xf32>
    %186 = arith.negf %185 : vector<8x24xf32>
    %187 = math.exp %186 : vector<8x24xf32>
    %cst_60 = arith.constant 1.000000e+00 : f32
    %188 = vector.broadcast %cst_60 : f32 to vector<8x24xf32>
    %189 = arith.addf %188, %187 : vector<8x24xf32>
    %190 = arith.divf %188, %189 : vector<8x24xf32>
    %191 = arith.mulf %182, %150 : vector<8x24xf32>
    %192 = arith.mulf %176, %184 : vector<8x24xf32>
    %193 = arith.addf %191, %192 : vector<8x24xf32>
    %194 = math.tanh %193 : vector<8x24xf32>
    %195 = arith.mulf %190, %194 : vector<8x24xf32>
    %196 = arith.index_cast %c3_i32 : i32 to index
    %c0_61 = arith.constant 0 : index
    %c0_62 = arith.constant 0 : index
    %197 = vector.load %arg1[%196, %c0_61, %c0_62] : memref<8x8x24xf32, #tpu.memory_space<vmem>>, vector<1x8x24xf32>
    %198 = vector.shape_cast %197 : vector<1x8x24xf32> to vector<8x24xf32>
    %199 = arith.mulf %195, %198 : vector<8x24xf32>
    %200 = arith.mulf %193, %198 : vector<8x24xf32>
    %201 = arith.index_cast %c3_i32 : i32 to index
    %c0_63 = arith.constant 0 : index
    %c0_64 = arith.constant 0 : index
    %202 = vector.load %arg10[%201, %c0_63, %c0_64] : memref<8x8x24xf32, #tpu.memory_space<vmem>>, vector<1x8x24xf32>
    %203 = vector.shape_cast %202 : vector<1x8x24xf32> to vector<8x24xf32>
    %204 = vector.shape_cast %199 : vector<8x24xf32> to vector<1x8x24xf32>
    tpu.vector_store %arg10[%201, %c0_63, %c0_64], %204 {strides = array<i32>} : memref<8x8x24xf32, #tpu.memory_space<vmem>>, vector<1x8x24xf32>,
    %205 = arith.index_cast %159 : i32 to index
    %c0_65 = arith.constant 0 : index
    %c0_66 = arith.constant 0 : index
    %206 = vector.load %arg11[%205, %c0_65, %c0_66] : memref<8x8x24xf32, #tpu.memory_space<vmem>>, vector<1x8x24xf32>
    %207 = vector.shape_cast %206 : vector<1x8x24xf32> to vector<8x24xf32>
    %208 = vector.shape_cast %199 : vector<8x24xf32> to vector<1x8x24xf32>
    tpu.vector_store %arg11[%205, %c0_65, %c0_66], %208 {strides = array<i32>} : memref<8x8x24xf32, #tpu.memory_space<vmem>>, vector<1x8x24xf32>,
    %c4_i32 = arith.constant 4 : i32
    %c7_i32_67 = arith.constant 7 : i32
    %209 = arith.subi %c7_i32_67, %c4_i32 : i32
    %c8_i32_68 = arith.constant 8 : i32
    %210 = arith.muli %c4_i32, %c8_i32_68 : i32
    %211 = tpu.assume_multiple %210, 8 : i32
    %c8_i32_69 = arith.constant 8 : i32
    %212 = arith.muli %209, %c8_i32_69 : i32
    %213 = tpu.assume_multiple %212, 8 : i32
    %214 = arith.index_cast %211 : i32 to index
    %c0_70 = arith.constant 0 : index
    %215 = vector.load %arg9[%214, %c0_70] : memref<64x1024xf32, #tpu.memory_space<vmem>>, vector<8x512xf32>
    %216 = arith.index_cast %213 : i32 to index
    %c512_71 = arith.constant 512 : index
    %217 = vector.load %arg9[%216, %c512_71] : memref<64x1024xf32, #tpu.memory_space<vmem>>, vector<8x512xf32>
    %218 = arith.addf %215, %217 : vector<8x512xf32>
    %cst_72 = arith.constant dense<0.000000e+00> : vector<8x512xf32>
    %219 = tpu.matmul %199, %7, %cst_72 {dimension_numbers = #tpu.dot_dimension_numbers<[1], [0], [0], [1], [0, 0, 1, 1], [], []>} : vector<8x24xf32>, vector<24x512xf32>, vector<8x512xf32> -> vector<8x512xf32>
    %220 = arith.addf %218, %219 : vector<8x512xf32>
    %221 = vector.extract_strided_slice %220 {offsets = [0, 0], sizes = [8, 24], strides = [1, 1]} : vector<8x512xf32> to vector<8x24xf32>
    %222 = arith.negf %221 : vector<8x24xf32>
    %223 = math.exp %222 : vector<8x24xf32>
    %cst_73 = arith.constant 1.000000e+00 : f32
    %224 = vector.broadcast %cst_73 : f32 to vector<8x24xf32>
    %225 = arith.addf %224, %223 : vector<8x24xf32>
    %226 = arith.divf %224, %225 : vector<8x24xf32>
    %227 = vector.extract_strided_slice %220 {offsets = [0, 128], sizes = [8, 24], strides = [1, 1]} : vector<8x512xf32> to vector<8x24xf32>
    %228 = arith.negf %227 : vector<8x24xf32>
    %229 = math.exp %228 : vector<8x24xf32>
    %cst_74 = arith.constant 1.000000e+00 : f32
    %230 = vector.broadcast %cst_74 : f32 to vector<8x24xf32>
    %231 = arith.addf %230, %229 : vector<8x24xf32>
    %232 = arith.divf %230, %231 : vector<8x24xf32>
    %233 = vector.extract_strided_slice %220 {offsets = [0, 256], sizes = [8, 24], strides = [1, 1]} : vector<8x512xf32> to vector<8x24xf32>
    %234 = math.tanh %233 : vector<8x24xf32>
    %235 = vector.extract_strided_slice %220 {offsets = [0, 384], sizes = [8, 24], strides = [1, 1]} : vector<8x512xf32> to vector<8x24xf32>
    %236 = arith.negf %235 : vector<8x24xf32>
    %237 = math.exp %236 : vector<8x24xf32>
    %cst_75 = arith.constant 1.000000e+00 : f32
    %238 = vector.broadcast %cst_75 : f32 to vector<8x24xf32>
    %239 = arith.addf %238, %237 : vector<8x24xf32>
    %240 = arith.divf %238, %239 : vector<8x24xf32>
    %241 = arith.mulf %232, %200 : vector<8x24xf32>
    %242 = arith.mulf %226, %234 : vector<8x24xf32>
    %243 = arith.addf %241, %242 : vector<8x24xf32>
    %244 = math.tanh %243 : vector<8x24xf32>
    %245 = arith.mulf %240, %244 : vector<8x24xf32>
    %246 = arith.index_cast %c4_i32 : i32 to index
    %c0_76 = arith.constant 0 : index
    %c0_77 = arith.constant 0 : index
    %247 = vector.load %arg1[%246, %c0_76, %c0_77] : memref<8x8x24xf32, #tpu.memory_space<vmem>>, vector<1x8x24xf32>
    %248 = vector.shape_cast %247 : vector<1x8x24xf32> to vector<8x24xf32>
    %249 = arith.mulf %245, %248 : vector<8x24xf32>
    %250 = arith.mulf %243, %248 : vector<8x24xf32>
    %251 = arith.index_cast %c4_i32 : i32 to index
    %c0_78 = arith.constant 0 : index
    %c0_79 = arith.constant 0 : index
    %252 = vector.load %arg10[%251, %c0_78, %c0_79] : memref<8x8x24xf32, #tpu.memory_space<vmem>>, vector<1x8x24xf32>
    %253 = vector.shape_cast %252 : vector<1x8x24xf32> to vector<8x24xf32>
    %254 = vector.shape_cast %249 : vector<8x24xf32> to vector<1x8x24xf32>
    tpu.vector_store %arg10[%251, %c0_78, %c0_79], %254 {strides = array<i32>} : memref<8x8x24xf32, #tpu.memory_space<vmem>>, vector<1x8x24xf32>,
    %255 = arith.index_cast %209 : i32 to index
    %c0_80 = arith.constant 0 : index
    %c0_81 = arith.constant 0 : index
    %256 = vector.load %arg11[%255, %c0_80, %c0_81] : memref<8x8x24xf32, #tpu.memory_space<vmem>>, vector<1x8x24xf32>
    %257 = vector.shape_cast %256 : vector<1x8x24xf32> to vector<8x24xf32>
    %258 = vector.shape_cast %249 : vector<8x24xf32> to vector<1x8x24xf32>
    tpu.vector_store %arg11[%255, %c0_80, %c0_81], %258 {strides = array<i32>} : memref<8x8x24xf32, #tpu.memory_space<vmem>>, vector<1x8x24xf32>,
    %c5_i32 = arith.constant 5 : i32
    %c7_i32_82 = arith.constant 7 : i32
    %259 = arith.subi %c7_i32_82, %c5_i32 : i32
    %c8_i32_83 = arith.constant 8 : i32
    %260 = arith.muli %c5_i32, %c8_i32_83 : i32
    %261 = tpu.assume_multiple %260, 8 : i32
    %c8_i32_84 = arith.constant 8 : i32
    %262 = arith.muli %259, %c8_i32_84 : i32
    %263 = tpu.assume_multiple %262, 8 : i32
    %264 = arith.index_cast %261 : i32 to index
    %c0_85 = arith.constant 0 : index
    %265 = vector.load %arg9[%264, %c0_85] : memref<64x1024xf32, #tpu.memory_space<vmem>>, vector<8x512xf32>
    %266 = arith.index_cast %263 : i32 to index
    %c512_86 = arith.constant 512 : index
    %267 = vector.load %arg9[%266, %c512_86] : memref<64x1024xf32, #tpu.memory_space<vmem>>, vector<8x512xf32>
    %268 = arith.addf %265, %267 : vector<8x512xf32>
    %cst_87 = arith.constant dense<0.000000e+00> : vector<8x512xf32>
    %269 = tpu.matmul %249, %7, %cst_87 {dimension_numbers = #tpu.dot_dimension_numbers<[1], [0], [0], [1], [0, 0, 1, 1], [], []>} : vector<8x24xf32>, vector<24x512xf32>, vector<8x512xf32> -> vector<8x512xf32>
    %270 = arith.addf %268, %269 : vector<8x512xf32>
    %271 = vector.extract_strided_slice %270 {offsets = [0, 0], sizes = [8, 24], strides = [1, 1]} : vector<8x512xf32> to vector<8x24xf32>
    %272 = arith.negf %271 : vector<8x24xf32>
    %273 = math.exp %272 : vector<8x24xf32>
    %cst_88 = arith.constant 1.000000e+00 : f32
    %274 = vector.broadcast %cst_88 : f32 to vector<8x24xf32>
    %275 = arith.addf %274, %273 : vector<8x24xf32>
    %276 = arith.divf %274, %275 : vector<8x24xf32>
    %277 = vector.extract_strided_slice %270 {offsets = [0, 128], sizes = [8, 24], strides = [1, 1]} : vector<8x512xf32> to vector<8x24xf32>
    %278 = arith.negf %277 : vector<8x24xf32>
    %279 = math.exp %278 : vector<8x24xf32>
    %cst_89 = arith.constant 1.000000e+00 : f32
    %280 = vector.broadcast %cst_89 : f32 to vector<8x24xf32>
    %281 = arith.addf %280, %279 : vector<8x24xf32>
    %282 = arith.divf %280, %281 : vector<8x24xf32>
    %283 = vector.extract_strided_slice %270 {offsets = [0, 256], sizes = [8, 24], strides = [1, 1]} : vector<8x512xf32> to vector<8x24xf32>
    %284 = math.tanh %283 : vector<8x24xf32>
    %285 = vector.extract_strided_slice %270 {offsets = [0, 384], sizes = [8, 24], strides = [1, 1]} : vector<8x512xf32> to vector<8x24xf32>
    %286 = arith.negf %285 : vector<8x24xf32>
    %287 = math.exp %286 : vector<8x24xf32>
    %cst_90 = arith.constant 1.000000e+00 : f32
    %288 = vector.broadcast %cst_90 : f32 to vector<8x24xf32>
    %289 = arith.addf %288, %287 : vector<8x24xf32>
    %290 = arith.divf %288, %289 : vector<8x24xf32>
    %291 = arith.mulf %282, %250 : vector<8x24xf32>
    %292 = arith.mulf %276, %284 : vector<8x24xf32>
    %293 = arith.addf %291, %292 : vector<8x24xf32>
    %294 = math.tanh %293 : vector<8x24xf32>
    %295 = arith.mulf %290, %294 : vector<8x24xf32>
    %296 = arith.index_cast %c5_i32 : i32 to index
    %c0_91 = arith.constant 0 : index
    %c0_92 = arith.constant 0 : index
    %297 = vector.load %arg1[%296, %c0_91, %c0_92] : memref<8x8x24xf32, #tpu.memory_space<vmem>>, vector<1x8x24xf32>
    %298 = vector.shape_cast %297 : vector<1x8x24xf32> to vector<8x24xf32>
    %299 = arith.mulf %295, %298 : vector<8x24xf32>
    %300 = arith.mulf %293, %298 : vector<8x24xf32>
    %301 = arith.index_cast %c5_i32 : i32 to index
    %c0_93 = arith.constant 0 : index
    %c0_94 = arith.constant 0 : index
    %302 = vector.load %arg10[%301, %c0_93, %c0_94] : memref<8x8x24xf32, #tpu.memory_space<vmem>>, vector<1x8x24xf32>
    %303 = vector.shape_cast %302 : vector<1x8x24xf32> to vector<8x24xf32>
    %304 = vector.shape_cast %299 : vector<8x24xf32> to vector<1x8x24xf32>
    tpu.vector_store %arg10[%301, %c0_93, %c0_94], %304 {strides = array<i32>} : memref<8x8x24xf32, #tpu.memory_space<vmem>>, vector<1x8x24xf32>,
    %305 = arith.index_cast %259 : i32 to index
    %c0_95 = arith.constant 0 : index
    %c0_96 = arith.constant 0 : index
    %306 = vector.load %arg11[%305, %c0_95, %c0_96] : memref<8x8x24xf32, #tpu.memory_space<vmem>>, vector<1x8x24xf32>
    %307 = vector.shape_cast %306 : vector<1x8x24xf32> to vector<8x24xf32>
    %308 = vector.shape_cast %299 : vector<8x24xf32> to vector<1x8x24xf32>
    tpu.vector_store %arg11[%305, %c0_95, %c0_96], %308 {strides = array<i32>} : memref<8x8x24xf32, #tpu.memory_space<vmem>>, vector<1x8x24xf32>,
    %c6_i32 = arith.constant 6 : i32
    %c7_i32_97 = arith.constant 7 : i32
    %309 = arith.subi %c7_i32_97, %c6_i32 : i32
    %c8_i32_98 = arith.constant 8 : i32
    %310 = arith.muli %c6_i32, %c8_i32_98 : i32
    %311 = tpu.assume_multiple %310, 8 : i32
    %c8_i32_99 = arith.constant 8 : i32
    %312 = arith.muli %309, %c8_i32_99 : i32
    %313 = tpu.assume_multiple %312, 8 : i32
    %314 = arith.index_cast %311 : i32 to index
    %c0_100 = arith.constant 0 : index
    %315 = vector.load %arg9[%314, %c0_100] : memref<64x1024xf32, #tpu.memory_space<vmem>>, vector<8x512xf32>
    %316 = arith.index_cast %313 : i32 to index
    %c512_101 = arith.constant 512 : index
    %317 = vector.load %arg9[%316, %c512_101] : memref<64x1024xf32, #tpu.memory_space<vmem>>, vector<8x512xf32>
    %318 = arith.addf %315, %317 : vector<8x512xf32>
    %cst_102 = arith.constant dense<0.000000e+00> : vector<8x512xf32>
    %319 = tpu.matmul %299, %7, %cst_102 {dimension_numbers = #tpu.dot_dimension_numbers<[1], [0], [0], [1], [0, 0, 1, 1], [], []>} : vector<8x24xf32>, vector<24x512xf32>, vector<8x512xf32> -> vector<8x512xf32>
    %320 = arith.addf %318, %319 : vector<8x512xf32>
    %321 = vector.extract_strided_slice %320 {offsets = [0, 0], sizes = [8, 24], strides = [1, 1]} : vector<8x512xf32> to vector<8x24xf32>
    %322 = arith.negf %321 : vector<8x24xf32>
    %323 = math.exp %322 : vector<8x24xf32>
    %cst_103 = arith.constant 1.000000e+00 : f32
    %324 = vector.broadcast %cst_103 : f32 to vector<8x24xf32>
    %325 = arith.addf %324, %323 : vector<8x24xf32>
    %326 = arith.divf %324, %325 : vector<8x24xf32>
    %327 = vector.extract_strided_slice %320 {offsets = [0, 128], sizes = [8, 24], strides = [1, 1]} : vector<8x512xf32> to vector<8x24xf32>
    %328 = arith.negf %327 : vector<8x24xf32>
    %329 = math.exp %328 : vector<8x24xf32>
    %cst_104 = arith.constant 1.000000e+00 : f32
    %330 = vector.broadcast %cst_104 : f32 to vector<8x24xf32>
    %331 = arith.addf %330, %329 : vector<8x24xf32>
    %332 = arith.divf %330, %331 : vector<8x24xf32>
    %333 = vector.extract_strided_slice %320 {offsets = [0, 256], sizes = [8, 24], strides = [1, 1]} : vector<8x512xf32> to vector<8x24xf32>
    %334 = math.tanh %333 : vector<8x24xf32>
    %335 = vector.extract_strided_slice %320 {offsets = [0, 384], sizes = [8, 24], strides = [1, 1]} : vector<8x512xf32> to vector<8x24xf32>
    %336 = arith.negf %335 : vector<8x24xf32>
    %337 = math.exp %336 : vector<8x24xf32>
    %cst_105 = arith.constant 1.000000e+00 : f32
    %338 = vector.broadcast %cst_105 : f32 to vector<8x24xf32>
    %339 = arith.addf %338, %337 : vector<8x24xf32>
    %340 = arith.divf %338, %339 : vector<8x24xf32>
    %341 = arith.mulf %332, %300 : vector<8x24xf32>
    %342 = arith.mulf %326, %334 : vector<8x24xf32>
    %343 = arith.addf %341, %342 : vector<8x24xf32>
    %344 = math.tanh %343 : vector<8x24xf32>
    %345 = arith.mulf %340, %344 : vector<8x24xf32>
    %346 = arith.index_cast %c6_i32 : i32 to index
    %c0_106 = arith.constant 0 : index
    %c0_107 = arith.constant 0 : index
    %347 = vector.load %arg1[%346, %c0_106, %c0_107] : memref<8x8x24xf32, #tpu.memory_space<vmem>>, vector<1x8x24xf32>
    %348 = vector.shape_cast %347 : vector<1x8x24xf32> to vector<8x24xf32>
    %349 = arith.mulf %345, %348 : vector<8x24xf32>
    %350 = arith.mulf %343, %348 : vector<8x24xf32>
    %351 = arith.index_cast %c6_i32 : i32 to index
    %c0_108 = arith.constant 0 : index
    %c0_109 = arith.constant 0 : index
    %352 = vector.load %arg10[%351, %c0_108, %c0_109] : memref<8x8x24xf32, #tpu.memory_space<vmem>>, vector<1x8x24xf32>
    %353 = vector.shape_cast %352 : vector<1x8x24xf32> to vector<8x24xf32>
    %354 = vector.shape_cast %349 : vector<8x24xf32> to vector<1x8x24xf32>
    tpu.vector_store %arg10[%351, %c0_108, %c0_109], %354 {strides = array<i32>} : memref<8x8x24xf32, #tpu.memory_space<vmem>>, vector<1x8x24xf32>,
    %355 = arith.index_cast %309 : i32 to index
    %c0_110 = arith.constant 0 : index
    %c0_111 = arith.constant 0 : index
    %356 = vector.load %arg11[%355, %c0_110, %c0_111] : memref<8x8x24xf32, #tpu.memory_space<vmem>>, vector<1x8x24xf32>
    %357 = vector.shape_cast %356 : vector<1x8x24xf32> to vector<8x24xf32>
    %358 = vector.shape_cast %349 : vector<8x24xf32> to vector<1x8x24xf32>
    tpu.vector_store %arg11[%355, %c0_110, %c0_111], %358 {strides = array<i32>} : memref<8x8x24xf32, #tpu.memory_space<vmem>>, vector<1x8x24xf32>,
    %c7_i32_112 = arith.constant 7 : i32
    %c7_i32_113 = arith.constant 7 : i32
    %359 = arith.subi %c7_i32_113, %c7_i32_112 : i32
    %c8_i32_114 = arith.constant 8 : i32
    %360 = arith.muli %c7_i32_112, %c8_i32_114 : i32
    %361 = tpu.assume_multiple %360, 8 : i32
    %c8_i32_115 = arith.constant 8 : i32
    %362 = arith.muli %359, %c8_i32_115 : i32
    %363 = tpu.assume_multiple %362, 8 : i32
    %364 = arith.index_cast %361 : i32 to index
    %c0_116 = arith.constant 0 : index
    %365 = vector.load %arg9[%364, %c0_116] : memref<64x1024xf32, #tpu.memory_space<vmem>>, vector<8x512xf32>
    %366 = arith.index_cast %363 : i32 to index
    %c512_117 = arith.constant 512 : index
    %367 = vector.load %arg9[%366, %c512_117] : memref<64x1024xf32, #tpu.memory_space<vmem>>, vector<8x512xf32>
    %368 = arith.addf %365, %367 : vector<8x512xf32>
    %cst_118 = arith.constant dense<0.000000e+00> : vector<8x512xf32>
    %369 = tpu.matmul %349, %7, %cst_118 {dimension_numbers = #tpu.dot_dimension_numbers<[1], [0], [0], [1], [0, 0, 1, 1], [], []>} : vector<8x24xf32>, vector<24x512xf32>, vector<8x512xf32> -> vector<8x512xf32>
    %370 = arith.addf %368, %369 : vector<8x512xf32>
    %371 = vector.extract_strided_slice %370 {offsets = [0, 0], sizes = [8, 24], strides = [1, 1]} : vector<8x512xf32> to vector<8x24xf32>
    %372 = arith.negf %371 : vector<8x24xf32>
    %373 = math.exp %372 : vector<8x24xf32>
    %cst_119 = arith.constant 1.000000e+00 : f32
    %374 = vector.broadcast %cst_119 : f32 to vector<8x24xf32>
    %375 = arith.addf %374, %373 : vector<8x24xf32>
    %376 = arith.divf %374, %375 : vector<8x24xf32>
    %377 = vector.extract_strided_slice %370 {offsets = [0, 128], sizes = [8, 24], strides = [1, 1]} : vector<8x512xf32> to vector<8x24xf32>
    %378 = arith.negf %377 : vector<8x24xf32>
    %379 = math.exp %378 : vector<8x24xf32>
    %cst_120 = arith.constant 1.000000e+00 : f32
    %380 = vector.broadcast %cst_120 : f32 to vector<8x24xf32>
    %381 = arith.addf %380, %379 : vector<8x24xf32>
    %382 = arith.divf %380, %381 : vector<8x24xf32>
    %383 = vector.extract_strided_slice %370 {offsets = [0, 256], sizes = [8, 24], strides = [1, 1]} : vector<8x512xf32> to vector<8x24xf32>
    %384 = math.tanh %383 : vector<8x24xf32>
    %385 = vector.extract_strided_slice %370 {offsets = [0, 384], sizes = [8, 24], strides = [1, 1]} : vector<8x512xf32> to vector<8x24xf32>
    %386 = arith.negf %385 : vector<8x24xf32>
    %387 = math.exp %386 : vector<8x24xf32>
    %cst_121 = arith.constant 1.000000e+00 : f32
    %388 = vector.broadcast %cst_121 : f32 to vector<8x24xf32>
    %389 = arith.addf %388, %387 : vector<8x24xf32>
    %390 = arith.divf %388, %389 : vector<8x24xf32>
    %391 = arith.mulf %382, %350 : vector<8x24xf32>
    %392 = arith.mulf %376, %384 : vector<8x24xf32>
    %393 = arith.addf %391, %392 : vector<8x24xf32>
    %394 = math.tanh %393 : vector<8x24xf32>
    %395 = arith.mulf %390, %394 : vector<8x24xf32>
    %396 = arith.index_cast %c7_i32_112 : i32 to index
    %c0_122 = arith.constant 0 : index
    %c0_123 = arith.constant 0 : index
    %397 = vector.load %arg1[%396, %c0_122, %c0_123] : memref<8x8x24xf32, #tpu.memory_space<vmem>>, vector<1x8x24xf32>
    %398 = vector.shape_cast %397 : vector<1x8x24xf32> to vector<8x24xf32>
    %399 = arith.mulf %395, %398 : vector<8x24xf32>
    %400 = arith.mulf %393, %398 : vector<8x24xf32>
    %401 = arith.index_cast %c7_i32_112 : i32 to index
    %c0_124 = arith.constant 0 : index
    %c0_125 = arith.constant 0 : index
    %402 = vector.load %arg10[%401, %c0_124, %c0_125] : memref<8x8x24xf32, #tpu.memory_space<vmem>>, vector<1x8x24xf32>
    %403 = vector.shape_cast %402 : vector<1x8x24xf32> to vector<8x24xf32>
    %404 = vector.shape_cast %399 : vector<8x24xf32> to vector<1x8x24xf32>
    tpu.vector_store %arg10[%401, %c0_124, %c0_125], %404 {strides = array<i32>} : memref<8x8x24xf32, #tpu.memory_space<vmem>>, vector<1x8x24xf32>,
    %405 = arith.index_cast %359 : i32 to index
    %c0_126 = arith.constant 0 : index
    %c0_127 = arith.constant 0 : index
    %406 = vector.load %arg11[%405, %c0_126, %c0_127] : memref<8x8x24xf32, #tpu.memory_space<vmem>>, vector<1x8x24xf32>
    %407 = vector.shape_cast %406 : vector<1x8x24xf32> to vector<8x24xf32>
    %408 = vector.shape_cast %399 : vector<8x24xf32> to vector<1x8x24xf32>
    tpu.vector_store %arg11[%405, %c0_126, %c0_127], %408 {strides = array<i32>} : memref<8x8x24xf32, #tpu.memory_space<vmem>>, vector<1x8x24xf32>,
    %c8_i32_128 = arith.constant 8 : i32
    %c0_129 = arith.constant 0 : index
    %c0_130 = arith.constant 0 : index
    %409 = vector.load %arg6[%c0_129, %c0_130] : memref<2x24xf32, #tpu.memory_space<vmem>>, vector<2x24xf32>
    %c0_131 = arith.constant 0 : index
    %c0_132 = arith.constant 0 : index
    %c0_133 = arith.constant 0 : index
    %410 = vector.load %arg10[%c0_131, %c0_132, %c0_133] : memref<8x8x24xf32, #tpu.memory_space<vmem>>, vector<8x8x24xf32>
    %411 = vector.extract_strided_slice %409 {offsets = [0, 0], sizes = [1, 24], strides = [1, 1]} : vector<2x24xf32> to vector<1x24xf32>
    %412 = vector.shape_cast %411 : vector<1x24xf32> to vector<1x1x24xf32>
    %413 = vector.broadcast %412 : vector<1x1x24xf32> to vector<8x8x24xf32>
    %414 = arith.mulf %410, %413 : vector<8x8x24xf32>
    %cst_134 = arith.constant dense<0.000000e+00> : vector<8x8xf32>
    %415 = vector.multi_reduction <add>, %414, %cst_134 [2] : vector<8x8x24xf32> to vector<8x8xf32>
    %c0_135 = arith.constant 0 : index
    %c0_136 = arith.constant 0 : index
    %c0_137 = arith.constant 0 : index
    %416 = vector.load %arg11[%c0_135, %c0_136, %c0_137] : memref<8x8x24xf32, #tpu.memory_space<vmem>>, vector<8x8x24xf32>
    %417 = vector.extract_strided_slice %409 {offsets = [1, 0], sizes = [1, 24], strides = [1, 1]} : vector<2x24xf32> to vector<1x24xf32>
    %418 = vector.shape_cast %417 : vector<1x24xf32> to vector<1x1x24xf32>
    %419 = vector.broadcast %418 : vector<1x1x24xf32> to vector<8x8x24xf32>
    %420 = arith.mulf %416, %419 : vector<8x8x24xf32>
    %cst_138 = arith.constant dense<0.000000e+00> : vector<8x8xf32>
    %421 = vector.multi_reduction <add>, %420, %cst_138 [2] : vector<8x8x24xf32> to vector<8x8xf32>
    %422 = arith.addf %415, %421 : vector<8x8xf32>
    %c0_139 = arith.constant 0 : index
    %c0_140 = arith.constant 0 : index
    %423 = vector.load %arg7[%c0_139, %c0_140] : memref<1x1xf32, #tpu.memory_space<vmem>>, vector<1x1xf32>
    %424 = vector.broadcast %423 : vector<1x1xf32> to vector<8x8xf32>
    %425 = arith.addf %422, %424 : vector<8x8xf32>
    %c0_141 = arith.constant 0 : index
    %c0_142 = arith.constant 0 : index
    %426 = vector.load %arg2[%c0_141, %c0_142] : memref<8x8xf32, #tpu.memory_space<vmem>>, vector<8x8xf32>
    %cst_143 = arith.constant 0.000000e+00 : f32
    %427 = vector.broadcast %cst_143 : f32 to vector<8x8xf32>
    %428 = arith.cmpf ogt, %426, %427 : vector<8x8xf32>
    %cst_144 = arith.constant -1.000000e+10 : f32
    %429 = vector.broadcast %cst_144 : f32 to vector<8x8xf32>
    %430 = arith.select %428, %425, %429 : vector<8x8xi1>, vector<8x8xf32>
    %cst_145 = arith.constant dense<0xFF800000> : vector<8xf32>
    %431 = vector.multi_reduction <maximumf>, %430, %cst_145 [0] : vector<8x8xf32> to vector<8xf32>
    %432 = vector.shape_cast %431 : vector<8xf32> to vector<1x8xf32>
    %433 = vector.broadcast %432 : vector<1x8xf32> to vector<8x8xf32>
    %434 = arith.subf %430, %433 : vector<8x8xf32>
    %435 = math.exp %434 : vector<8x8xf32>
    %cst_146 = arith.constant dense<0.000000e+00> : vector<8xf32>
    %436 = vector.multi_reduction <add>, %435, %cst_146 [0] : vector<8x8xf32> to vector<8xf32>
    %437 = vector.shape_cast %436 : vector<8xf32> to vector<1x8xf32>
    %438 = vector.broadcast %432 : vector<1x8xf32> to vector<8x8xf32>
    %439 = arith.subf %430, %438 : vector<8x8xf32>
    %440 = math.log %437 : vector<1x8xf32>
    %441 = vector.broadcast %440 : vector<1x8xf32> to vector<8x8xf32>
    %442 = arith.subf %439, %441 : vector<8x8xf32>
    %c0_147 = arith.constant 0 : index
    %c0_148 = arith.constant 0 : index
    %443 = vector.load %arg8[%c0_147, %c0_148] : memref<8x8xf32, #tpu.memory_space<vmem>>, vector<8x8xf32>
    tpu.vector_store %arg8[%c0_147, %c0_148], %442 {strides = array<i32>} : memref<8x8xf32, #tpu.memory_space<vmem>>, vector<8x8xf32>,
    return
  }
}

</mosaic_0001>

<llo_original>
// kernel: _qem_run.1
$region0: #{_qem_run.1}
  #allocation0 [shape = 'u32[]', space=smem, size = 0x4, offset = 0x4, fixed_abs, tag = 'smem constant byte address 0x4 - core index']
  #allocation1 [shape = 'u32[144,128]{1,0:T(1,128)}', space=vmem, size = 0x12000, scoped, tag = 'internal scratch']
  #allocation2 [shape = 'f32[64,1024]{1,0:T(8,128)}', space=vmem, size = 0x40000, scoped, tag = 'scratch operand']
  #allocation3 [shape = 'f32[8,8,24]{2,1,0:T(8,128)}', space=vmem, size = 0x8000, scoped, tag = 'scratch operand']
  #allocation4 [shape = 'f32[8,8,24]{2,1,0:T(8,128)}', space=vmem, size = 0x8000, scoped, tag = 'scratch operand']
  #allocation5 [shape = 'f32[1,1]{1,0:T(1,128)S(1)}', space=vmem, size = 0x200, scoped, tag = 'scoped memory for _qem_run.1']
  %s0 = inlined_call_operand.vmem [shape: f32[64,7], index: 0, kind: input, shape index: {}]
  %s1 = inlined_call_operand.vmem [shape: f32[8,8,24], index: 1, kind: input, shape index: {}]
  %s2 = inlined_call_operand.vmem [shape: f32[8,8], index: 2, kind: input, shape index: {}]
  %s3 = inlined_call_operand.hbm [shape: f32[7,1024], index: 3, kind: input, shape index: {}]
  %s4 = inlined_call_operand.hbm [shape: f32[24,512], index: 4, kind: input, shape index: {}]
  %s5 = inlined_call_operand.vmem [shape: f32[1,1024], index: 5, kind: input, shape index: {}]
  %s6 = inlined_call_operand.hbm [shape: f32[2,24], index: 6, kind: input, shape index: {}]
  %s7 = inlined_call_operand.<no memory space> [shape: f32[1,1], index: 7, kind: input, shape index: {}]
  %s8 = inlined_call_operand.vmem [shape: f32[8,8], index: 8, kind: output, shape index: {}]
  %s9 = sld [smem:[#allocation0]]
  $region54: #{_qem_run.1} parent=0
    _
  %s11 = ssub.s32 1, %s9
  %s12 = scalar_select 0, %s11, %s9
  %v13 = vstv %s7
  %14 = vst [vmem:[#allocation5] sm:$0x1] %v13
  $region1: #{_qem_run.1} parent=0
    #allocation6 [shape = 'u8[32768]{0}', space=vmem, size = 0x8000, scoped, tag = 'input window, operand 3, single buffered']
    #allocation7 [shape = 's32[1]{0}', space=sflag, size = 0x4, scoped, tag = 'scoped memory for _qem_run.1']
    #allocation8 [shape = 'u8[49152]{0}', space=vmem, size = 0xc000, scoped, tag = 'input window, operand 4, single buffered']
    #allocation9 [shape = 's32[1]{0}', space=sflag, size = 0x4, scoped, tag = 'scoped memory for _qem_run.1']
    #allocation10 [shape = 'u8[1024]{0}', space=vmem, size = 0x400, scoped, tag = 'input window, operand 6, single buffered']
    %15 = vsyncpa [#allocation7], 0
    %16 = vsyncpa [#allocation9], 0
    // Predicated region
    $region2: #{_qem_run.1} parent=1 // pred_check
      _
    $region3: #{_qem_run.1} parent=1 // pred_check_branch
      %18 = sbr.rel (0) target = $region5
    $region4: #{_qem_run.1} parent=1 // pred_region
      _
    $region5: #{_qem_run.1} parent=1 // pred_fallthru
      _
    // Predicated region
    $region6: #{_qem_run.1} parent=1 // pred_check
      _
    $region7: #{_qem_run.1} parent=1 // pred_check_branch
      %20 = sbr.rel (0) target = $region9
    $region8: #{_qem_run.1} parent=1 // pred_region
      _
    $region9: #{_qem_run.1} parent=1 // pred_fallthru
      _
    // Predicated region
    $region10: #{_qem_run.1} parent=1 // pred_check
      _
    $region11: #{_qem_run.1} parent=1 // pred_check_branch
      %22 = sbr.rel (0) target = $region13
    $region12: #{_qem_run.1} parent=1 // pred_region
      _
    $region13: #{_qem_run.1} parent=1 // pred_fallthru
      _
    // Predicated region
    $region14: #{_qem_run.1} parent=1 // pred_check
      _
    $region15: #{_qem_run.1} parent=1 // pred_check_branch
      %24 = sbr.rel (0) target = $region17
    $region16: #{_qem_run.1} parent=1 // pred_region
      %s26 = ssub.s32 1024, 1024
      %27 = vsyncadd [#allocation7], %s26
      %s29 = sshll.u32 [#allocation6], 4
      %s30 = int_to_ptr.vmem [resolvable:$true] %s29
      %32 = dma.hbm_to_vmem [thread:$0]  %s3, 1024, %s30, [#allocation7]
    $region17: #{_qem_run.1} parent=1 // pred_fallthru
      _
    // Predicated region
    $region18: #{_qem_run.1} parent=1 // pred_check
      _
    $region19: #{_qem_run.1} parent=1 // pred_check_branch
      %34 = sbr.rel (0) target = $region21
    $region20: #{_qem_run.1} parent=1 // pred_region
      %s36 = ssub.s32 1536, 1536
      %37 = vsyncadd [#allocation9], %s36
      %s38 = sshll.u32 [#allocation8], 4
      %s39 = int_to_ptr.vmem [resolvable:$true] %s38
      %44 = dma.hbm_to_vmem [thread:$0]  %s4, 1536, %s39, [#allocation9], 512, 512, 32
    $region21: #{_qem_run.1} parent=1 // pred_fallthru
      _
    // Predicated region
    $region22: #{_qem_run.1} parent=1 // pred_check
      _
    $region23: #{_qem_run.1} parent=1 // pred_check_branch
      %46 = sbr.rel (0) target = $region25
    $region24: #{_qem_run.1} parent=1 // pred_region
      _
    $region25: #{_qem_run.1} parent=1 // pred_fallthru
      _
    // Predicated region
    $region26: #{_qem_run.1} parent=1 // pred_check
      _
    $region27: #{_qem_run.1} parent=1 // pred_check_branch
      %48 = sbr.rel (0) target = $region29
    $region28: #{_qem_run.1} parent=1 // pred_region
      %s50 = ssub.s32 32, 32
      %51 = vsyncadd [#allocation9], %s50
      %s53 = sshll.u32 [#allocation10], 4
      %s54 = int_to_ptr.vmem [resolvable:$true] %s53
      %56 = dma.hbm_to_vmem [thread:$0]  %s6, 32, %s54, [#allocation9]
    $region29: #{_qem_run.1} parent=1 // pred_fallthru
      _
    // Predicated region
    $region30: #{_qem_run.1} parent=1 // pred_check
      _
    $region31: #{_qem_run.1} parent=1 // pred_check_branch
      %58 = sbr.rel (0) target = $region33
    $region32: #{_qem_run.1} parent=1 // pred_region
      _
    $region33: #{_qem_run.1} parent=1 // pred_fallthru
      _
    // Predicated region
    $region34: #{_qem_run.1} parent=1 // pred_check
      _
    $region35: #{_qem_run.1} parent=1 // pred_check_branch
      %60 = sbr.rel (0) target = $region37
    $region36: #{_qem_run.1} parent=1 // pred_region
      %61 = dma.done [#allocation7], 1024
    $region37: #{_qem_run.1} parent=1 // pred_fallthru
      _
    // Predicated region
    $region38: #{_qem_run.1} parent=1 // pred_check
      _
    $region39: #{_qem_run.1} parent=1 // pred_check_branch
      %63 = sbr.rel (0) target = $region41
    $region40: #{_qem_run.1} parent=1 // pred_region
      %64 = dma.done [#allocation9], 1536
    $region41: #{_qem_run.1} parent=1 // pred_fallthru
      _
    // Predicated region
    $region42: #{_qem_run.1} parent=1 // pred_check
      _
    $region43: #{_qem_run.1} parent=1 // pred_check_branch
      %66 = sbr.rel (0) target = $region45
    $region44: #{_qem_run.1} parent=1 // pred_region
      %67 = dma.done [#allocation9], 32
    $region45: #{_qem_run.1} parent=1 // pred_fallthru
      _
    %v68 = vld [vmem:[%s0] sm:$0xff]
    %v69 = vld [vmem:[%s0 + $0x8] sm:$0xff]
    %v70 = vld [vmem:[%s0 + $0x10] sm:$0xff]
    %v71 = vld [vmem:[%s0 + $0x18] sm:$0xff]
    %v72 = vld [vmem:[%s0 + $0x20] sm:$0xff]
    %v73 = vld [vmem:[%s0 + $0x28] sm:$0xff]
    %v74 = vld [vmem:[%s0 + $0x30] sm:$0xff]
    %v75 = vld [vmem:[%s0 + $0x38] sm:$0xff]
    %v76 = vld [vmem:[#allocation6] sm:$0x7f]
    %v77 = vld [vmem:[#allocation6 + $0x8] sm:$0x7f]
    %v78 = vld [vmem:[#allocation6 + $0x10] sm:$0x7f]
    %v79 = vld [vmem:[#allocation6 + $0x18] sm:$0x7f]
    %v80 = vld [vmem:[#allocation6 + $0x20] sm:$0x7f]
    %v81 = vld [vmem:[#allocation6 + $0x28] sm:$0x7f]
    %v82 = vld [vmem:[#allocation6 + $0x30] sm:$0x7f]
    %v83 = vld [vmem:[#allocation6 + $0x38] sm:$0x7f]
    %v84 = vld [vmem:[%s5] sm:$0xff]
    %v86 = vlaneseq
    %v87 = vshrl.u32 %v86, 7
    %v88 = vsub.s32 0, %v87
    %v89 = vrot.slane %v84, %v88
    %v90 = vlaneseq
    %v91 = vshrl.u32 %v90, 7
    %v92 = vsub.s32 1, %v91
    %v93 = vrot.slane %v84, %v92
    %v94 = vlaneseq
    %v95 = vshrl.u32 %v94, 7
    %v96 = vsub.s32 2, %v95
    %v97 = vrot.slane %v84, %v96
    %v98 = vlaneseq
    %v99 = vshrl.u32 %v98, 7
    %v100 = vsub.s32 3, %v99
    %v101 = vrot.slane %v84, %v100
    %v102 = vlaneseq
    %v103 = vshrl.u32 %v102, 7
    %v104 = vsub.s32 4, %v103
    %v105 = vrot.slane %v84, %v104
    %v106 = vlaneseq
    %v107 = vshrl.u32 %v106, 7
    %v108 = vsub.s32 5, %v107
    %v109 = vrot.slane %v84, %v108
    %v110 = vlaneseq
    %v111 = vshrl.u32 %v110, 7
    %v112 = vsub.s32 6, %v111
    %v113 = vrot.slane %v84, %v112
    %v114 = vlaneseq
    %v115 = vshrl.u32 %v114, 7
    %v116 = vsub.s32 7, %v115
    %v117 = vrot.slane %v84, %v116
    %vm126 = vcmask 56320
    %v128 = vsel %vm126, %v68, 0
    %v131 = vsel %vm126, %v69, 0
    %v134 = vsel %vm126, %v70, 0
    %v137 = vsel %vm126, %v71, 0
    %v140 = vsel %vm126, %v72, 0
    %v143 = vsel %vm126, %v73, 0
    %v146 = vsel %vm126, %v74, 0
    %v149 = vsel %vm126, %v75, 0
    %vm151 = vcmask 1046528
    %v153 = vsel %vm151, %v76, 0
    %v156 = vsel %vm151, %v77, 0
    %v159 = vsel %vm151, %v78, 0
    %v162 = vsel %vm151, %v79, 0
    %v165 = vsel %vm151, %v80, 0
    %v168 = vsel %vm151, %v81, 0
    %v171 = vsel %vm151, %v82, 0
    %v174 = vsel %vm151, %v83, 0
    %176 = vmatprep.subr.mxu0 0.0
    %177 = vmatpush1.msra.mxu0 0.0
    %178 = vmatprep.subr.mxu0 0.0
    %179 = vmatpush1.msra.mxu0 0.0
    %180 = vmatprep.subr.mxu0 0.0
    %181 = vmatpush1.msra.mxu0 0.0
    %182 = vmatprep.subr.mxu0 0.0
    %183 = vmatpush1.msra.mxu0 0.0
    %184 = vmatprep.subr.mxu0 0.0
    %185 = vmatpush1.msra.mxu0 0.0
    %186 = vmatprep.subr.mxu0 0.0
    %187 = vmatpush1.msra.mxu0 0.0
    %188 = vmatprep.subr.mxu0 0.0
    %189 = vmatpush1.msra.mxu0 0.0
    %190 = vmatprep.subr.mxu0 0.0
    %191 = vmatpush1.msra.mxu0 0.0
    %192 = vmatprep.subr.mxu0 0.0
    %193 = vmatpush1.msra.mxu0 0.0
    %194 = vmatprep.subr.mxu0 0.0
    %195 = vmatpush1.msra.mxu0 0.0
    %196 = vmatprep.subr.mxu0 0.0
    %197 = vmatpush1.msra.mxu0 0.0
    %198 = vmatprep.subr.mxu0 0.0
    %199 = vmatpush1.msra.mxu0 0.0
    %200 = vmatprep.subr.mxu0 0.0
    %201 = vmatpush1.msra.mxu0 0.0
    %202 = vmatprep.subr.mxu0 0.0
    %203 = vmatpush1.msra.mxu0 0.0
    %204 = vmatprep.subr.mxu0 0.0
    %205 = vmatpush1.msra.mxu0 0.0
    %206 = vmatprep.subr.mxu0 %v156
    %207 = vmatpush1.msra.mxu0 %v153
    %208 = vmatprep.subr.mxu0 0.0
    %209 = vmatpush2.msra.mxu0 0.0
    %210 = vmatprep.subr.mxu0 0.0
    %211 = vmatpush2.msra.mxu0 0.0
    %212 = vmatprep.subr.mxu0 0.0
    %213 = vmatpush2.msra.mxu0 0.0
    %214 = vmatprep.subr.mxu0 0.0
    %215 = vmatpush2.msra.mxu0 0.0
    %216 = vmatprep.subr.mxu0 0.0
    %217 = vmatpush2.msra.mxu0 0.0
    %218 = vmatprep.subr.mxu0 0.0
    %219 = vmatpush2.msra.mxu0 0.0
    %220 = vmatprep.subr.mxu0 0.0
    %221 = vmatpush2.msra.mxu0 0.0
    %222 = vmatprep.subr.mxu0 0.0
    %223 = vmatpush2.msra.mxu0 0.0
    %224 = vmatprep.subr.mxu0 0.0
    %225 = vmatpush2.msra.mxu0 0.0
    %226 = vmatprep.subr.mxu0 0.0
    %227 = vmatpush2.msra.mxu0 0.0
    %228 = vmatprep.subr.mxu0 0.0
    %229 = vmatpush2.msra.mxu0 0.0
    %230 = vmatprep.subr.mxu0 0.0
    %231 = vmatpush2.msra.mxu0 0.0
    %232 = vmatprep.subr.mxu0 0.0
    %233 = vmatpush2.msra.mxu0 0.0
    %234 = vmatprep.subr.mxu0 0.0
    %235 = vmatpush2.msra.mxu0 0.0
    %236 = vmatprep.subr.mxu0 0.0
    %237 = vmatpush2.msra.mxu0 0.0
    %238 = vmatprep.subr.mxu0 0.0
    %239 = vmatpush2.msra.mxu0 0.0
    %240 = vmatprep.mubr.f32.mxu0 0.0
    %241 = vmatmul.mubr.f32.gmra.mxu0 %v128
    %v242 = vpop.f32.mrf.mxu0
    %v243 = vadd.f32 %v89, %v242
    %v244 = vpop.f32.mrf.mxu0
    %v245 = vadd.f32 %v93, %v244
    %246 = vmatprep.mubr.f32.mxu0 0.0
    %247 = vmatmul.mubr.f32.gmra.mxu0 %v131
    %v248 = vpop.f32.mrf.mxu0
    %v249 = vadd.f32 %v89, %v248
    %v250 = vpop.f32.mrf.mxu0
    %v251 = vadd.f32 %v93, %v250
    %252 = vmatprep.mubr.f32.mxu0 0.0
    %253 = vmatmul.mubr.f32.gmra.mxu0 %v134
    %v254 = vpop.f32.mrf.mxu0
    %v255 = vadd.f32 %v89, %v254
    %v256 = vpop.f32.mrf.mxu0
    %v257 = vadd.f32 %v93, %v256
    %258 = vmatprep.mubr.f32.mxu0 0.0
    %259 = vmatmul.mubr.f32.gmra.mxu0 %v137
    %v260 = vpop.f32.mrf.mxu0
    %v261 = vadd.f32 %v89, %v260
    %v262 = vpop.f32.mrf.mxu0
    %v263 = vadd.f32 %v93, %v262
    %264 = vmatprep.mubr.f32.mxu0 0.0
    %265 = vmatmul.mubr.f32.gmra.mxu0 %v140
    %v266 = vpop.f32.mrf.mxu0
    %v267 = vadd.f32 %v89, %v266
    %v268 = vpop.f32.mrf.mxu0
    %v269 = vadd.f32 %v93, %v268
    %270 = vmatprep.mubr.f32.mxu0 0.0
    %271 = vmatmul.mubr.f32.gmra.mxu0 %v143
    %v272 = vpop.f32.mrf.mxu0
    %v273 = vadd.f32 %v89, %v272
    %v274 = vpop.f32.mrf.mxu0
    %v275 = vadd.f32 %v93, %v274
    %276 = vmatprep.mubr.f32.mxu0 0.0
    %277 = vmatmul.mubr.f32.gmra.mxu0 %v146
    %v278 = vpop.f32.mrf.mxu0
    %v279 = vadd.f32 %v89, %v278
    %v280 = vpop.f32.mrf.mxu0
    %v281 = vadd.f32 %v93, %v280
    %282 = vmatprep.mubr.f32.mxu0 0.0
    %283 = vmatmul.mubr.f32.gmra.mxu0 %v149
    %v284 = vpop.f32.mrf.mxu0
    %v285 = vadd.f32 %v89, %v284
    %v286 = vpop.f32.mrf.mxu0
    %v287 = vadd.f32 %v93, %v286
    %288 = vdwg.mxu0
    %289 = vmatprep.subr.mxu0 0.0
    %290 = vmatpush1.msra.mxu0 0.0
    %291 = vmatprep.subr.mxu0 0.0
    %292 = vmatpush1.msra.mxu0 0.0
    %293 = vmatprep.subr.mxu0 0.0
    %294 = vmatpush1.msra.mxu0 0.0
    %295 = vmatprep.subr.mxu0 0.0
    %296 = vmatpush1.msra.mxu0 0.0
    %297 = vmatprep.subr.mxu0 0.0
    %298 = vmatpush1.msra.mxu0 0.0
    %299 = vmatprep.subr.mxu0 0.0
    %300 = vmatpush1.msra.mxu0 0.0
    %301 = vmatprep.subr.mxu0 0.0
    %302 = vmatpush1.msra.mxu0 0.0
    %303 = vmatprep.subr.mxu0 0.0
    %304 = vmatpush1.msra.mxu0 0.0
    %305 = vmatprep.subr.mxu0 0.0
    %306 = vmatpush1.msra.mxu0 0.0
    %307 = vmatprep.subr.mxu0 0.0
    %308 = vmatpush1.msra.mxu0 0.0
    %309 = vmatprep.subr.mxu0 0.0
    %310 = vmatpush1.msra.mxu0 0.0
    %311 = vmatprep.subr.mxu0 0.0
    %312 = vmatpush1.msra.mxu0 0.0
    %313 = vmatprep.subr.mxu0 0.0
    %314 = vmatpush1.msra.mxu0 0.0
    %315 = vmatprep.subr.mxu0 0.0
    %316 = vmatpush1.msra.mxu0 0.0
    %317 = vmatprep.subr.mxu0 0.0
    %318 = vmatpush1.msra.mxu0 0.0
    %319 = vmatprep.subr.mxu0 %v162
    %320 = vmatpush1.msra.mxu0 %v159
    %321 = vmatprep.subr.mxu0 0.0
    %322 = vmatpush2.msra.mxu0 0.0
    %323 = vmatprep.subr.mxu0 0.0
    %324 = vmatpush2.msra.mxu0 0.0
    %325 = vmatprep.subr.mxu0 0.0
    %326 = vmatpush2.msra.mxu0 0.0
    %327 = vmatprep.subr.mxu0 0.0
    %328 = vmatpush2.msra.mxu0 0.0
    %329 = vmatprep.subr.mxu0 0.0
    %330 = vmatpush2.msra.mxu0 0.0
    %331 = vmatprep.subr.mxu0 0.0
    %332 = vmatpush2.msra.mxu0 0.0
    %333 = vmatprep.subr.mxu0 0.0
    %334 = vmatpush2.msra.mxu0 0.0
    %335 = vmatprep.subr.mxu0 0.0
    %336 = vmatpush2.msra.mxu0 0.0
    %337 = vmatprep.subr.mxu0 0.0
    %338 = vmatpush2.msra.mxu0 0.0
    %339 = vmatprep.subr.mxu0 0.0
    %340 = vmatpush2.msra.mxu0 0.0
    %341 = vmatprep.subr.mxu0 0.0
    %342 = vmatpush2.msra.mxu0 0.0
    %343 = vmatprep.subr.mxu0 0.0
    %344 = vmatpush2.msra.mxu0 0.0
    %345 = vmatprep.subr.mxu0 0.0
    %346 = vmatpush2.msra.mxu0 0.0
    %347 = vmatprep.subr.mxu0 0.0
    %348 = vmatpush2.msra.mxu0 0.0
    %349 = vmatprep.subr.mxu0 0.0
    %350 = vmatpush2.msra.mxu0 0.0
    %351 = vmatprep.subr.mxu0 0.0
    %352 = vmatpush2.msra.mxu0 0.0
    %353 = vmatprep.mubr.f32.mxu0 0.0
    %354 = vmatmul.mubr.f32.gmra.mxu0 %v128
    %v355 = vpop.f32.mrf.mxu0
    %v356 = vadd.f32 %v97, %v355
    %v357 = vpop.f32.mrf.mxu0
    %v358 = vadd.f32 %v101, %v357
    %359 = vmatprep.mubr.f32.mxu0 0.0
    %360 = vmatmul.mubr.f32.gmra.mxu0 %v131
    %v361 = vpop.f32.mrf.mxu0
    %v362 = vadd.f32 %v97, %v361
    %v363 = vpop.f32.mrf.mxu0
    %v364 = vadd.f32 %v101, %v363
    %365 = vmatprep.mubr.f32.mxu0 0.0
    %366 = vmatmul.mubr.f32.gmra.mxu0 %v134
    %v367 = vpop.f32.mrf.mxu0
    %v368 = vadd.f32 %v97, %v367
    %v369 = vpop.f32.mrf.mxu0
    %v370 = vadd.f32 %v101, %v369
    %371 = vmatprep.mubr.f32.mxu0 0.0
    %372 = vmatmul.mubr.f32.gmra.mxu0 %v137
    %v373 = vpop.f32.mrf.mxu0
    %v374 = vadd.f32 %v97, %v373
    %v375 = vpop.f32.mrf.mxu0
    %v376 = vadd.f32 %v101, %v375
    %377 = vmatprep.mubr.f32.mxu0 0.0
    %378 = vmatmul.mubr.f32.gmra.mxu0 %v140
    %v379 = vpop.f32.mrf.mxu0
    %v380 = vadd.f32 %v97, %v379
    %v381 = vpop.f32.mrf.mxu0
    %v382 = vadd.f32 %v101, %v381
    %383 = vmatprep.mubr.f32.mxu0 0.0
    %384 = vmatmul.mubr.f32.gmra.mxu0 %v143
    %v385 = vpop.f32.mrf.mxu0
    %v386 = vadd.f32 %v97, %v385
    %v387 = vpop.f32.mrf.mxu0
    %v388 = vadd.f32 %v101, %v387
    %389 = vmatprep.mubr.f32.mxu0 0.0
    %390 = vmatmul.mubr.f32.gmra.mxu0 %v146
    %v391 = vpop.f32.mrf.mxu0
    %v392 = vadd.f32 %v97, %v391
    %v393 = vpop.f32.mrf.mxu0
    %v394 = vadd.f32 %v101, %v393
    %395 = vmatprep.mubr.f32.mxu0 0.0
    %396 = vmatmul.mubr.f32.gmra.mxu0 %v149
    %v397 = vpop.f32.mrf.mxu0
    %v398 = vadd.f32 %v97, %v397
    %v399 = vpop.f32.mrf.mxu0
    %v400 = vadd.f32 %v101, %v399
    %401 = vdwg.mxu0
    %402 = vmatprep.subr.mxu0 0.0
    %403 = vmatpush1.msra.mxu0 0.0
    %404 = vmatprep.subr.mxu0 0.0
    %405 = vmatpush1.msra.mxu0 0.0
    %406 = vmatprep.subr.mxu0 0.0
    %407 = vmatpush1.msra.mxu0 0.0
    %408 = vmatprep.subr.mxu0 0.0
    %409 = vmatpush1.msra.mxu0 0.0
    %410 = vmatprep.subr.mxu0 0.0
    %411 = vmatpush1.msra.mxu0 0.0
    %412 = vmatprep.subr.mxu0 0.0
    %413 = vmatpush1.msra.mxu0 0.0
    %414 = vmatprep.subr.mxu0 0.0
    %415 = vmatpush1.msra.mxu0 0.0
    %416 = vmatprep.subr.mxu0 0.0
    %417 = vmatpush1.msra.mxu0 0.0
    %418 = vmatprep.subr.mxu0 0.0
    %419 = vmatpush1.msra.mxu0 0.0
    %420 = vmatprep.subr.mxu0 0.0
    %421 = vmatpush1.msra.mxu0 0.0
    %422 = vmatprep.subr.mxu0 0.0
    %423 = vmatpush1.msra.mxu0 0.0
    %424 = vmatprep.subr.mxu0 0.0
    %425 = vmatpush1.msra.mxu0 0.0
    %426 = vmatprep.subr.mxu0 0.0
    %427 = vmatpush1.msra.mxu0 0.0
    %428 = vmatprep.subr.mxu0 0.0
    %429 = vmatpush1.msra.mxu0 0.0
    %430 = vmatprep.subr.mxu0 0.0
    %431 = vmatpush1.msra.mxu0 0.0
    %432 = vmatprep.subr.mxu0 %v168
    %433 = vmatpush1.msra.mxu0 %v165
    %434 = vmatprep.subr.mxu0 0.0
    %435 = vmatpush2.msra.mxu0 0.0
    %436 = vmatprep.subr.mxu0 0.0
    %437 = vmatpush2.msra.mxu0 0.0
    %438 = vmatprep.subr.mxu0 0.0
    %439 = vmatpush2.msra.mxu0 0.0
    %440 = vmatprep.subr.mxu0 0.0
    %441 = vmatpush2.msra.mxu0 0.0
    %442 = vmatprep.subr.mxu0 0.0
    %443 = vmatpush2.msra.mxu0 0.0
    %444 = vmatprep.subr.mxu0 0.0
    %445 = vmatpush2.msra.mxu0 0.0
    %446 = vmatprep.subr.mxu0 0.0
    %447 = vmatpush2.msra.mxu0 0.0
    %448 = vmatprep.subr.mxu0 0.0
    %449 = vmatpush2.msra.mxu0 0.0
    %450 = vmatprep.subr.mxu0 0.0
    %451 = vmatpush2.msra.mxu0 0.0
    %452 = vmatprep.subr.mxu0 0.0
    %453 = vmatpush2.msra.mxu0 0.0
    %454 = vmatprep.subr.mxu0 0.0
    %455 = vmatpush2.msra.mxu0 0.0
    %456 = vmatprep.subr.mxu0 0.0
    %457 = vmatpush2.msra.mxu0 0.0
    %458 = vmatprep.subr.mxu0 0.0
    %459 = vmatpush2.msra.mxu0 0.0
    %460 = vmatprep.subr.mxu0 0.0
    %461 = vmatpush2.msra.mxu0 0.0
    %462 = vmatprep.subr.mxu0 0.0
    %463 = vmatpush2.msra.mxu0 0.0
    %464 = vmatprep.subr.mxu0 0.0
    %465 = vmatpush2.msra.mxu0 0.0
    %466 = vmatprep.mubr.f32.mxu0 0.0
    %467 = vmatmul.mubr.f32.gmra.mxu0 %v128
    %v468 = vpop.f32.mrf.mxu0
    %v469 = vadd.f32 %v105, %v468
    %v470 = vpop.f32.mrf.mxu0
    %v471 = vadd.f32 %v109, %v470
    %472 = vmatprep.mubr.f32.mxu0 0.0
    %473 = vmatmul.mubr.f32.gmra.mxu0 %v131
    %v474 = vpop.f32.mrf.mxu0
    %v475 = vadd.f32 %v105, %v474
    %v476 = vpop.f32.mrf.mxu0
    %v477 = vadd.f32 %v109, %v476
    %478 = vmatprep.mubr.f32.mxu0 0.0
    %479 = vmatmul.mubr.f32.gmra.mxu0 %v134
    %v480 = vpop.f32.mrf.mxu0
    %v481 = vadd.f32 %v105, %v480
    %v482 = vpop.f32.mrf.mxu0
    %v483 = vadd.f32 %v109, %v482
    %484 = vmatprep.mubr.f32.mxu0 0.0
    %485 = vmatmul.mubr.f32.gmra.mxu0 %v137
    %v486 = vpop.f32.mrf.mxu0
    %v487 = vadd.f32 %v105, %v486
    %v488 = vpop.f32.mrf.mxu0
    %v489 = vadd.f32 %v109, %v488
    %490 = vmatprep.mubr.f32.mxu0 0.0
    %491 = vmatmul.mubr.f32.gmra.mxu0 %v140
    %v492 = vpop.f32.mrf.mxu0
    %v493 = vadd.f32 %v105, %v492
    %v494 = vpop.f32.mrf.mxu0
    %v495 = vadd.f32 %v109, %v494
    %496 = vmatprep.mubr.f32.mxu0 0.0
    %497 = vmatmul.mubr.f32.gmra.mxu0 %v143
    %v498 = vpop.f32.mrf.mxu0
    %v499 = vadd.f32 %v105, %v498
    %v500 = vpop.f32.mrf.mxu0
    %v501 = vadd.f32 %v109, %v500
    %502 = vmatprep.mubr.f32.mxu0 0.0
    %503 = vmatmul.mubr.f32.gmra.mxu0 %v146
    %v504 = vpop.f32.mrf.mxu0
    %v505 = vadd.f32 %v105, %v504
    %v506 = vpop.f32.mrf.mxu0
    %v507 = vadd.f32 %v109, %v506
    %508 = vmatprep.mubr.f32.mxu0 0.0
    %509 = vmatmul.mubr.f32.gmra.mxu0 %v149
    %v510 = vpop.f32.mrf.mxu0
    %v511 = vadd.f32 %v105, %v510
    %v512 = vpop.f32.mrf.mxu0
    %v513 = vadd.f32 %v109, %v512
    %514 = vdwg.mxu0
    %515 = vmatprep.subr.mxu0 0.0
    %516 = vmatpush1.msra.mxu0 0.0
    %517 = vmatprep.subr.mxu0 0.0
    %518 = vmatpush1.msra.mxu0 0.0
    %519 = vmatprep.subr.mxu0 0.0
    %520 = vmatpush1.msra.mxu0 0.0
    %521 = vmatprep.subr.mxu0 0.0
    %522 = vmatpush1.msra.mxu0 0.0
    %523 = vmatprep.subr.mxu0 0.0
    %524 = vmatpush1.msra.mxu0 0.0
    %525 = vmatprep.subr.mxu0 0.0
    %526 = vmatpush1.msra.mxu0 0.0
    %527 = vmatprep.subr.mxu0 0.0
    %528 = vmatpush1.msra.mxu0 0.0
    %529 = vmatprep.subr.mxu0 0.0
    %530 = vmatpush1.msra.mxu0 0.0
    %531 = vmatprep.subr.mxu0 0.0
    %532 = vmatpush1.msra.mxu0 0.0
    %533 = vmatprep.subr.mxu0 0.0
    %534 = vmatpush1.msra.mxu0 0.0
    %535 = vmatprep.subr.mxu0 0.0
    %536 = vmatpush1.msra.mxu0 0.0
    %537 = vmatprep.subr.mxu0 0.0
    %538 = vmatpush1.msra.mxu0 0.0
    %539 = vmatprep.subr.mxu0 0.0
    %540 = vmatpush1.msra.mxu0 0.0
    %541 = vmatprep.subr.mxu0 0.0
    %542 = vmatpush1.msra.mxu0 0.0
    %543 = vmatprep.subr.mxu0 0.0
    %544 = vmatpush1.msra.mxu0 0.0
    %545 = vmatprep.subr.mxu0 %v174
    %546 = vmatpush1.msra.mxu0 %v171
    %547 = vmatprep.subr.mxu0 0.0
    %548 = vmatpush2.msra.mxu0 0.0
    %549 = vmatprep.subr.mxu0 0.0
    %550 = vmatpush2.msra.mxu0 0.0
    %551 = vmatprep.subr.mxu0 0.0
    %552 = vmatpush2.msra.mxu0 0.0
    %553 = vmatprep.subr.mxu0 0.0
    %554 = vmatpush2.msra.mxu0 0.0
    %555 = vmatprep.subr.mxu0 0.0
    %556 = vmatpush2.msra.mxu0 0.0
    %557 = vmatprep.subr.mxu0 0.0
    %558 = vmatpush2.msra.mxu0 0.0
    %559 = vmatprep.subr.mxu0 0.0
    %560 = vmatpush2.msra.mxu0 0.0
    %561 = vmatprep.subr.mxu0 0.0
    %562 = vmatpush2.msra.mxu0 0.0
    %563 = vmatprep.subr.mxu0 0.0
    %564 = vmatpush2.msra.mxu0 0.0
    %565 = vmatprep.subr.mxu0 0.0
    %566 = vmatpush2.msra.mxu0 0.0
    %567 = vmatprep.subr.mxu0 0.0
    %568 = vmatpush2.msra.mxu0 0.0
    %569 = vmatprep.subr.mxu0 0.0
    %570 = vmatpush2.msra.mxu0 0.0
    %571 = vmatprep.subr.mxu0 0.0
    %572 = vmatpush2.msra.mxu0 0.0
    %573 = vmatprep.subr.mxu0 0.0
    %574 = vmatpush2.msra.mxu0 0.0
    %575 = vmatprep.subr.mxu0 0.0
    %576 = vmatpush2.msra.mxu0 0.0
    %577 = vmatprep.subr.mxu0 0.0
    %578 = vmatpush2.msra.mxu0 0.0
    %579 = vmatprep.mubr.f32.mxu0 0.0
    %580 = vmatmul.mubr.f32.gmra.mxu0 %v128
    %v581 = vpop.f32.mrf.mxu0
    %v582 = vadd.f32 %v113, %v581
    %v583 = vpop.f32.mrf.mxu0
    %v584 = vadd.f32 %v117, %v583
    %585 = vmatprep.mubr.f32.mxu0 0.0
    %586 = vmatmul.mubr.f32.gmra.mxu0 %v131
    %v587 = vpop.f32.mrf.mxu0
    %v588 = vadd.f32 %v113, %v587
    %v589 = vpop.f32.mrf.mxu0
    %v590 = vadd.f32 %v117, %v589
    %591 = vmatprep.mubr.f32.mxu0 0.0
    %592 = vmatmul.mubr.f32.gmra.mxu0 %v134
    %v593 = vpop.f32.mrf.mxu0
    %v594 = vadd.f32 %v113, %v593
    %v595 = vpop.f32.mrf.mxu0
    %v596 = vadd.f32 %v117, %v595
    %597 = vmatprep.mubr.f32.mxu0 0.0
    %598 = vmatmul.mubr.f32.gmra.mxu0 %v137
    %v599 = vpop.f32.mrf.mxu0
    %v600 = vadd.f32 %v113, %v599
    %v601 = vpop.f32.mrf.mxu0
    %v602 = vadd.f32 %v117, %v601
    %603 = vmatprep.mubr.f32.mxu0 0.0
    %604 = vmatmul.mubr.f32.gmra.mxu0 %v140
    %v605 = vpop.f32.mrf.mxu0
    %v606 = vadd.f32 %v113, %v605
    %v607 = vpop.f32.mrf.mxu0
    %v608 = vadd.f32 %v117, %v607
    %609 = vmatprep.mubr.f32.mxu0 0.0
    %610 = vmatmul.mubr.f32.gmra.mxu0 %v143
    %v611 = vpop.f32.mrf.mxu0
    %v612 = vadd.f32 %v113, %v611
    %v613 = vpop.f32.mrf.mxu0
    %v614 = vadd.f32 %v117, %v613
    %615 = vmatprep.mubr.f32.mxu0 0.0
    %616 = vmatmul.mubr.f32.gmra.mxu0 %v146
    %v617 = vpop.f32.mrf.mxu0
    %v618 = vadd.f32 %v113, %v617
    %v619 = vpop.f32.mrf.mxu0
    %v620 = vadd.f32 %v117, %v619
    %621 = vmatprep.mubr.f32.mxu0 0.0
    %622 = vmatmul.mubr.f32.gmra.mxu0 %v149
    %v623 = vpop.f32.mrf.mxu0
    %v624 = vadd.f32 %v113, %v623
    %v625 = vpop.f32.mrf.mxu0
    %v626 = vadd.f32 %v117, %v625
    %627 = vdwg.mxu0
    %628 = vst [vmem:[#allocation2] sm:$0xff] %v243
    %629 = vst [vmem:[#allocation2 + $0x8] sm:$0xff] %v245
    %630 = vst [vmem:[#allocation2 + $0x10] sm:$0xff] %v356
    %631 = vst [vmem:[#allocation2 + $0x18] sm:$0xff] %v358
    %632 = vst [vmem:[#allocation2 + $0x20] sm:$0xff] %v469
    %633 = vst [vmem:[#allocation2 + $0x28] sm:$0xff] %v471
    %634 = vst [vmem:[#allocation2 + $0x30] sm:$0xff] %v582
    %635 = vst [vmem:[#allocation2 + $0x38] sm:$0xff] %v584
    %636 = vst [vmem:[#allocation2 + $0x40] sm:$0xff] %v249
    %637 = vst [vmem:[#allocation2 + $0x48] sm:$0xff] %v251
    %638 = vst [vmem:[#allocation2 + $0x50] sm:$0xff] %v362
    %639 = vst [vmem:[#allocation2 + $0x58] sm:$0xff] %v364
    %640 = vst [vmem:[#allocation2 + $0x60] sm:$0xff] %v475
    %641 = vst [vmem:[#allocation2 + $0x68] sm:$0xff] %v477
    %642 = vst [vmem:[#allocation2 + $0x70] sm:$0xff] %v588
    %643 = vst [vmem:[#allocation2 + $0x78] sm:$0xff] %v590
    %644 = vst [vmem:[#allocation2 + $0x80] sm:$0xff] %v255
    %645 = vst [vmem:[#allocation2 + $0x88] sm:$0xff] %v257
    %646 = vst [vmem:[#allocation2 + $0x90] sm:$0xff] %v368
    %647 = vst [vmem:[#allocation2 + $0x98] sm:$0xff] %v370
    %648 = vst [vmem:[#allocation2 + $0xa0] sm:$0xff] %v481
    %649 = vst [vmem:[#allocation2 + $0xa8] sm:$0xff] %v483
    %650 = vst [vmem:[#allocation2 + $0xb0] sm:$0xff] %v594
    %651 = vst [vmem:[#allocation2 + $0xb8] sm:$0xff] %v596
    %652 = vst [vmem:[#allocation2 + $0xc0] sm:$0xff] %v261
    %653 = vst [vmem:[#allocation2 + $0xc8] sm:$0xff] %v263
    %654 = vst [vmem:[#allocation2 + $0xd0] sm:$0xff] %v374
    %655 = vst [vmem:[#allocation2 + $0xd8] sm:$0xff] %v376
    %656 = vst [vmem:[#allocation2 + $0xe0] sm:$0xff] %v487
    %657 = vst [vmem:[#allocation2 + $0xe8] sm:$0xff] %v489
    %658 = vst [vmem:[#allocation2 + $0xf0] sm:$0xff] %v600
    %659 = vst [vmem:[#allocation2 + $0xf8] sm:$0xff] %v602
    %660 = vst [vmem:[#allocation2 + $0x100] sm:$0xff] %v267
    %661 = vst [vmem:[#allocation2 + $0x108] sm:$0xff] %v269
    %662 = vst [vmem:[#allocation2 + $0x110] sm:$0xff] %v380
    %663 = vst [vmem:[#allocation2 + $0x118] sm:$0xff] %v382
    %664 = vst [vmem:[#allocation2 + $0x120] sm:$0xff] %v493
    %665 = vst [vmem:[#allocation2 + $0x128] sm:$0xff] %v495
    %666 = vst [vmem:[#allocation2 + $0x130] sm:$0xff] %v606
    %667 = vst [vmem:[#allocation2 + $0x138] sm:$0xff] %v608
    %668 = vst [vmem:[#allocation2 + $0x140] sm:$0xff] %v273
    %669 = vst [vmem:[#allocation2 + $0x148] sm:$0xff] %v275
    %670 = vst [vmem:[#allocation2 + $0x150] sm:$0xff] %v386
    %671 = vst [vmem:[#allocation2 + $0x158] sm:$0xff] %v388
    %672 = vst [vmem:[#allocation2 + $0x160] sm:$0xff] %v499
    %673 = vst [vmem:[#allocation2 + $0x168] sm:$0xff] %v501
    %674 = vst [vmem:[#allocation2 + $0x170] sm:$0xff] %v612
    %675 = vst [vmem:[#allocation2 + $0x178] sm:$0xff] %v614
    %676 = vst [vmem:[#allocation2 + $0x180] sm:$0xff] %v279
    %677 = vst [vmem:[#allocation2 + $0x188] sm:$0xff] %v281
    %678 = vst [vmem:[#allocation2 + $0x190] sm:$0xff] %v392
    %679 = vst [vmem:[#allocation2 + $0x198] sm:$0xff] %v394
    %680 = vst [vmem:[#allocation2 + $0x1a0] sm:$0xff] %v505
    %681 = vst [vmem:[#allocation2 + $0x1a8] sm:$0xff] %v507
    %682 = vst [vmem:[#allocation2 + $0x1b0] sm:$0xff] %v618
    %683 = vst [vmem:[#allocation2 + $0x1b8] sm:$0xff] %v620
    %684 = vst [vmem:[#allocation2 + $0x1c0] sm:$0xff] %v285
    %685 = vst [vmem:[#allocation2 + $0x1c8] sm:$0xff] %v287
    %686 = vst [vmem:[#allocation2 + $0x1d0] sm:$0xff] %v398
    %687 = vst [vmem:[#allocation2 + $0x1d8] sm:$0xff] %v400
    %688 = vst [vmem:[#allocation2 + $0x1e0] sm:$0xff] %v511
    %689 = vst [vmem:[#allocation2 + $0x1e8] sm:$0xff] %v513
    %690 = vst [vmem:[#allocation2 + $0x1f0] sm:$0xff] %v624
    %691 = vst [vmem:[#allocation2 + $0x1f8] sm:$0xff] %v626
    %v692 = vld [vmem:[#allocation8] sm:$0xff]
    %v693 = vld [vmem:[#allocation8 + $0x8] sm:$0xff]
    %v694 = vld [vmem:[#allocation8 + $0x10] sm:$0xff]
    %v695 = vld [vmem:[#allocation8 + $0x18] sm:$0xff]
    %v696 = vld [vmem:[#allocation8 + $0x20] sm:$0xff]
    %v697 = vld [vmem:[#allocation8 + $0x28] sm:$0xff]
    %v698 = vld [vmem:[#allocation8 + $0x30] sm:$0xff]
    %v699 = vld [vmem:[#allocation8 + $0x38] sm:$0xff]
    %v700 = vld [vmem:[#allocation8 + $0x40] sm:$0xff]
    %v701 = vld [vmem:[#allocation8 + $0x48] sm:$0xff]
    %v702 = vld [vmem:[#allocation8 + $0x50] sm:$0xff]
    %v703 = vld [vmem:[#allocation8 + $0x58] sm:$0xff]
    %s704 = smul.u32 0, 8
    %s705 = smul.addr %s704, 8
    %s706 = scalar_lea.vmem [#allocation2], %s705
    %v707 = vld [vmem:[%s706] sm:$0xff]
    %v708 = vld [vmem:[%s706 + $0x8] sm:$0xff]
    %v709 = vld [vmem:[%s706 + $0x10] sm:$0xff]
    %v710 = vld [vmem:[%s706 + $0x18] sm:$0xff]
    %s711 = smul.u32 7, 8
    %s712 = smul.addr %s711, 8
    %s713 = scalar_lea.vmem [#allocation2], %s712
    %v714 = vld [vmem:[%s713 + $0x20] sm:$0xff]
    %v715 = vld [vmem:[%s713 + $0x28] sm:$0xff]
    %v716 = vld [vmem:[%s713 + $0x30] sm:$0xff]
    %v717 = vld [vmem:[%s713 + $0x38] sm:$0xff]
    %v718 = vadd.f32 %v707, %v714
    %v719 = vadd.f32 %v708, %v715
    %v720 = vadd.f32 %v709, %v716
    %v721 = vadd.f32 %v710, %v717
    %vm722 = vcmask 195584
    %v724 = vsel %vm722, 0.0, 0
    %726 = vmatprep.subr.mxu0 0.0
    %727 = vmatpush1.msra.mxu0 0.0
    %728 = vmatprep.subr.mxu0 0.0
    %729 = vmatpush1.msra.mxu0 0.0
    %730 = vmatprep.subr.mxu0 0.0
    %731 = vmatpush1.msra.mxu0 0.0
    %732 = vmatprep.subr.mxu0 0.0
    %733 = vmatpush1.msra.mxu0 0.0
    %734 = vmatprep.subr.mxu0 0.0
    %735 = vmatpush1.msra.mxu0 0.0
    %736 = vmatprep.subr.mxu0 0.0
    %737 = vmatpush1.msra.mxu0 0.0
    %738 = vmatprep.subr.mxu0 0.0
    %739 = vmatpush1.msra.mxu0 0.0
    %740 = vmatprep.subr.mxu0 0.0
    %741 = vmatpush1.msra.mxu0 0.0
    %742 = vmatprep.subr.mxu0 0.0
    %743 = vmatpush1.msra.mxu0 0.0
    %744 = vmatprep.subr.mxu0 0.0
    %745 = vmatpush1.msra.mxu0 0.0
    %746 = vmatprep.subr.mxu0 0.0
    %747 = vmatpush1.msra.mxu0 0.0
    %748 = vmatprep.subr.mxu0 0.0
    %749 = vmatpush1.msra.mxu0 0.0
    %750 = vmatprep.subr.mxu0 0.0
    %751 = vmatpush1.msra.mxu0 0.0
    %752 = vmatprep.subr.mxu0 %v701
    %753 = vmatpush1.msra.mxu0 %v700
    %754 = vmatprep.subr.mxu0 %v697
    %755 = vmatpush1.msra.mxu0 %v696
    %756 = vmatprep.subr.mxu0 %v693
    %757 = vmatpush1.msra.mxu0 %v692
    %758 = vmatprep.subr.mxu0 0.0
    %759 = vmatpush2.msra.mxu0 0.0
    %760 = vmatprep.subr.mxu0 0.0
    %761 = vmatpush2.msra.mxu0 0.0
    %762 = vmatprep.subr.mxu0 0.0
    %763 = vmatpush2.msra.mxu0 0.0
    %764 = vmatprep.subr.mxu0 0.0
    %765 = vmatpush2.msra.mxu0 0.0
    %766 = vmatprep.subr.mxu0 0.0
    %767 = vmatpush2.msra.mxu0 0.0
    %768 = vmatprep.subr.mxu0 0.0
    %769 = vmatpush2.msra.mxu0 0.0
    %770 = vmatprep.subr.mxu0 0.0
    %771 = vmatpush2.msra.mxu0 0.0
    %772 = vmatprep.subr.mxu0 0.0
    %773 = vmatpush2.msra.mxu0 0.0
    %774 = vmatprep.subr.mxu0 0.0
    %775 = vmatpush2.msra.mxu0 0.0
    %776 = vmatprep.subr.mxu0 0.0
    %777 = vmatpush2.msra.mxu0 0.0
    %778 = vmatprep.subr.mxu0 0.0
    %779 = vmatpush2.msra.mxu0 0.0
    %780 = vmatprep.subr.mxu0 0.0
    %781 = vmatpush2.msra.mxu0 0.0
    %782 = vmatprep.subr.mxu0 0.0
    %783 = vmatpush2.msra.mxu0 0.0
    %784 = vmatprep.subr.mxu0 0.0
    %785 = vmatpush2.msra.mxu0 0.0
    %786 = vmatprep.subr.mxu0 0.0
    %787 = vmatpush2.msra.mxu0 0.0
    %788 = vmatprep.subr.mxu0 0.0
    %789 = vmatpush2.msra.mxu0 0.0
    %790 = vmatprep.mubr.f32.mxu0 0.0
    %791 = vmatmul.mubr.f32.gmra.mxu0 %v724
    %v792 = vpop.f32.mrf.mxu0
    %v793 = vadd.f32 0.0, %v792
    %v794 = vpop.f32.mrf.mxu0
    %v795 = vadd.f32 0.0, %v794
    %796 = vdwg.mxu0
    %797 = vmatprep.subr.mxu0 0.0
    %798 = vmatpush1.msra.mxu0 0.0
    %799 = vmatprep.subr.mxu0 0.0
    %800 = vmatpush1.msra.mxu0 0.0
    %801 = vmatprep.subr.mxu0 0.0
    %802 = vmatpush1.msra.mxu0 0.0
    %803 = vmatprep.subr.mxu0 0.0
    %804 = vmatpush1.msra.mxu0 0.0
    %805 = vmatprep.subr.mxu0 0.0
    %806 = vmatpush1.msra.mxu0 0.0
    %807 = vmatprep.subr.mxu0 0.0
    %808 = vmatpush1.msra.mxu0 0.0
    %809 = vmatprep.subr.mxu0 0.0
    %810 = vmatpush1.msra.mxu0 0.0
    %811 = vmatprep.subr.mxu0 0.0
    %812 = vmatpush1.msra.mxu0 0.0
    %813 = vmatprep.subr.mxu0 0.0
    %814 = vmatpush1.msra.mxu0 0.0
    %815 = vmatprep.subr.mxu0 0.0
    %816 = vmatpush1.msra.mxu0 0.0
    %817 = vmatprep.subr.mxu0 0.0
    %818 = vmatpush1.msra.mxu0 0.0
    %819 = vmatprep.subr.mxu0 0.0
    %820 = vmatpush1.msra.mxu0 0.0
    %821 = vmatprep.subr.mxu0 0.0
    %822 = vmatpush1.msra.mxu0 0.0
    %823 = vmatprep.subr.mxu0 %v703
    %824 = vmatpush1.msra.mxu0 %v702
    %825 = vmatprep.subr.mxu0 %v699
    %826 = vmatpush1.msra.mxu0 %v698
    %827 = vmatprep.subr.mxu0 %v695
    %828 = vmatpush1.msra.mxu0 %v694
    %829 = vmatprep.subr.mxu0 0.0
    %830 = vmatpush2.msra.mxu0 0.0
    %831 = vmatprep.subr.mxu0 0.0
    %832 = vmatpush2.msra.mxu0 0.0
    %833 = vmatprep.subr.mxu0 0.0
    %834 = vmatpush2.msra.mxu0 0.0
    %835 = vmatprep.subr.mxu0 0.0
    %836 = vmatpush2.msra.mxu0 0.0
    %837 = vmatprep.subr.mxu0 0.0
    %838 = vmatpush2.msra.mxu0 0.0
    %839 = vmatprep.subr.mxu0 0.0
    %840 = vmatpush2.msra.mxu0 0.0
    %841 = vmatprep.subr.mxu0 0.0
    %842 = vmatpush2.msra.mxu0 0.0
    %843 = vmatprep.subr.mxu0 0.0
    %844 = vmatpush2.msra.mxu0 0.0
    %845 = vmatprep.subr.mxu0 0.0
    %846 = vmatpush2.msra.mxu0 0.0
    %847 = vmatprep.subr.mxu0 0.0
    %848 = vmatpush2.msra.mxu0 0.0
    %849 = vmatprep.subr.mxu0 0.0
    %850 = vmatpush2.msra.mxu0 0.0
    %851 = vmatprep.subr.mxu0 0.0
    %852 = vmatpush2.msra.mxu0 0.0
    %853 = vmatprep.subr.mxu0 0.0
    %854 = vmatpush2.msra.mxu0 0.0
    %855 = vmatprep.subr.mxu0 0.0
    %856 = vmatpush2.msra.mxu0 0.0
    %857 = vmatprep.subr.mxu0 0.0
    %858 = vmatpush2.msra.mxu0 0.0
    %859 = vmatprep.subr.mxu0 0.0
    %860 = vmatpush2.msra.mxu0 0.0
    %861 = vmatprep.mubr.f32.mxu0 0.0
    %862 = vmatmul.mubr.f32.gmra.mxu0 %v724
    %v863 = vpop.f32.mrf.mxu0
    %v864 = vadd.f32 0.0, %v863
    %v865 = vpop.f32.mrf.mxu0
    %v866 = vadd.f32 0.0, %v865
    %867 = vdwg.mxu0
    %v868 = vadd.f32 %v718, %v793
    %v869 = vadd.f32 %v719, %v795
    %v870 = vadd.f32 %v720, %v864
    %v871 = vadd.f32 %v721, %v866
    %v872 = vxor.u32 %v868, 2147483648
    %v873 = vmul.f32 %v872, 1.442695
    %v874 = vpow.pop %v873
    %v875 = vadd.f32 %v874, 1.0
    %v876 = vrcp.pop %v875
    %v877 = vmul.f32 1.0, %v876
    %v878 = vxor.u32 %v869, 2147483648
    %v879 = vmul.f32 %v878, 1.442695
    %v880 = vpow.pop %v879
    %v881 = vadd.f32 %v880, 1.0
    %v882 = vrcp.pop %v881
    %v883 = vmul.f32 1.0, %v882
    %v884 = vtanh.pop %v870
    %v885 = vxor.u32 %v871, 2147483648
    %v886 = vmul.f32 %v885, 1.442695
    %v887 = vpow.pop %v886
    %v888 = vadd.f32 %v887, 1.0
    %v889 = vrcp.pop %v888
    %v890 = vmul.f32 1.0, %v889
    %v891 = vmul.f32 %v883, 0.0
    %v892 = vmul.f32 %v877, %v884
    %v893 = vadd.f32 %v891, %v892
    %v894 = vtanh.pop %v893
    %v895 = vmul.f32 %v890, %v894
    %v896 = vld [vmem:[%s1] sm:$0xff]
    %v897 = vmul.f32 %v895, %v896
    %v898 = vmul.f32 %v893, %v896
    %899 = vst.msk [vmem:[#allocation3] sm:$0xff] %vm722, %v897
    %s900 = scalar_lea.vmem [#allocation4], 56
    %901 = vst.msk [vmem:[%s900] sm:$0xff] %vm722, %v897
    %s902 = smul.u32 1, 8
    %s903 = smul.addr %s902, 8
    %s904 = scalar_lea.vmem [#allocation2], %s903
    %v905 = vld [vmem:[%s904] sm:$0xff]
    %v906 = vld [vmem:[%s904 + $0x8] sm:$0xff]
    %v907 = vld [vmem:[%s904 + $0x10] sm:$0xff]
    %v908 = vld [vmem:[%s904 + $0x18] sm:$0xff]
    %s909 = smul.u32 6, 8
    %s910 = smul.addr %s909, 8
    %s911 = scalar_lea.vmem [#allocation2], %s910
    %v912 = vld [vmem:[%s911 + $0x20] sm:$0xff]
    %v913 = vld [vmem:[%s911 + $0x28] sm:$0xff]
    %v914 = vld [vmem:[%s911 + $0x30] sm:$0xff]
    %v915 = vld [vmem:[%s911 + $0x38] sm:$0xff]
    %v916 = vadd.f32 %v905, %v912
    %v917 = vadd.f32 %v906, %v913
    %v918 = vadd.f32 %v907, %v914
    %v919 = vadd.f32 %v908, %v915
    %v921 = vsel %vm722, %v897, 0
    %923 = vmatprep.subr.mxu0 0.0
    %924 = vmatpush1.msra.mxu0 0.0
    %925 = vmatprep.subr.mxu0 0.0
    %926 = vmatpush1.msra.mxu0 0.0
    %927 = vmatprep.subr.mxu0 0.0
    %928 = vmatpush1.msra.mxu0 0.0
    %929 = vmatprep.subr.mxu0 0.0
    %930 = vmatpush1.msra.mxu0 0.0
    %931 = vmatprep.subr.mxu0 0.0
    %932 = vmatpush1.msra.mxu0 0.0
    %933 = vmatprep.subr.mxu0 0.0
    %934 = vmatpush1.msra.mxu0 0.0
    %935 = vmatprep.subr.mxu0 0.0
    %936 = vmatpush1.msra.mxu0 0.0
    %937 = vmatprep.subr.mxu0 0.0
    %938 = vmatpush1.msra.mxu0 0.0
    %939 = vmatprep.subr.mxu0 0.0
    %940 = vmatpush1.msra.mxu0 0.0
    %941 = vmatprep.subr.mxu0 0.0
    %942 = vmatpush1.msra.mxu0 0.0
    %943 = vmatprep.subr.mxu0 0.0
    %944 = vmatpush1.msra.mxu0 0.0
    %945 = vmatprep.subr.mxu0 0.0
    %946 = vmatpush1.msra.mxu0 0.0
    %947 = vmatprep.subr.mxu0 0.0
    %948 = vmatpush1.msra.mxu0 0.0
    %949 = vmatprep.subr.mxu0 %v701
    %950 = vmatpush1.msra.mxu0 %v700
    %951 = vmatprep.subr.mxu0 %v697
    %952 = vmatpush1.msra.mxu0 %v696
    %953 = vmatprep.subr.mxu0 %v693
    %954 = vmatpush1.msra.mxu0 %v692
    %955 = vmatprep.subr.mxu0 0.0
    %956 = vmatpush2.msra.mxu0 0.0
    %957 = vmatprep.subr.mxu0 0.0
    %958 = vmatpush2.msra.mxu0 0.0
    %959 = vmatprep.subr.mxu0 0.0
    %960 = vmatpush2.msra.mxu0 0.0
    %961 = vmatprep.subr.mxu0 0.0
    %962 = vmatpush2.msra.mxu0 0.0
    %963 = vmatprep.subr.mxu0 0.0
    %964 = vmatpush2.msra.mxu0 0.0
    %965 = vmatprep.subr.mxu0 0.0
    %966 = vmatpush2.msra.mxu0 0.0
    %967 = vmatprep.subr.mxu0 0.0
    %968 = vmatpush2.msra.mxu0 0.0
    %969 = vmatprep.subr.mxu0 0.0
    %970 = vmatpush2.msra.mxu0 0.0
    %971 = vmatprep.subr.mxu0 0.0
    %972 = vmatpush2.msra.mxu0 0.0
    %973 = vmatprep.subr.mxu0 0.0
    %974 = vmatpush2.msra.mxu0 0.0
    %975 = vmatprep.subr.mxu0 0.0
    %976 = vmatpush2.msra.mxu0 0.0
    %977 = vmatprep.subr.mxu0 0.0
    %978 = vmatpush2.msra.mxu0 0.0
    %979 = vmatprep.subr.mxu0 0.0
    %980 = vmatpush2.msra.mxu0 0.0
    %981 = vmatprep.subr.mxu0 0.0
    %982 = vmatpush2.msra.mxu0 0.0
    %983 = vmatprep.subr.mxu0 0.0
    %984 = vmatpush2.msra.mxu0 0.0
    %985 = vmatprep.subr.mxu0 0.0
    %986 = vmatpush2.msra.mxu0 0.0
    %987 = vmatprep.mubr.f32.mxu0 0.0
    %988 = vmatmul.mubr.f32.gmra.mxu0 %v921
    %v989 = vpop.f32.mrf.mxu0
    %v990 = vadd.f32 0.0, %v989
    %v991 = vpop.f32.mrf.mxu0
    %v992 = vadd.f32 0.0, %v991
    %993 = vdwg.mxu0
    %994 = vmatprep.subr.mxu0 0.0
    %995 = vmatpush1.msra.mxu0 0.0
    %996 = vmatprep.subr.mxu0 0.0
    %997 = vmatpush1.msra.mxu0 0.0
    %998 = vmatprep.subr.mxu0 0.0
    %999 = vmatpush1.msra.mxu0 0.0
    %1000 = vmatprep.subr.mxu0 0.0
    %1001 = vmatpush1.msra.mxu0 0.0
    %1002 = vmatprep.subr.mxu0 0.0
    %1003 = vmatpush1.msra.mxu0 0.0
    %1004 = vmatprep.subr.mxu0 0.0
    %1005 = vmatpush1.msra.mxu0 0.0
    %1006 = vmatprep.subr.mxu0 0.0
    %1007 = vmatpush1.msra.mxu0 0.0
    %1008 = vmatprep.subr.mxu0 0.0
    %1009 = vmatpush1.msra.mxu0 0.0
    %1010 = vmatprep.subr.mxu0 0.0
    %1011 = vmatpush1.msra.mxu0 0.0
    %1012 = vmatprep.subr.mxu0 0.0
    %1013 = vmatpush1.msra.mxu0 0.0
    %1014 = vmatprep.subr.mxu0 0.0
    %1015 = vmatpush1.msra.mxu0 0.0
    %1016 = vmatprep.subr.mxu0 0.0
    %1017 = vmatpush1.msra.mxu0 0.0
    %1018 = vmatprep.subr.mxu0 0.0
    %1019 = vmatpush1.msra.mxu0 0.0
    %1020 = vmatprep.subr.mxu0 %v703
    %1021 = vmatpush1.msra.mxu0 %v702
    %1022 = vmatprep.subr.mxu0 %v699
    %1023 = vmatpush1.msra.mxu0 %v698
    %1024 = vmatprep.subr.mxu0 %v695
    %1025 = vmatpush1.msra.mxu0 %v694
    %1026 = vmatprep.subr.mxu0 0.0
    %1027 = vmatpush2.msra.mxu0 0.0
    %1028 = vmatprep.subr.mxu0 0.0
    %1029 = vmatpush2.msra.mxu0 0.0
    %1030 = vmatprep.subr.mxu0 0.0
    %1031 = vmatpush2.msra.mxu0 0.0
    %1032 = vmatprep.subr.mxu0 0.0
    %1033 = vmatpush2.msra.mxu0 0.0
    %1034 = vmatprep.subr.mxu0 0.0
    %1035 = vmatpush2.msra.mxu0 0.0
    %1036 = vmatprep.subr.mxu0 0.0
    %1037 = vmatpush2.msra.mxu0 0.0
    %1038 = vmatprep.subr.mxu0 0.0
    %1039 = vmatpush2.msra.mxu0 0.0
    %1040 = vmatprep.subr.mxu0 0.0
    %1041 = vmatpush2.msra.mxu0 0.0
    %1042 = vmatprep.subr.mxu0 0.0
    %1043 = vmatpush2.msra.mxu0 0.0
    %1044 = vmatprep.subr.mxu0 0.0
    %1045 = vmatpush2.msra.mxu0 0.0
    %1046 = vmatprep.subr.mxu0 0.0
    %1047 = vmatpush2.msra.mxu0 0.0
    %1048 = vmatprep.subr.mxu0 0.0
    %1049 = vmatpush2.msra.mxu0 0.0
    %1050 = vmatprep.subr.mxu0 0.0
    %1051 = vmatpush2.msra.mxu0 0.0
    %1052 = vmatprep.subr.mxu0 0.0
    %1053 = vmatpush2.msra.mxu0 0.0
    %1054 = vmatprep.subr.mxu0 0.0
    %1055 = vmatpush2.msra.mxu0 0.0
    %1056 = vmatprep.subr.mxu0 0.0
    %1057 = vmatpush2.msra.mxu0 0.0
    %1058 = vmatprep.mubr.f32.mxu0 0.0
    %1059 = vmatmul.mubr.f32.gmra.mxu0 %v921
    %v1060 = vpop.f32.mrf.mxu0
    %v1061 = vadd.f32 0.0, %v1060
    %v1062 = vpop.f32.mrf.mxu0
    %v1063 = vadd.f32 0.0, %v1062
    %1064 = vdwg.mxu0
    %v1065 = vadd.f32 %v916, %v990
    %v1066 = vadd.f32 %v917, %v992
    %v1067 = vadd.f32 %v918, %v1061
    %v1068 = vadd.f32 %v919, %v1063
    %v1069 = vxor.u32 %v1065, 2147483648
    %v1070 = vmul.f32 %v1069, 1.442695
    %v1071 = vpow.pop %v1070
    %v1072 = vadd.f32 %v1071, 1.0
    %v1073 = vrcp.pop %v1072
    %v1074 = vmul.f32 1.0, %v1073
    %v1075 = vxor.u32 %v1066, 2147483648
    %v1076 = vmul.f32 %v1075, 1.442695
    %v1077 = vpow.pop %v1076
    %v1078 = vadd.f32 %v1077, 1.0
    %v1079 = vrcp.pop %v1078
    %v1080 = vmul.f32 1.0, %v1079
    %v1081 = vtanh.pop %v1067
    %v1082 = vxor.u32 %v1068, 2147483648
    %v1083 = vmul.f32 %v1082, 1.442695
    %v1084 = vpow.pop %v1083
    %v1085 = vadd.f32 %v1084, 1.0
    %v1086 = vrcp.pop %v1085
    %v1087 = vmul.f32 1.0, %v1086
    %v1088 = vmul.f32 %v1080, %v898
    %v1089 = vmul.f32 %v1074, %v1081
    %v1090 = vadd.f32 %v1088, %v1089
    %v1091 = vtanh.pop %v1090
    %v1092 = vmul.f32 %v1087, %v1091
    %s1093 = scalar_lea.vmem %s1, 8
    %v1094 = vld [vmem:[%s1093] sm:$0xff]
    %v1095 = vmul.f32 %v1092, %v1094
    %v1096 = vmul.f32 %v1090, %v1094
    %s1097 = scalar_lea.vmem [#allocation3], 8
    %1098 = vst.msk [vmem:[%s1097] sm:$0xff] %vm722, %v1095
    %s1099 = scalar_lea.vmem [#allocation4], 48
    %1100 = vst.msk [vmem:[%s1099] sm:$0xff] %vm722, %v1095
    %s1101 = smul.u32 2, 8
    %s1102 = smul.addr %s1101, 8
    %s1103 = scalar_lea.vmem [#allocation2], %s1102
    %v1104 = vld [vmem:[%s1103] sm:$0xff]
    %v1105 = vld [vmem:[%s1103 + $0x8] sm:$0xff]
    %v1106 = vld [vmem:[%s1103 + $0x10] sm:$0xff]
    %v1107 = vld [vmem:[%s1103 + $0x18] sm:$0xff]
    %s1108 = smul.u32 5, 8
    %s1109 = smul.addr %s1108, 8
    %s1110 = scalar_lea.vmem [#allocation2], %s1109
    %v1111 = vld [vmem:[%s1110 + $0x20] sm:$0xff]
    %v1112 = vld [vmem:[%s1110 + $0x28] sm:$0xff]
    %v1113 = vld [vmem:[%s1110 + $0x30] sm:$0xff]
    %v1114 = vld [vmem:[%s1110 + $0x38] sm:$0xff]
    %v1115 = vadd.f32 %v1104, %v1111
    %v1116 = vadd.f32 %v1105, %v1112
    %v1117 = vadd.f32 %v1106, %v1113
    %v1118 = vadd.f32 %v1107, %v1114
    %v1120 = vsel %vm722, %v1095, 0
    %1122 = vmatprep.subr.mxu0 0.0
    %1123 = vmatpush1.msra.mxu0 0.0
    %1124 = vmatprep.subr.mxu0 0.0
    %1125 = vmatpush1.msra.mxu0 0.0
    %1126 = vmatprep.subr.mxu0 0.0
    %1127 = vmatpush1.msra.mxu0 0.0
    %1128 = vmatprep.subr.mxu0 0.0
    %1129 = vmatpush1.msra.mxu0 0.0
    %1130 = vmatprep.subr.mxu0 0.0
    %1131 = vmatpush1.msra.mxu0 0.0
    %1132 = vmatprep.subr.mxu0 0.0
    %1133 = vmatpush1.msra.mxu0 0.0
    %1134 = vmatprep.subr.mxu0 0.0
    %1135 = vmatpush1.msra.mxu0 0.0
    %1136 = vmatprep.subr.mxu0 0.0
    %1137 = vmatpush1.msra.mxu0 0.0
    %1138 = vmatprep.subr.mxu0 0.0
    %1139 = vmatpush1.msra.mxu0 0.0
    %1140 = vmatprep.subr.mxu0 0.0
    %1141 = vmatpush1.msra.mxu0 0.0
    %1142 = vmatprep.subr.mxu0 0.0
    %1143 = vmatpush1.msra.mxu0 0.0
    %1144 = vmatprep.subr.mxu0 0.0
    %1145 = vmatpush1.msra.mxu0 0.0
    %1146 = vmatprep.subr.mxu0 0.0
    %1147 = vmatpush1.msra.mxu0 0.0
    %1148 = vmatprep.subr.mxu0 %v701
    %1149 = vmatpush1.msra.mxu0 %v700
    %1150 = vmatprep.subr.mxu0 %v697
    %1151 = vmatpush1.msra.mxu0 %v696
    %1152 = vmatprep.subr.mxu0 %v693
    %1153 = vmatpush1.msra.mxu0 %v692
    %1154 = vmatprep.subr.mxu0 0.0
    %1155 = vmatpush2.msra.mxu0 0.0
    %1156 = vmatprep.subr.mxu0 0.0
    %1157 = vmatpush2.msra.mxu0 0.0
    %1158 = vmatprep.subr.mxu0 0.0
    %1159 = vmatpush2.msra.mxu0 0.0
    %1160 = vmatprep.subr.mxu0 0.0
    %1161 = vmatpush2.msra.mxu0 0.0
    %1162 = vmatprep.subr.mxu0 0.0
    %1163 = vmatpush2.msra.mxu0 0.0
    %1164 = vmatprep.subr.mxu0 0.0
    %1165 = vmatpush2.msra.mxu0 0.0
    %1166 = vmatprep.subr.mxu0 0.0
    %1167 = vmatpush2.msra.mxu0 0.0
    %1168 = vmatprep.subr.mxu0 0.0
    %1169 = vmatpush2.msra.mxu0 0.0
    %1170 = vmatprep.subr.mxu0 0.0
    %1171 = vmatpush2.msra.mxu0 0.0
    %1172 = vmatprep.subr.mxu0 0.0
    %1173 = vmatpush2.msra.mxu0 0.0
    %1174 = vmatprep.subr.mxu0 0.0
    %1175 = vmatpush2.msra.mxu0 0.0
    %1176 = vmatprep.subr.mxu0 0.0
    %1177 = vmatpush2.msra.mxu0 0.0
    %1178 = vmatprep.subr.mxu0 0.0
    %1179 = vmatpush2.msra.mxu0 0.0
    %1180 = vmatprep.subr.mxu0 0.0
    %1181 = vmatpush2.msra.mxu0 0.0
    %1182 = vmatprep.subr.mxu0 0.0
    %1183 = vmatpush2.msra.mxu0 0.0
    %1184 = vmatprep.subr.mxu0 0.0
    %1185 = vmatpush2.msra.mxu0 0.0
    %1186 = vmatprep.mubr.f32.mxu0 0.0
    %1187 = vmatmul.mubr.f32.gmra.mxu0 %v1120
    %v1188 = vpop.f32.mrf.mxu0
    %v1189 = vadd.f32 0.0, %v1188
    %v1190 = vpop.f32.mrf.mxu0
    %v1191 = vadd.f32 0.0, %v1190
    %1192 = vdwg.mxu0
    %1193 = vmatprep.subr.mxu0 0.0
    %1194 = vmatpush1.msra.mxu0 0.0
    %1195 = vmatprep.subr.mxu0 0.0
    %1196 = vmatpush1.msra.mxu0 0.0
    %1197 = vmatprep.subr.mxu0 0.0
    %1198 = vmatpush1.msra.mxu0 0.0
    %1199 = vmatprep.subr.mxu0 0.0
    %1200 = vmatpush1.msra.mxu0 0.0
    %1201 = vmatprep.subr.mxu0 0.0
    %1202 = vmatpush1.msra.mxu0 0.0
    %1203 = vmatprep.subr.mxu0 0.0
    %1204 = vmatpush1.msra.mxu0 0.0
    %1205 = vmatprep.subr.mxu0 0.0
    %1206 = vmatpush1.msra.mxu0 0.0
    %1207 = vmatprep.subr.mxu0 0.0
    %1208 = vmatpush1.msra.mxu0 0.0
    %1209 = vmatprep.subr.mxu0 0.0
    %1210 = vmatpush1.msra.mxu0 0.0
    %1211 = vmatprep.subr.mxu0 0.0
    %1212 = vmatpush1.msra.mxu0 0.0
    %1213 = vmatprep.subr.mxu0 0.0
    %1214 = vmatpush1.msra.mxu0 0.0
    %1215 = vmatprep.subr.mxu0 0.0
    %1216 = vmatpush1.msra.mxu0 0.0
    %1217 = vmatprep.subr.mxu0 0.0
    %1218 = vmatpush1.msra.mxu0 0.0
    %1219 = vmatprep.subr.mxu0 %v703
    %1220 = vmatpush1.msra.mxu0 %v702
    %1221 = vmatprep.subr.mxu0 %v699
    %1222 = vmatpush1.msra.mxu0 %v698
    %1223 = vmatprep.subr.mxu0 %v695
    %1224 = vmatpush1.msra.mxu0 %v694
    %1225 = vmatprep.subr.mxu0 0.0
    %1226 = vmatpush2.msra.mxu0 0.0
    %1227 = vmatprep.subr.mxu0 0.0
    %1228 = vmatpush2.msra.mxu0 0.0
    %1229 = vmatprep.subr.mxu0 0.0
    %1230 = vmatpush2.msra.mxu0 0.0
    %1231 = vmatprep.subr.mxu0 0.0
    %1232 = vmatpush2.msra.mxu0 0.0
    %1233 = vmatprep.subr.mxu0 0.0
    %1234 = vmatpush2.msra.mxu0 0.0
    %1235 = vmatprep.subr.mxu0 0.0
    %1236 = vmatpush2.msra.mxu0 0.0
    %1237 = vmatprep.subr.mxu0 0.0
    %1238 = vmatpush2.msra.mxu0 0.0
    %1239 = vmatprep.subr.mxu0 0.0
    %1240 = vmatpush2.msra.mxu0 0.0
    %1241 = vmatprep.subr.mxu0 0.0
    %1242 = vmatpush2.msra.mxu0 0.0
    %1243 = vmatprep.subr.mxu0 0.0
    %1244 = vmatpush2.msra.mxu0 0.0
    %1245 = vmatprep.subr.mxu0 0.0
    %1246 = vmatpush2.msra.mxu0 0.0
    %1247 = vmatprep.subr.mxu0 0.0
    %1248 = vmatpush2.msra.mxu0 0.0
    %1249 = vmatprep.subr.mxu0 0.0
    %1250 = vmatpush2.msra.mxu0 0.0
    %1251 = vmatprep.subr.mxu0 0.0
    %1252 = vmatpush2.msra.mxu0 0.0
    %1253 = vmatprep.subr.mxu0 0.0
    %1254 = vmatpush2.msra.mxu0 0.0
    %1255 = vmatprep.subr.mxu0 0.0
    %1256 = vmatpush2.msra.mxu0 0.0
    %1257 = vmatprep.mubr.f32.mxu0 0.0
    %1258 = vmatmul.mubr.f32.gmra.mxu0 %v1120
    %v1259 = vpop.f32.mrf.mxu0
    %v1260 = vadd.f32 0.0, %v1259
    %v1261 = vpop.f32.mrf.mxu0
    %v1262 = vadd.f32 0.0, %v1261
    %1263 = vdwg.mxu0
    %v1264 = vadd.f32 %v1115, %v1189
    %v1265 = vadd.f32 %v1116, %v1191
    %v1266 = vadd.f32 %v1117, %v1260
    %v1267 = vadd.f32 %v1118, %v1262
    %v1268 = vxor.u32 %v1264, 2147483648
    %v1269 = vmul.f32 %v1268, 1.442695
    %v1270 = vpow.pop %v1269
    %v1271 = vadd.f32 %v1270, 1.0
    %v1272 = vrcp.pop %v1271
    %v1273 = vmul.f32 1.0, %v1272
    %v1274 = vxor.u32 %v1265, 2147483648
    %v1275 = vmul.f32 %v1274, 1.442695
    %v1276 = vpow.pop %v1275
    %v1277 = vadd.f32 %v1276, 1.0
    %v1278 = vrcp.pop %v1277
    %v1279 = vmul.f32 1.0, %v1278
    %v1280 = vtanh.pop %v1266
    %v1281 = vxor.u32 %v1267, 2147483648
    %v1282 = vmul.f32 %v1281, 1.442695
    %v1283 = vpow.pop %v1282
    %v1284 = vadd.f32 %v1283, 1.0
    %v1285 = vrcp.pop %v1284
    %v1286 = vmul.f32 1.0, %v1285
    %v1287 = vmul.f32 %v1279, %v1096
    %v1288 = vmul.f32 %v1273, %v1280
    %v1289 = vadd.f32 %v1287, %v1288
    %v1290 = vtanh.pop %v1289
    %v1291 = vmul.f32 %v1286, %v1290
    %s1292 = scalar_lea.vmem %s1, 16
    %v1293 = vld [vmem:[%s1292] sm:$0xff]
    %v1294 = vmul.f32 %v1291, %v1293
    %v1295 = vmul.f32 %v1289, %v1293
    %s1296 = scalar_lea.vmem [#allocation3], 16
    %1297 = vst.msk [vmem:[%s1296] sm:$0xff] %vm722, %v1294
    %s1298 = scalar_lea.vmem [#allocation4], 40
    %1299 = vst.msk [vmem:[%s1298] sm:$0xff] %vm722, %v1294
    %s1300 = smul.u32 3, 8
    %s1301 = smul.addr %s1300, 8
    %s1302 = scalar_lea.vmem [#allocation2], %s1301
    %v1303 = vld [vmem:[%s1302] sm:$0xff]
    %v1304 = vld [vmem:[%s1302 + $0x8] sm:$0xff]
    %v1305 = vld [vmem:[%s1302 + $0x10] sm:$0xff]
    %v1306 = vld [vmem:[%s1302 + $0x18] sm:$0xff]
    %s1307 = smul.u32 4, 8
    %s1308 = smul.addr %s1307, 8
    %s1309 = scalar_lea.vmem [#allocation2], %s1308
    %v1310 = vld [vmem:[%s1309 + $0x20] sm:$0xff]
    %v1311 = vld [vmem:[%s1309 + $0x28] sm:$0xff]
    %v1312 = vld [vmem:[%s1309 + $0x30] sm:$0xff]
    %v1313 = vld [vmem:[%s1309 + $0x38] sm:$0xff]
    %v1314 = vadd.f32 %v1303, %v1310
    %v1315 = vadd.f32 %v1304, %v1311
    %v1316 = vadd.f32 %v1305, %v1312
    %v1317 = vadd.f32 %v1306, %v1313
    %v1319 = vsel %vm722, %v1294, 0
    %1321 = vmatprep.subr.mxu0 0.0
    %1322 = vmatpush1.msra.mxu0 0.0
    %1323 = vmatprep.subr.mxu0 0.0
    %1324 = vmatpush1.msra.mxu0 0.0
    %1325 = vmatprep.subr.mxu0 0.0
    %1326 = vmatpush1.msra.mxu0 0.0
    %1327 = vmatprep.subr.mxu0 0.0
    %1328 = vmatpush1.msra.mxu0 0.0
    %1329 = vmatprep.subr.mxu0 0.0
    %1330 = vmatpush1.msra.mxu0 0.0
    %1331 = vmatprep.subr.mxu0 0.0
    %1332 = vmatpush1.msra.mxu0 0.0
    %1333 = vmatprep.subr.mxu0 0.0
    %1334 = vmatpush1.msra.mxu0 0.0
    %1335 = vmatprep.subr.mxu0 0.0
    %1336 = vmatpush1.msra.mxu0 0.0
    %1337 = vmatprep.subr.mxu0 0.0
    %1338 = vmatpush1.msra.mxu0 0.0
    %1339 = vmatprep.subr.mxu0 0.0
    %1340 = vmatpush1.msra.mxu0 0.0
    %1341 = vmatprep.subr.mxu0 0.0
    %1342 = vmatpush1.msra.mxu0 0.0
    %1343 = vmatprep.subr.mxu0 0.0
    %1344 = vmatpush1.msra.mxu0 0.0
    %1345 = vmatprep.subr.mxu0 0.0
    %1346 = vmatpush1.msra.mxu0 0.0
    %1347 = vmatprep.subr.mxu0 %v701
    %1348 = vmatpush1.msra.mxu0 %v700
    %1349 = vmatprep.subr.mxu0 %v697
    %1350 = vmatpush1.msra.mxu0 %v696
    %1351 = vmatprep.subr.mxu0 %v693
    %1352 = vmatpush1.msra.mxu0 %v692
    %1353 = vmatprep.subr.mxu0 0.0
    %1354 = vmatpush2.msra.mxu0 0.0
    %1355 = vmatprep.subr.mxu0 0.0
    %1356 = vmatpush2.msra.mxu0 0.0
    %1357 = vmatprep.subr.mxu0 0.0
    %1358 = vmatpush2.msra.mxu0 0.0
    %1359 = vmatprep.subr.mxu0 0.0
    %1360 = vmatpush2.msra.mxu0 0.0
    %1361 = vmatprep.subr.mxu0 0.0
    %1362 = vmatpush2.msra.mxu0 0.0
    %1363 = vmatprep.subr.mxu0 0.0
    %1364 = vmatpush2.msra.mxu0 0.0
    %1365 = vmatprep.subr.mxu0 0.0
    %1366 = vmatpush2.msra.mxu0 0.0
    %1367 = vmatprep.subr.mxu0 0.0
    %1368 = vmatpush2.msra.mxu0 0.0
    %1369 = vmatprep.subr.mxu0 0.0
    %1370 = vmatpush2.msra.mxu0 0.0
    %1371 = vmatprep.subr.mxu0 0.0
    %1372 = vmatpush2.msra.mxu0 0.0
    %1373 = vmatprep.subr.mxu0 0.0
    %1374 = vmatpush2.msra.mxu0 0.0
    %1375 = vmatprep.subr.mxu0 0.0
    %1376 = vmatpush2.msra.mxu0 0.0
    %1377 = vmatprep.subr.mxu0 0.0
    %1378 = vmatpush2.msra.mxu0 0.0
    %1379 = vmatprep.subr.mxu0 0.0
    %1380 = vmatpush2.msra.mxu0 0.0
    %1381 = vmatprep.subr.mxu0 0.0
    %1382 = vmatpush2.msra.mxu0 0.0
    %1383 = vmatprep.subr.mxu0 0.0
    %1384 = vmatpush2.msra.mxu0 0.0
    %1385 = vmatprep.mubr.f32.mxu0 0.0
    %1386 = vmatmul.mubr.f32.gmra.mxu0 %v1319
    %v1387 = vpop.f32.mrf.mxu0
    %v1388 = vadd.f32 0.0, %v1387
    %v1389 = vpop.f32.mrf.mxu0
    %v1390 = vadd.f32 0.0, %v1389
    %1391 = vdwg.mxu0
    %1392 = vmatprep.subr.mxu0 0.0
    %1393 = vmatpush1.msra.mxu0 0.0
    %1394 = vmatprep.subr.mxu0 0.0
    %1395 = vmatpush1.msra.mxu0 0.0
    %1396 = vmatprep.subr.mxu0 0.0
    %1397 = vmatpush1.msra.mxu0 0.0
    %1398 = vmatprep.subr.mxu0 0.0
    %1399 = vmatpush1.msra.mxu0 0.0
    %1400 = vmatprep.subr.mxu0 0.0
    %1401 = vmatpush1.msra.mxu0 0.0
    %1402 = vmatprep.subr.mxu0 0.0
    %1403 = vmatpush1.msra.mxu0 0.0
    %1404 = vmatprep.subr.mxu0 0.0
    %1405 = vmatpush1.msra.mxu0 0.0
    %1406 = vmatprep.subr.mxu0 0.0
    %1407 = vmatpush1.msra.mxu0 0.0
    %1408 = vmatprep.subr.mxu0 0.0
    %1409 = vmatpush1.msra.mxu0 0.0
    %1410 = vmatprep.subr.mxu0 0.0
    %1411 = vmatpush1.msra.mxu0 0.0
    %1412 = vmatprep.subr.mxu0 0.0
    %1413 = vmatpush1.msra.mxu0 0.0
    %1414 = vmatprep.subr.mxu0 0.0
    %1415 = vmatpush1.msra.mxu0 0.0
    %1416 = vmatprep.subr.mxu0 0.0
    %1417 = vmatpush1.msra.mxu0 0.0
    %1418 = vmatprep.subr.mxu0 %v703
    %1419 = vmatpush1.msra.mxu0 %v702
    %1420 = vmatprep.subr.mxu0 %v699
    %1421 = vmatpush1.msra.mxu0 %v698
    %1422 = vmatprep.subr.mxu0 %v695
    %1423 = vmatpush1.msra.mxu0 %v694
    %1424 = vmatprep.subr.mxu0 0.0
    %1425 = vmatpush2.msra.mxu0 0.0
    %1426 = vmatprep.subr.mxu0 0.0
    %1427 = vmatpush2.msra.mxu0 0.0
    %1428 = vmatprep.subr.mxu0 0.0
    %1429 = vmatpush2.msra.mxu0 0.0
    %1430 = vmatprep.subr.mxu0 0.0
    %1431 = vmatpush2.msra.mxu0 0.0
    %1432 = vmatprep.subr.mxu0 0.0
    %1433 = vmatpush2.msra.mxu0 0.0
    %1434 = vmatprep.subr.mxu0 0.0
    %1435 = vmatpush2.msra.mxu0 0.0
    %1436 = vmatprep.subr.mxu0 0.0
    %1437 = vmatpush2.msra.mxu0 0.0
    %1438 = vmatprep.subr.mxu0 0.0
    %1439 = vmatpush2.msra.mxu0 0.0
    %1440 = vmatprep.subr.mxu0 0.0
    %1441 = vmatpush2.msra.mxu0 0.0
    %1442 = vmatprep.subr.mxu0 0.0
    %1443 = vmatpush2.msra.mxu0 0.0
    %1444 = vmatprep.subr.mxu0 0.0
    %1445 = vmatpush2.msra.mxu0 0.0
    %1446 = vmatprep.subr.mxu0 0.0
    %1447 = vmatpush2.msra.mxu0 0.0
    %1448 = vmatprep.subr.mxu0 0.0
    %1449 = vmatpush2.msra.mxu0 0.0
    %1450 = vmatprep.subr.mxu0 0.0
    %1451 = vmatpush2.msra.mxu0 0.0
    %1452 = vmatprep.subr.mxu0 0.0
    %1453 = vmatpush2.msra.mxu0 0.0
    %1454 = vmatprep.subr.mxu0 0.0
    %1455 = vmatpush2.msra.mxu0 0.0
    %1456 = vmatprep.mubr.f32.mxu0 0.0
    %1457 = vmatmul.mubr.f32.gmra.mxu0 %v1319
    %v1458 = vpop.f32.mrf.mxu0
    %v1459 = vadd.f32 0.0, %v1458
    %v1460 = vpop.f32.mrf.mxu0
    %v1461 = vadd.f32 0.0, %v1460
    %1462 = vdwg.mxu0
    %v1463 = vadd.f32 %v1314, %v1388
    %v1464 = vadd.f32 %v1315, %v1390
    %v1465 = vadd.f32 %v1316, %v1459
    %v1466 = vadd.f32 %v1317, %v1461
    %v1467 = vxor.u32 %v1463, 2147483648
    %v1468 = vmul.f32 %v1467, 1.442695
    %v1469 = vpow.pop %v1468
    %v1470 = vadd.f32 %v1469, 1.0
    %v1471 = vrcp.pop %v1470
    %v1472 = vmul.f32 1.0, %v1471
    %v1473 = vxor.u32 %v1464, 2147483648
    %v1474 = vmul.f32 %v1473, 1.442695
    %v1475 = vpow.pop %v1474
    %v1476 = vadd.f32 %v1475, 1.0
    %v1477 = vrcp.pop %v1476
    %v1478 = vmul.f32 1.0, %v1477
    %v1479 = vtanh.pop %v1465
    %v1480 = vxor.u32 %v1466, 2147483648
    %v1481 = vmul.f32 %v1480, 1.442695
    %v1482 = vpow.pop %v1481
    %v1483 = vadd.f32 %v1482, 1.0
    %v1484 = vrcp.pop %v1483
    %v1485 = vmul.f32 1.0, %v1484
    %v1486 = vmul.f32 %v1478, %v1295
    %v1487 = vmul.f32 %v1472, %v1479
    %v1488 = vadd.f32 %v1486, %v1487
    %v1489 = vtanh.pop %v1488
    %v1490 = vmul.f32 %v1485, %v1489
    %s1491 = scalar_lea.vmem %s1, 24
    %v1492 = vld [vmem:[%s1491] sm:$0xff]
    %v1493 = vmul.f32 %v1490, %v1492
    %v1494 = vmul.f32 %v1488, %v1492
    %s1495 = scalar_lea.vmem [#allocation3], 24
    %1496 = vst.msk [vmem:[%s1495] sm:$0xff] %vm722, %v1493
    %s1497 = scalar_lea.vmem [#allocation4], 32
    %1498 = vst.msk [vmem:[%s1497] sm:$0xff] %vm722, %v1493
    %v1499 = vld [vmem:[%s1309] sm:$0xff]
    %v1500 = vld [vmem:[%s1309 + $0x8] sm:$0xff]
    %v1501 = vld [vmem:[%s1309 + $0x10] sm:$0xff]
    %v1502 = vld [vmem:[%s1309 + $0x18] sm:$0xff]
    %v1503 = vld [vmem:[%s1302 + $0x20] sm:$0xff]
    %v1504 = vld [vmem:[%s1302 + $0x28] sm:$0xff]
    %v1505 = vld [vmem:[%s1302 + $0x30] sm:$0xff]
    %v1506 = vld [vmem:[%s1302 + $0x38] sm:$0xff]
    %v1507 = vadd.f32 %v1499, %v1503
    %v1508 = vadd.f32 %v1500, %v1504
    %v1509 = vadd.f32 %v1501, %v1505
    %v1510 = vadd.f32 %v1502, %v1506
    %v1512 = vsel %vm722, %v1493, 0
    %1514 = vmatprep.subr.mxu0 0.0
    %1515 = vmatpush1.msra.mxu0 0.0
    %1516 = vmatprep.subr.mxu0 0.0
    %1517 = vmatpush1.msra.mxu0 0.0
    %1518 = vmatprep.subr.mxu0 0.0
    %1519 = vmatpush1.msra.mxu0 0.0
    %1520 = vmatprep.subr.mxu0 0.0
    %1521 = vmatpush1.msra.mxu0 0.0
    %1522 = vmatprep.subr.mxu0 0.0
    %1523 = vmatpush1.msra.mxu0 0.0
    %1524 = vmatprep.subr.mxu0 0.0
    %1525 = vmatpush1.msra.mxu0 0.0
    %1526 = vmatprep.subr.mxu0 0.0
    %1527 = vmatpush1.msra.mxu0 0.0
    %1528 = vmatprep.subr.mxu0 0.0
    %1529 = vmatpush1.msra.mxu0 0.0
    %1530 = vmatprep.subr.mxu0 0.0
    %1531 = vmatpush1.msra.mxu0 0.0
    %1532 = vmatprep.subr.mxu0 0.0
    %1533 = vmatpush1.msra.mxu0 0.0
    %1534 = vmatprep.subr.mxu0 0.0
    %1535 = vmatpush1.msra.mxu0 0.0
    %1536 = vmatprep.subr.mxu0 0.0
    %1537 = vmatpush1.msra.mxu0 0.0
    %1538 = vmatprep.subr.mxu0 0.0
    %1539 = vmatpush1.msra.mxu0 0.0
    %1540 = vmatprep.subr.mxu0 %v701
    %1541 = vmatpush1.msra.mxu0 %v700
    %1542 = vmatprep.subr.mxu0 %v697
    %1543 = vmatpush1.msra.mxu0 %v696
    %1544 = vmatprep.subr.mxu0 %v693
    %1545 = vmatpush1.msra.mxu0 %v692
    %1546 = vmatprep.subr.mxu0 0.0
    %1547 = vmatpush2.msra.mxu0 0.0
    %1548 = vmatprep.subr.mxu0 0.0
    %1549 = vmatpush2.msra.mxu0 0.0
    %1550 = vmatprep.subr.mxu0 0.0
    %1551 = vmatpush2.msra.mxu0 0.0
    %1552 = vmatprep.subr.mxu0 0.0
    %1553 = vmatpush2.msra.mxu0 0.0
    %1554 = vmatprep.subr.mxu0 0.0
    %1555 = vmatpush2.msra.mxu0 0.0
    %1556 = vmatprep.subr.mxu0 0.0
    %1557 = vmatpush2.msra.mxu0 0.0
    %1558 = vmatprep.subr.mxu0 0.0
    %1559 = vmatpush2.msra.mxu0 0.0
    %1560 = vmatprep.subr.mxu0 0.0
    %1561 = vmatpush2.msra.mxu0 0.0
    %1562 = vmatprep.subr.mxu0 0.0
    %1563 = vmatpush2.msra.mxu0 0.0
    %1564 = vmatprep.subr.mxu0 0.0
    %1565 = vmatpush2.msra.mxu0 0.0
    %1566 = vmatprep.subr.mxu0 0.0
    %1567 = vmatpush2.msra.mxu0 0.0
    %1568 = vmatprep.subr.mxu0 0.0
    %1569 = vmatpush2.msra.mxu0 0.0
    %1570 = vmatprep.subr.mxu0 0.0
    %1571 = vmatpush2.msra.mxu0 0.0
    %1572 = vmatprep.subr.mxu0 0.0
    %1573 = vmatpush2.msra.mxu0 0.0
    %1574 = vmatprep.subr.mxu0 0.0
    %1575 = vmatpush2.msra.mxu0 0.0
    %1576 = vmatprep.subr.mxu0 0.0
    %1577 = vmatpush2.msra.mxu0 0.0
    %1578 = vmatprep.mubr.f32.mxu0 0.0
    %1579 = vmatmul.mubr.f32.gmra.mxu0 %v1512
    %v1580 = vpop.f32.mrf.mxu0
    %v1581 = vadd.f32 0.0, %v1580
    %v1582 = vpop.f32.mrf.mxu0
    %v1583 = vadd.f32 0.0, %v1582
    %1584 = vdwg.mxu0
    %1585 = vmatprep.subr.mxu0 0.0
    %1586 = vmatpush1.msra.mxu0 0.0
    %1587 = vmatprep.subr.mxu0 0.0
    %1588 = vmatpush1.msra.mxu0 0.0
    %1589 = vmatprep.subr.mxu0 0.0
    %1590 = vmatpush1.msra.mxu0 0.0
    %1591 = vmatprep.subr.mxu0 0.0
    %1592 = vmatpush1.msra.mxu0 0.0
    %1593 = vmatprep.subr.mxu0 0.0
    %1594 = vmatpush1.msra.mxu0 0.0
    %1595 = vmatprep.subr.mxu0 0.0
    %1596 = vmatpush1.msra.mxu0 0.0
    %1597 = vmatprep.subr.mxu0 0.0
    %1598 = vmatpush1.msra.mxu0 0.0
    %1599 = vmatprep.subr.mxu0 0.0
    %1600 = vmatpush1.msra.mxu0 0.0
    %1601 = vmatprep.subr.mxu0 0.0
    %1602 = vmatpush1.msra.mxu0 0.0
    %1603 = vmatprep.subr.mxu0 0.0
    %1604 = vmatpush1.msra.mxu0 0.0
    %1605 = vmatprep.subr.mxu0 0.0
    %1606 = vmatpush1.msra.mxu0 0.0
    %1607 = vmatprep.subr.mxu0 0.0
    %1608 = vmatpush1.msra.mxu0 0.0
    %1609 = vmatprep.subr.mxu0 0.0
    %1610 = vmatpush1.msra.mxu0 0.0
    %1611 = vmatprep.subr.mxu0 %v703
    %1612 = vmatpush1.msra.mxu0 %v702
    %1613 = vmatprep.subr.mxu0 %v699
    %1614 = vmatpush1.msra.mxu0 %v698
    %1615 = vmatprep.subr.mxu0 %v695
    %1616 = vmatpush1.msra.mxu0 %v694
    %1617 = vmatprep.subr.mxu0 0.0
    %1618 = vmatpush2.msra.mxu0 0.0
    %1619 = vmatprep.subr.mxu0 0.0
    %1620 = vmatpush2.msra.mxu0 0.0
    %1621 = vmatprep.subr.mxu0 0.0
    %1622 = vmatpush2.msra.mxu0 0.0
    %1623 = vmatprep.subr.mxu0 0.0
    %1624 = vmatpush2.msra.mxu0 0.0
    %1625 = vmatprep.subr.mxu0 0.0
    %1626 = vmatpush2.msra.mxu0 0.0
    %1627 = vmatprep.subr.mxu0 0.0
    %1628 = vmatpush2.msra.mxu0 0.0
    %1629 = vmatprep.subr.mxu0 0.0
    %1630 = vmatpush2.msra.mxu0 0.0
    %1631 = vmatprep.subr.mxu0 0.0
    %1632 = vmatpush2.msra.mxu0 0.0
    %1633 = vmatprep.subr.mxu0 0.0
    %1634 = vmatpush2.msra.mxu0 0.0
    %1635 = vmatprep.subr.mxu0 0.0
    %1636 = vmatpush2.msra.mxu0 0.0
    %1637 = vmatprep.subr.mxu0 0.0
    %1638 = vmatpush2.msra.mxu0 0.0
    %1639 = vmatprep.subr.mxu0 0.0
    %1640 = vmatpush2.msra.mxu0 0.0
    %1641 = vmatprep.subr.mxu0 0.0
    %1642 = vmatpush2.msra.mxu0 0.0
    %1643 = vmatprep.subr.mxu0 0.0
    %1644 = vmatpush2.msra.mxu0 0.0
    %1645 = vmatprep.subr.mxu0 0.0
    %1646 = vmatpush2.msra.mxu0 0.0
    %1647 = vmatprep.subr.mxu0 0.0
    %1648 = vmatpush2.msra.mxu0 0.0
    %1649 = vmatprep.mubr.f32.mxu0 0.0
    %1650 = vmatmul.mubr.f32.gmra.mxu0 %v1512
    %v1651 = vpop.f32.mrf.mxu0
    %v1652 = vadd.f32 0.0, %v1651
    %v1653 = vpop.f32.mrf.mxu0
    %v1654 = vadd.f32 0.0, %v1653
    %1655 = vdwg.mxu0
    %v1656 = vadd.f32 %v1507, %v1581
    %v1657 = vadd.f32 %v1508, %v1583
    %v1658 = vadd.f32 %v1509, %v1652
    %v1659 = vadd.f32 %v1510, %v1654
    %v1660 = vxor.u32 %v1656, 2147483648
    %v1661 = vmul.f32 %v1660, 1.442695
    %v1662 = vpow.pop %v1661
    %v1663 = vadd.f32 %v1662, 1.0
    %v1664 = vrcp.pop %v1663
    %v1665 = vmul.f32 1.0, %v1664
    %v1666 = vxor.u32 %v1657, 2147483648
    %v1667 = vmul.f32 %v1666, 1.442695
    %v1668 = vpow.pop %v1667
    %v1669 = vadd.f32 %v1668, 1.0
    %v1670 = vrcp.pop %v1669
    %v1671 = vmul.f32 1.0, %v1670
    %v1672 = vtanh.pop %v1658
    %v1673 = vxor.u32 %v1659, 2147483648
    %v1674 = vmul.f32 %v1673, 1.442695
    %v1675 = vpow.pop %v1674
    %v1676 = vadd.f32 %v1675, 1.0
    %v1677 = vrcp.pop %v1676
    %v1678 = vmul.f32 1.0, %v1677
    %v1679 = vmul.f32 %v1671, %v1494
    %v1680 = vmul.f32 %v1665, %v1672
    %v1681 = vadd.f32 %v1679, %v1680
    %v1682 = vtanh.pop %v1681
    %v1683 = vmul.f32 %v1678, %v1682
    %s1684 = scalar_lea.vmem %s1, 32
    %v1685 = vld [vmem:[%s1684] sm:$0xff]
    %v1686 = vmul.f32 %v1683, %v1685
    %v1687 = vmul.f32 %v1681, %v1685
    %s1688 = scalar_lea.vmem [#allocation3], 32
    %1689 = vst.msk [vmem:[%s1688] sm:$0xff] %vm722, %v1686
    %s1690 = scalar_lea.vmem [#allocation4], 24
    %1691 = vst.msk [vmem:[%s1690] sm:$0xff] %vm722, %v1686
    %v1692 = vld [vmem:[%s1110] sm:$0xff]
    %v1693 = vld [vmem:[%s1110 + $0x8] sm:$0xff]
    %v1694 = vld [vmem:[%s1110 + $0x10] sm:$0xff]
    %v1695 = vld [vmem:[%s1110 + $0x18] sm:$0xff]
    %v1696 = vld [vmem:[%s1103 + $0x20] sm:$0xff]
    %v1697 = vld [vmem:[%s1103 + $0x28] sm:$0xff]
    %v1698 = vld [vmem:[%s1103 + $0x30] sm:$0xff]
    %v1699 = vld [vmem:[%s1103 + $0x38] sm:$0xff]
    %v1700 = vadd.f32 %v1692, %v1696
    %v1701 = vadd.f32 %v1693, %v1697
    %v1702 = vadd.f32 %v1694, %v1698
    %v1703 = vadd.f32 %v1695, %v1699
    %v1705 = vsel %vm722, %v1686, 0
    %1707 = vmatprep.subr.mxu0 0.0
    %1708 = vmatpush1.msra.mxu0 0.0
    %1709 = vmatprep.subr.mxu0 0.0
    %1710 = vmatpush1.msra.mxu0 0.0
    %1711 = vmatprep.subr.mxu0 0.0
    %1712 = vmatpush1.msra.mxu0 0.0
    %1713 = vmatprep.subr.mxu0 0.0
    %1714 = vmatpush1.msra.mxu0 0.0
    %1715 = vmatprep.subr.mxu0 0.0
    %1716 = vmatpush1.msra.mxu0 0.0
    %1717 = vmatprep.subr.mxu0 0.0
    %1718 = vmatpush1.msra.mxu0 0.0
    %1719 = vmatprep.subr.mxu0 0.0
    %1720 = vmatpush1.msra.mxu0 0.0
    %1721 = vmatprep.subr.mxu0 0.0
    %1722 = vmatpush1.msra.mxu0 0.0
    %1723 = vmatprep.subr.mxu0 0.0
    %1724 = vmatpush1.msra.mxu0 0.0
    %1725 = vmatprep.subr.mxu0 0.0
    %1726 = vmatpush1.msra.mxu0 0.0
    %1727 = vmatprep.subr.mxu0 0.0
    %1728 = vmatpush1.msra.mxu0 0.0
    %1729 = vmatprep.subr.mxu0 0.0
    %1730 = vmatpush1.msra.mxu0 0.0
    %1731 = vmatprep.subr.mxu0 0.0
    %1732 = vmatpush1.msra.mxu0 0.0
    %1733 = vmatprep.subr.mxu0 %v701
    %1734 = vmatpush1.msra.mxu0 %v700
    %1735 = vmatprep.subr.mxu0 %v697
    %1736 = vmatpush1.msra.mxu0 %v696
    %1737 = vmatprep.subr.mxu0 %v693
    %1738 = vmatpush1.msra.mxu0 %v692
    %1739 = vmatprep.subr.mxu0 0.0
    %1740 = vmatpush2.msra.mxu0 0.0
    %1741 = vmatprep.subr.mxu0 0.0
    %1742 = vmatpush2.msra.mxu0 0.0
    %1743 = vmatprep.subr.mxu0 0.0
    %1744 = vmatpush2.msra.mxu0 0.0
    %1745 = vmatprep.subr.mxu0 0.0
    %1746 = vmatpush2.msra.mxu0 0.0
    %1747 = vmatprep.subr.mxu0 0.0
    %1748 = vmatpush2.msra.mxu0 0.0
    %1749 = vmatprep.subr.mxu0 0.0
    %1750 = vmatpush2.msra.mxu0 0.0
    %1751 = vmatprep.subr.mxu0 0.0
    %1752 = vmatpush2.msra.mxu0 0.0
    %1753 = vmatprep.subr.mxu0 0.0
    %1754 = vmatpush2.msra.mxu0 0.0
    %1755 = vmatprep.subr.mxu0 0.0
    %1756 = vmatpush2.msra.mxu0 0.0
    %1757 = vmatprep.subr.mxu0 0.0
    %1758 = vmatpush2.msra.mxu0 0.0
    %1759 = vmatprep.subr.mxu0 0.0
    %1760 = vmatpush2.msra.mxu0 0.0
    %1761 = vmatprep.subr.mxu0 0.0
    %1762 = vmatpush2.msra.mxu0 0.0
    %1763 = vmatprep.subr.mxu0 0.0
    %1764 = vmatpush2.msra.mxu0 0.0
    %1765 = vmatprep.subr.mxu0 0.0
    %1766 = vmatpush2.msra.mxu0 0.0
    %1767 = vmatprep.subr.mxu0 0.0
    %1768 = vmatpush2.msra.mxu0 0.0
    %1769 = vmatprep.subr.mxu0 0.0
    %1770 = vmatpush2.msra.mxu0 0.0
    %1771 = vmatprep.mubr.f32.mxu0 0.0
    %1772 = vmatmul.mubr.f32.gmra.mxu0 %v1705
    %v1773 = vpop.f32.mrf.mxu0
    %v1774 = vadd.f32 0.0, %v1773
    %v1775 = vpop.f32.mrf.mxu0
    %v1776 = vadd.f32 0.0, %v1775
    %1777 = vdwg.mxu0
    %1778 = vmatprep.subr.mxu0 0.0
    %1779 = vmatpush1.msra.mxu0 0.0
    %1780 = vmatprep.subr.mxu0 0.0
    %1781 = vmatpush1.msra.mxu0 0.0
    %1782 = vmatprep.subr.mxu0 0.0
    %1783 = vmatpush1.msra.mxu0 0.0
    %1784 = vmatprep.subr.mxu0 0.0
    %1785 = vmatpush1.msra.mxu0 0.0
    %1786 = vmatprep.subr.mxu0 0.0
    %1787 = vmatpush1.msra.mxu0 0.0
    %1788 = vmatprep.subr.mxu0 0.0
    %1789 = vmatpush1.msra.mxu0 0.0
    %1790 = vmatprep.subr.mxu0 0.0
    %1791 = vmatpush1.msra.mxu0 0.0
    %1792 = vmatprep.subr.mxu0 0.0
    %1793 = vmatpush1.msra.mxu0 0.0
    %1794 = vmatprep.subr.mxu0 0.0
    %1795 = vmatpush1.msra.mxu0 0.0
    %1796 = vmatprep.subr.mxu0 0.0
    %1797 = vmatpush1.msra.mxu0 0.0
    %1798 = vmatprep.subr.mxu0 0.0
    %1799 = vmatpush1.msra.mxu0 0.0
    %1800 = vmatprep.subr.mxu0 0.0
    %1801 = vmatpush1.msra.mxu0 0.0
    %1802 = vmatprep.subr.mxu0 0.0
    %1803 = vmatpush1.msra.mxu0 0.0
    %1804 = vmatprep.subr.mxu0 %v703
    %1805 = vmatpush1.msra.mxu0 %v702
    %1806 = vmatprep.subr.mxu0 %v699
    %1807 = vmatpush1.msra.mxu0 %v698
    %1808 = vmatprep.subr.mxu0 %v695
    %1809 = vmatpush1.msra.mxu0 %v694
    %1810 = vmatprep.subr.mxu0 0.0
    %1811 = vmatpush2.msra.mxu0 0.0
    %1812 = vmatprep.subr.mxu0 0.0
    %1813 = vmatpush2.msra.mxu0 0.0
    %1814 = vmatprep.subr.mxu0 0.0
    %1815 = vmatpush2.msra.mxu0 0.0
    %1816 = vmatprep.subr.mxu0 0.0
    %1817 = vmatpush2.msra.mxu0 0.0
    %1818 = vmatprep.subr.mxu0 0.0
    %1819 = vmatpush2.msra.mxu0 0.0
    %1820 = vmatprep.subr.mxu0 0.0
    %1821 = vmatpush2.msra.mxu0 0.0
    %1822 = vmatprep.subr.mxu0 0.0
    %1823 = vmatpush2.msra.mxu0 0.0
    %1824 = vmatprep.subr.mxu0 0.0
    %1825 = vmatpush2.msra.mxu0 0.0
    %1826 = vmatprep.subr.mxu0 0.0
    %1827 = vmatpush2.msra.mxu0 0.0
    %1828 = vmatprep.subr.mxu0 0.0
    %1829 = vmatpush2.msra.mxu0 0.0
    %1830 = vmatprep.subr.mxu0 0.0
    %1831 = vmatpush2.msra.mxu0 0.0
    %1832 = vmatprep.subr.mxu0 0.0
    %1833 = vmatpush2.msra.mxu0 0.0
    %1834 = vmatprep.subr.mxu0 0.0
    %1835 = vmatpush2.msra.mxu0 0.0
    %1836 = vmatprep.subr.mxu0 0.0
    %1837 = vmatpush2.msra.mxu0 0.0
    %1838 = vmatprep.subr.mxu0 0.0
    %1839 = vmatpush2.msra.mxu0 0.0
    %1840 = vmatprep.subr.mxu0 0.0
    %1841 = vmatpush2.msra.mxu0 0.0
    %1842 = vmatprep.mubr.f32.mxu0 0.0
    %1843 = vmatmul.mubr.f32.gmra.mxu0 %v1705
    %v1844 = vpop.f32.mrf.mxu0
    %v1845 = vadd.f32 0.0, %v1844
    %v1846 = vpop.f32.mrf.mxu0
    %v1847 = vadd.f32 0.0, %v1846
    %1848 = vdwg.mxu0
    %v1849 = vadd.f32 %v1700, %v1774
    %v1850 = vadd.f32 %v1701, %v1776
    %v1851 = vadd.f32 %v1702, %v1845
    %v1852 = vadd.f32 %v1703, %v1847
    %v1853 = vxor.u32 %v1849, 2147483648
    %v1854 = vmul.f32 %v1853, 1.442695
    %v1855 = vpow.pop %v1854
    %v1856 = vadd.f32 %v1855, 1.0
    %v1857 = vrcp.pop %v1856
    %v1858 = vmul.f32 1.0, %v1857
    %v1859 = vxor.u32 %v1850, 2147483648
    %v1860 = vmul.f32 %v1859, 1.442695
    %v1861 = vpow.pop %v1860
    %v1862 = vadd.f32 %v1861, 1.0
    %v1863 = vrcp.pop %v1862
    %v1864 = vmul.f32 1.0, %v1863
    %v1865 = vtanh.pop %v1851
    %v1866 = vxor.u32 %v1852, 2147483648
    %v1867 = vmul.f32 %v1866, 1.442695
    %v1868 = vpow.pop %v1867
    %v1869 = vadd.f32 %v1868, 1.0
    %v1870 = vrcp.pop %v1869
    %v1871 = vmul.f32 1.0, %v1870
    %v1872 = vmul.f32 %v1864, %v1687
    %v1873 = vmul.f32 %v1858, %v1865
    %v1874 = vadd.f32 %v1872, %v1873
    %v1875 = vtanh.pop %v1874
    %v1876 = vmul.f32 %v1871, %v1875
    %s1877 = scalar_lea.vmem %s1, 40
    %v1878 = vld [vmem:[%s1877] sm:$0xff]
    %v1879 = vmul.f32 %v1876, %v1878
    %v1880 = vmul.f32 %v1874, %v1878
    %s1881 = scalar_lea.vmem [#allocation3], 40
    %1882 = vst.msk [vmem:[%s1881] sm:$0xff] %vm722, %v1879
    %s1883 = scalar_lea.vmem [#allocation4], 16
    %1884 = vst.msk [vmem:[%s1883] sm:$0xff] %vm722, %v1879
    %v1885 = vld [vmem:[%s911] sm:$0xff]
    %v1886 = vld [vmem:[%s911 + $0x8] sm:$0xff]
    %v1887 = vld [vmem:[%s911 + $0x10] sm:$0xff]
    %v1888 = vld [vmem:[%s911 + $0x18] sm:$0xff]
    %v1889 = vld [vmem:[%s904 + $0x20] sm:$0xff]
    %v1890 = vld [vmem:[%s904 + $0x28] sm:$0xff]
    %v1891 = vld [vmem:[%s904 + $0x30] sm:$0xff]
    %v1892 = vld [vmem:[%s904 + $0x38] sm:$0xff]
    %v1893 = vadd.f32 %v1885, %v1889
    %v1894 = vadd.f32 %v1886, %v1890
    %v1895 = vadd.f32 %v1887, %v1891
    %v1896 = vadd.f32 %v1888, %v1892
    %v1898 = vsel %vm722, %v1879, 0
    %1900 = vmatprep.subr.mxu0 0.0
    %1901 = vmatpush1.msra.mxu0 0.0
    %1902 = vmatprep.subr.mxu0 0.0
    %1903 = vmatpush1.msra.mxu0 0.0
    %1904 = vmatprep.subr.mxu0 0.0
    %1905 = vmatpush1.msra.mxu0 0.0
    %1906 = vmatprep.subr.mxu0 0.0
    %1907 = vmatpush1.msra.mxu0 0.0
    %1908 = vmatprep.subr.mxu0 0.0
    %1909 = vmatpush1.msra.mxu0 0.0
    %1910 = vmatprep.subr.mxu0 0.0
    %1911 = vmatpush1.msra.mxu0 0.0
    %1912 = vmatprep.subr.mxu0 0.0
    %1913 = vmatpush1.msra.mxu0 0.0
    %1914 = vmatprep.subr.mxu0 0.0
    %1915 = vmatpush1.msra.mxu0 0.0
    %1916 = vmatprep.subr.mxu0 0.0
    %1917 = vmatpush1.msra.mxu0 0.0
    %1918 = vmatprep.subr.mxu0 0.0
    %1919 = vmatpush1.msra.mxu0 0.0
    %1920 = vmatprep.subr.mxu0 0.0
    %1921 = vmatpush1.msra.mxu0 0.0
    %1922 = vmatprep.subr.mxu0 0.0
    %1923 = vmatpush1.msra.mxu0 0.0
    %1924 = vmatprep.subr.mxu0 0.0
    %1925 = vmatpush1.msra.mxu0 0.0
    %1926 = vmatprep.subr.mxu0 %v701
    %1927 = vmatpush1.msra.mxu0 %v700
    %1928 = vmatprep.subr.mxu0 %v697
    %1929 = vmatpush1.msra.mxu0 %v696
    %1930 = vmatprep.subr.mxu0 %v693
    %1931 = vmatpush1.msra.mxu0 %v692
    %1932 = vmatprep.subr.mxu0 0.0
    %1933 = vmatpush2.msra.mxu0 0.0
    %1934 = vmatprep.subr.mxu0 0.0
    %1935 = vmatpush2.msra.mxu0 0.0
    %1936 = vmatprep.subr.mxu0 0.0
    %1937 = vmatpush2.msra.mxu0 0.0
    %1938 = vmatprep.subr.mxu0 0.0
    %1939 = vmatpush2.msra.mxu0 0.0
    %1940 = vmatprep.subr.mxu0 0.0
    %1941 = vmatpush2.msra.mxu0 0.0
    %1942 = vmatprep.subr.mxu0 0.0
    %1943 = vmatpush2.msra.mxu0 0.0
    %1944 = vmatprep.subr.mxu0 0.0
    %1945 = vmatpush2.msra.mxu0 0.0
    %1946 = vmatprep.subr.mxu0 0.0
    %1947 = vmatpush2.msra.mxu0 0.0
    %1948 = vmatprep.subr.mxu0 0.0
    %1949 = vmatpush2.msra.mxu0 0.0
    %1950 = vmatprep.subr.mxu0 0.0
    %1951 = vmatpush2.msra.mxu0 0.0
    %1952 = vmatprep.subr.mxu0 0.0
    %1953 = vmatpush2.msra.mxu0 0.0
    %1954 = vmatprep.subr.mxu0 0.0
    %1955 = vmatpush2.msra.mxu0 0.0
    %1956 = vmatprep.subr.mxu0 0.0
    %1957 = vmatpush2.msra.mxu0 0.0
    %1958 = vmatprep.subr.mxu0 0.0
    %1959 = vmatpush2.msra.mxu0 0.0
    %1960 = vmatprep.subr.mxu0 0.0
    %1961 = vmatpush2.msra.mxu0 0.0
    %1962 = vmatprep.subr.mxu0 0.0
    %1963 = vmatpush2.msra.mxu0 0.0
    %1964 = vmatprep.mubr.f32.mxu0 0.0
    %1965 = vmatmul.mubr.f32.gmra.mxu0 %v1898
    %v1966 = vpop.f32.mrf.mxu0
    %v1967 = vadd.f32 0.0, %v1966
    %v1968 = vpop.f32.mrf.mxu0
    %v1969 = vadd.f32 0.0, %v1968
    %1970 = vdwg.mxu0
    %1971 = vmatprep.subr.mxu0 0.0
    %1972 = vmatpush1.msra.mxu0 0.0
    %1973 = vmatprep.subr.mxu0 0.0
    %1974 = vmatpush1.msra.mxu0 0.0
    %1975 = vmatprep.subr.mxu0 0.0
    %1976 = vmatpush1.msra.mxu0 0.0
    %1977 = vmatprep.subr.mxu0 0.0
    %1978 = vmatpush1.msra.mxu0 0.0
    %1979 = vmatprep.subr.mxu0 0.0
    %1980 = vmatpush1.msra.mxu0 0.0
    %1981 = vmatprep.subr.mxu0 0.0
    %1982 = vmatpush1.msra.mxu0 0.0
    %1983 = vmatprep.subr.mxu0 0.0
    %1984 = vmatpush1.msra.mxu0 0.0
    %1985 = vmatprep.subr.mxu0 0.0
    %1986 = vmatpush1.msra.mxu0 0.0
    %1987 = vmatprep.subr.mxu0 0.0
    %1988 = vmatpush1.msra.mxu0 0.0
    %1989 = vmatprep.subr.mxu0 0.0
    %1990 = vmatpush1.msra.mxu0 0.0
    %1991 = vmatprep.subr.mxu0 0.0
    %1992 = vmatpush1.msra.mxu0 0.0
    %1993 = vmatprep.subr.mxu0 0.0
    %1994 = vmatpush1.msra.mxu0 0.0
    %1995 = vmatprep.subr.mxu0 0.0
    %1996 = vmatpush1.msra.mxu0 0.0
    %1997 = vmatprep.subr.mxu0 %v703
    %1998 = vmatpush1.msra.mxu0 %v702
    %1999 = vmatprep.subr.mxu0 %v699
    %2000 = vmatpush1.msra.mxu0 %v698
    %2001 = vmatprep.subr.mxu0 %v695
    %2002 = vmatpush1.msra.mxu0 %v694
    %2003 = vmatprep.subr.mxu0 0.0
    %2004 = vmatpush2.msra.mxu0 0.0
    %2005 = vmatprep.subr.mxu0 0.0
    %2006 = vmatpush2.msra.mxu0 0.0
    %2007 = vmatprep.subr.mxu0 0.0
    %2008 = vmatpush2.msra.mxu0 0.0
    %2009 = vmatprep.subr.mxu0 0.0
    %2010 = vmatpush2.msra.mxu0 0.0
    %2011 = vmatprep.subr.mxu0 0.0
    %2012 = vmatpush2.msra.mxu0 0.0
    %2013 = vmatprep.subr.mxu0 0.0
    %2014 = vmatpush2.msra.mxu0 0.0
    %2015 = vmatprep.subr.mxu0 0.0
    %2016 = vmatpush2.msra.mxu0 0.0
    %2017 = vmatprep.subr.mxu0 0.0
    %2018 = vmatpush2.msra.mxu0 0.0
    %2019 = vmatprep.subr.mxu0 0.0
    %2020 = vmatpush2.msra.mxu0 0.0
    %2021 = vmatprep.subr.mxu0 0.0
    %2022 = vmatpush2.msra.mxu0 0.0
    %2023 = vmatprep.subr.mxu0 0.0
    %2024 = vmatpush2.msra.mxu0 0.0
    %2025 = vmatprep.subr.mxu0 0.0
    %2026 = vmatpush2.msra.mxu0 0.0
    %2027 = vmatprep.subr.mxu0 0.0
    %2028 = vmatpush2.msra.mxu0 0.0
    %2029 = vmatprep.subr.mxu0 0.0
    %2030 = vmatpush2.msra.mxu0 0.0
    %2031 = vmatprep.subr.mxu0 0.0
    %2032 = vmatpush2.msra.mxu0 0.0
    %2033 = vmatprep.subr.mxu0 0.0
    %2034 = vmatpush2.msra.mxu0 0.0
    %2035 = vmatprep.mubr.f32.mxu0 0.0
    %2036 = vmatmul.mubr.f32.gmra.mxu0 %v1898
    %v2037 = vpop.f32.mrf.mxu0
    %v2038 = vadd.f32 0.0, %v2037
    %v2039 = vpop.f32.mrf.mxu0
    %v2040 = vadd.f32 0.0, %v2039
    %2041 = vdwg.mxu0
    %v2042 = vadd.f32 %v1893, %v1967
    %v2043 = vadd.f32 %v1894, %v1969
    %v2044 = vadd.f32 %v1895, %v2038
    %v2045 = vadd.f32 %v1896, %v2040
    %v2046 = vxor.u32 %v2042, 2147483648
    %v2047 = vmul.f32 %v2046, 1.442695
    %v2048 = vpow.pop %v2047
    %v2049 = vadd.f32 %v2048, 1.0
    %v2050 = vrcp.pop %v2049
    %v2051 = vmul.f32 1.0, %v2050
    %v2052 = vxor.u32 %v2043, 2147483648
    %v2053 = vmul.f32 %v2052, 1.442695
    %v2054 = vpow.pop %v2053
    %v2055 = vadd.f32 %v2054, 1.0
    %v2056 = vrcp.pop %v2055
    %v2057 = vmul.f32 1.0, %v2056
    %v2058 = vtanh.pop %v2044
    %v2059 = vxor.u32 %v2045, 2147483648
    %v2060 = vmul.f32 %v2059, 1.442695
    %v2061 = vpow.pop %v2060
    %v2062 = vadd.f32 %v2061, 1.0
    %v2063 = vrcp.pop %v2062
    %v2064 = vmul.f32 1.0, %v2063
    %v2065 = vmul.f32 %v2057, %v1880
    %v2066 = vmul.f32 %v2051, %v2058
    %v2067 = vadd.f32 %v2065, %v2066
    %v2068 = vtanh.pop %v2067
    %v2069 = vmul.f32 %v2064, %v2068
    %s2070 = scalar_lea.vmem %s1, 48
    %v2071 = vld [vmem:[%s2070] sm:$0xff]
    %v2072 = vmul.f32 %v2069, %v2071
    %v2073 = vmul.f32 %v2067, %v2071
    %s2074 = scalar_lea.vmem [#allocation3], 48
    %2075 = vst.msk [vmem:[%s2074] sm:$0xff] %vm722, %v2072
    %s2076 = scalar_lea.vmem [#allocation4], 8
    %2077 = vst.msk [vmem:[%s2076] sm:$0xff] %vm722, %v2072
    %v2078 = vld [vmem:[%s713] sm:$0xff]
    %v2079 = vld [vmem:[%s713 + $0x8] sm:$0xff]
    %v2080 = vld [vmem:[%s713 + $0x10] sm:$0xff]
    %v2081 = vld [vmem:[%s713 + $0x18] sm:$0xff]
    %v2082 = vld [vmem:[%s706 + $0x20] sm:$0xff]
    %v2083 = vld [vmem:[%s706 + $0x28] sm:$0xff]
    %v2084 = vld [vmem:[%s706 + $0x30] sm:$0xff]
    %v2085 = vld [vmem:[%s706 + $0x38] sm:$0xff]
    %v2086 = vadd.f32 %v2078, %v2082
    %v2087 = vadd.f32 %v2079, %v2083
    %v2088 = vadd.f32 %v2080, %v2084
    %v2089 = vadd.f32 %v2081, %v2085
    %v2091 = vsel %vm722, %v2072, 0
    %2093 = vmatprep.subr.mxu0 0.0
    %2094 = vmatpush1.msra.mxu0 0.0
    %2095 = vmatprep.subr.mxu0 0.0
    %2096 = vmatpush1.msra.mxu0 0.0
    %2097 = vmatprep.subr.mxu0 0.0
    %2098 = vmatpush1.msra.mxu0 0.0
    %2099 = vmatprep.subr.mxu0 0.0
    %2100 = vmatpush1.msra.mxu0 0.0
    %2101 = vmatprep.subr.mxu0 0.0
    %2102 = vmatpush1.msra.mxu0 0.0
    %2103 = vmatprep.subr.mxu0 0.0
    %2104 = vmatpush1.msra.mxu0 0.0
    %2105 = vmatprep.subr.mxu0 0.0
    %2106 = vmatpush1.msra.mxu0 0.0
    %2107 = vmatprep.subr.mxu0 0.0
    %2108 = vmatpush1.msra.mxu0 0.0
    %2109 = vmatprep.subr.mxu0 0.0
    %2110 = vmatpush1.msra.mxu0 0.0
    %2111 = vmatprep.subr.mxu0 0.0
    %2112 = vmatpush1.msra.mxu0 0.0
    %2113 = vmatprep.subr.mxu0 0.0
    %2114 = vmatpush1.msra.mxu0 0.0
    %2115 = vmatprep.subr.mxu0 0.0
    %2116 = vmatpush1.msra.mxu0 0.0
    %2117 = vmatprep.subr.mxu0 0.0
    %2118 = vmatpush1.msra.mxu0 0.0
    %2119 = vmatprep.subr.mxu0 %v701
    %2120 = vmatpush1.msra.mxu0 %v700
    %2121 = vmatprep.subr.mxu0 %v697
    %2122 = vmatpush1.msra.mxu0 %v696
    %2123 = vmatprep.subr.mxu0 %v693
    %2124 = vmatpush1.msra.mxu0 %v692
    %2125 = vmatprep.subr.mxu0 0.0
    %2126 = vmatpush2.msra.mxu0 0.0
    %2127 = vmatprep.subr.mxu0 0.0
    %2128 = vmatpush2.msra.mxu0 0.0
    %2129 = vmatprep.subr.mxu0 0.0
    %2130 = vmatpush2.msra.mxu0 0.0
    %2131 = vmatprep.subr.mxu0 0.0
    %2132 = vmatpush2.msra.mxu0 0.0
    %2133 = vmatprep.subr.mxu0 0.0
    %2134 = vmatpush2.msra.mxu0 0.0
    %2135 = vmatprep.subr.mxu0 0.0
    %2136 = vmatpush2.msra.mxu0 0.0
    %2137 = vmatprep.subr.mxu0 0.0
    %2138 = vmatpush2.msra.mxu0 0.0
    %2139 = vmatprep.subr.mxu0 0.0
    %2140 = vmatpush2.msra.mxu0 0.0
    %2141 = vmatprep.subr.mxu0 0.0
    %2142 = vmatpush2.msra.mxu0 0.0
    %2143 = vmatprep.subr.mxu0 0.0
    %2144 = vmatpush2.msra.mxu0 0.0
    %2145 = vmatprep.subr.mxu0 0.0
    %2146 = vmatpush2.msra.mxu0 0.0
    %2147 = vmatprep.subr.mxu0 0.0
    %2148 = vmatpush2.msra.mxu0 0.0
    %2149 = vmatprep.subr.mxu0 0.0
    %2150 = vmatpush2.msra.mxu0 0.0
    %2151 = vmatprep.subr.mxu0 0.0
    %2152 = vmatpush2.msra.mxu0 0.0
    %2153 = vmatprep.subr.mxu0 0.0
    %2154 = vmatpush2.msra.mxu0 0.0
    %2155 = vmatprep.subr.mxu0 0.0
    %2156 = vmatpush2.msra.mxu0 0.0
    %2157 = vmatprep.mubr.f32.mxu0 0.0
    %2158 = vmatmul.mubr.f32.gmra.mxu0 %v2091
    %v2159 = vpop.f32.mrf.mxu0
    %v2160 = vadd.f32 0.0, %v2159
    %v2161 = vpop.f32.mrf.mxu0
    %v2162 = vadd.f32 0.0, %v2161
    %2163 = vdwg.mxu0
    %2164 = vmatprep.subr.mxu0 0.0
    %2165 = vmatpush1.msra.mxu0 0.0
    %2166 = vmatprep.subr.mxu0 0.0
    %2167 = vmatpush1.msra.mxu0 0.0
    %2168 = vmatprep.subr.mxu0 0.0
    %2169 = vmatpush1.msra.mxu0 0.0
    %2170 = vmatprep.subr.mxu0 0.0
    %2171 = vmatpush1.msra.mxu0 0.0
    %2172 = vmatprep.subr.mxu0 0.0
    %2173 = vmatpush1.msra.mxu0 0.0
    %2174 = vmatprep.subr.mxu0 0.0
    %2175 = vmatpush1.msra.mxu0 0.0
    %2176 = vmatprep.subr.mxu0 0.0
    %2177 = vmatpush1.msra.mxu0 0.0
    %2178 = vmatprep.subr.mxu0 0.0
    %2179 = vmatpush1.msra.mxu0 0.0
    %2180 = vmatprep.subr.mxu0 0.0
    %2181 = vmatpush1.msra.mxu0 0.0
    %2182 = vmatprep.subr.mxu0 0.0
    %2183 = vmatpush1.msra.mxu0 0.0
    %2184 = vmatprep.subr.mxu0 0.0
    %2185 = vmatpush1.msra.mxu0 0.0
    %2186 = vmatprep.subr.mxu0 0.0
    %2187 = vmatpush1.msra.mxu0 0.0
    %2188 = vmatprep.subr.mxu0 0.0
    %2189 = vmatpush1.msra.mxu0 0.0
    %2190 = vmatprep.subr.mxu0 %v703
    %2191 = vmatpush1.msra.mxu0 %v702
    %2192 = vmatprep.subr.mxu0 %v699
    %2193 = vmatpush1.msra.mxu0 %v698
    %2194 = vmatprep.subr.mxu0 %v695
    %2195 = vmatpush1.msra.mxu0 %v694
    %2196 = vmatprep.subr.mxu0 0.0
    %2197 = vmatpush2.msra.mxu0 0.0
    %2198 = vmatprep.subr.mxu0 0.0
    %2199 = vmatpush2.msra.mxu0 0.0
    %2200 = vmatprep.subr.mxu0 0.0
    %2201 = vmatpush2.msra.mxu0 0.0
    %2202 = vmatprep.subr.mxu0 0.0
    %2203 = vmatpush2.msra.mxu0 0.0
    %2204 = vmatprep.subr.mxu0 0.0
    %2205 = vmatpush2.msra.mxu0 0.0
    %2206 = vmatprep.subr.mxu0 0.0
    %2207 = vmatpush2.msra.mxu0 0.0
    %2208 = vmatprep.subr.mxu0 0.0
    %2209 = vmatpush2.msra.mxu0 0.0
    %2210 = vmatprep.subr.mxu0 0.0
    %2211 = vmatpush2.msra.mxu0 0.0
    %2212 = vmatprep.subr.mxu0 0.0
    %2213 = vmatpush2.msra.mxu0 0.0
    %2214 = vmatprep.subr.mxu0 0.0
    %2215 = vmatpush2.msra.mxu0 0.0
    %2216 = vmatprep.subr.mxu0 0.0
    %2217 = vmatpush2.msra.mxu0 0.0
    %2218 = vmatprep.subr.mxu0 0.0
    %2219 = vmatpush2.msra.mxu0 0.0
    %2220 = vmatprep.subr.mxu0 0.0
    %2221 = vmatpush2.msra.mxu0 0.0
    %2222 = vmatprep.subr.mxu0 0.0
    %2223 = vmatpush2.msra.mxu0 0.0
    %2224 = vmatprep.subr.mxu0 0.0
    %2225 = vmatpush2.msra.mxu0 0.0
    %2226 = vmatprep.subr.mxu0 0.0
    %2227 = vmatpush2.msra.mxu0 0.0
    %2228 = vmatprep.mubr.f32.mxu0 0.0
    %2229 = vmatmul.mubr.f32.gmra.mxu0 %v2091
    %v2230 = vpop.f32.mrf.mxu0
    %v2231 = vadd.f32 0.0, %v2230
    %v2232 = vpop.f32.mrf.mxu0
    %v2233 = vadd.f32 0.0, %v2232
    %2234 = vdwg.mxu0
    %v2235 = vadd.f32 %v2086, %v2160
    %v2236 = vadd.f32 %v2087, %v2162
    %v2237 = vadd.f32 %v2088, %v2231
    %v2238 = vadd.f32 %v2089, %v2233
    %v2239 = vxor.u32 %v2235, 2147483648
    %v2240 = vmul.f32 %v2239, 1.442695
    %v2241 = vpow.pop %v2240
    %v2242 = vadd.f32 %v2241, 1.0
    %v2243 = vrcp.pop %v2242
    %v2244 = vmul.f32 1.0, %v2243
    %v2245 = vxor.u32 %v2236, 2147483648
    %v2246 = vmul.f32 %v2245, 1.442695
    %v2247 = vpow.pop %v2246
    %v2248 = vadd.f32 %v2247, 1.0
    %v2249 = vrcp.pop %v2248
    %v2250 = vmul.f32 1.0, %v2249
    %v2251 = vtanh.pop %v2237
    %v2252 = vxor.u32 %v2238, 2147483648
    %v2253 = vmul.f32 %v2252, 1.442695
    %v2254 = vpow.pop %v2253
    %v2255 = vadd.f32 %v2254, 1.0
    %v2256 = vrcp.pop %v2255
    %v2257 = vmul.f32 1.0, %v2256
    %v2258 = vmul.f32 %v2250, %v2073
    %v2259 = vmul.f32 %v2244, %v2251
    %v2260 = vadd.f32 %v2258, %v2259
    %v2261 = vtanh.pop %v2260
    %v2262 = vmul.f32 %v2257, %v2261
    %s2263 = scalar_lea.vmem %s1, 56
    %v2264 = vld [vmem:[%s2263] sm:$0xff]
    %v2265 = vmul.f32 %v2262, %v2264
    %s2266 = scalar_lea.vmem [#allocation3], 56
    %2267 = vst.msk [vmem:[%s2266] sm:$0xff] %vm722, %v2265
    %2268 = vst.msk [vmem:[#allocation4] sm:$0xff] %vm722, %v2265
    %v2269 = vld [vmem:[#allocation10] sm:$0x3]
    %v2270 = vld [vmem:[#allocation3] sm:$0xff]
    %v2271 = vld [vmem:[#allocation3 + $0x8] sm:$0xff]
    %v2272 = vld [vmem:[#allocation3 + $0x10] sm:$0xff]
    %v2273 = vld [vmem:[#allocation3 + $0x18] sm:$0xff]
    %v2274 = vld [vmem:[#allocation3 + $0x20] sm:$0xff]
    %v2275 = vld [vmem:[#allocation3 + $0x28] sm:$0xff]
    %v2276 = vld [vmem:[#allocation3 + $0x30] sm:$0xff]
    %v2277 = vld [vmem:[#allocation3 + $0x38] sm:$0xff]
    %v2278 = vlaneseq
    %v2279 = vshrl.u32 %v2278, 7
    %v2280 = vsub.s32 0, %v2279
    %v2281 = vrot.slane %v2269, %v2280
    %v2282 = vmul.f32 %v2270, %v2281
    %v2283 = vmul.f32 %v2271, %v2281
    %v2284 = vmul.f32 %v2272, %v2281
    %v2285 = vmul.f32 %v2273, %v2281
    %v2286 = vmul.f32 %v2274, %v2281
    %v2287 = vmul.f32 %v2275, %v2281
    %v2288 = vmul.f32 %v2276, %v2281
    %v2289 = vmul.f32 %v2277, %v2281
    %v2290 = vsel %vm722, %v2282, 0.0
    %2291 = vadd.xlane.f32.xlu0 %v2290
    %v2292 = vpop.xlane.xlu0 %2291
    %v2293 = vsel %vm722, %v2283, 0.0
    %2294 = vadd.xlane.f32.xlu0 %v2293
    %v2295 = vpop.xlane.xlu0 %2294
    %v2296 = vsel %vm722, %v2284, 0.0
    %2297 = vadd.xlane.f32.xlu0 %v2296
    %v2298 = vpop.xlane.xlu0 %2297
    %v2299 = vsel %vm722, %v2285, 0.0
    %2300 = vadd.xlane.f32.xlu0 %v2299
    %v2301 = vpop.xlane.xlu0 %2300
    %v2302 = vsel %vm722, %v2286, 0.0
    %2303 = vadd.xlane.f32.xlu0 %v2302
    %v2304 = vpop.xlane.xlu0 %2303
    %v2305 = vsel %vm722, %v2287, 0.0
    %2306 = vadd.xlane.f32.xlu0 %v2305
    %v2307 = vpop.xlane.xlu0 %2306
    %v2308 = vsel %vm722, %v2288, 0.0
    %2309 = vadd.xlane.f32.xlu0 %v2308
    %v2310 = vpop.xlane.xlu0 %2309
    %v2311 = vsel %vm722, %v2289, 0.0
    %2312 = vadd.xlane.f32.xlu0 %v2311
    %v2313 = vpop.xlane.xlu0 %2312
    %v2314 = vld [vmem:[#allocation4] sm:$0xff]
    %v2315 = vld [vmem:[#allocation4 + $0x8] sm:$0xff]
    %v2316 = vld [vmem:[#allocation4 + $0x10] sm:$0xff]
    %v2317 = vld [vmem:[#allocation4 + $0x18] sm:$0xff]
    %v2318 = vld [vmem:[#allocation4 + $0x20] sm:$0xff]
    %v2319 = vld [vmem:[#allocation4 + $0x28] sm:$0xff]
    %v2320 = vld [vmem:[#allocation4 + $0x30] sm:$0xff]
    %v2321 = vld [vmem:[#allocation4 + $0x38] sm:$0xff]
    %v2322 = vlaneseq
    %v2323 = vshrl.u32 %v2322, 7
    %v2324 = vsub.s32 1, %v2323
    %v2325 = vrot.slane %v2269, %v2324
    %v2326 = vmul.f32 %v2314, %v2325
    %v2327 = vmul.f32 %v2315, %v2325
    %v2328 = vmul.f32 %v2316, %v2325
    %v2329 = vmul.f32 %v2317, %v2325
    %v2330 = vmul.f32 %v2318, %v2325
    %v2331 = vmul.f32 %v2319, %v2325
    %v2332 = vmul.f32 %v2320, %v2325
    %v2333 = vmul.f32 %v2321, %v2325
    %v2334 = vsel %vm722, %v2326, 0.0
    %2335 = vadd.xlane.f32.xlu0 %v2334
    %v2336 = vpop.xlane.xlu0 %2335
    %v2337 = vsel %vm722, %v2327, 0.0
    %2338 = vadd.xlane.f32.xlu0 %v2337
    %v2339 = vpop.xlane.xlu0 %2338
    %v2340 = vsel %vm722, %v2328, 0.0
    %2341 = vadd.xlane.f32.xlu0 %v2340
    %v2342 = vpop.xlane.xlu0 %2341
    %v2343 = vsel %vm722, %v2329, 0.0
    %2344 = vadd.xlane.f32.xlu0 %v2343
    %v2345 = vpop.xlane.xlu0 %2344
    %v2346 = vsel %vm722, %v2330, 0.0
    %2347 = vadd.xlane.f32.xlu0 %v2346
    %v2348 = vpop.xlane.xlu0 %2347
    %v2349 = vsel %vm722, %v2331, 0.0
    %2350 = vadd.xlane.f32.xlu0 %v2349
    %v2351 = vpop.xlane.xlu0 %2350
    %v2352 = vsel %vm722, %v2332, 0.0
    %2353 = vadd.xlane.f32.xlu0 %v2352
    %v2354 = vpop.xlane.xlu0 %2353
    %v2355 = vsel %vm722, %v2333, 0.0
    %2356 = vadd.xlane.f32.xlu0 %v2355
    %v2357 = vpop.xlane.xlu0 %2356
    %v2358 = vadd.f32 %v2292, %v2336
    %v2359 = vadd.f32 %v2295, %v2339
    %v2360 = vadd.f32 %v2298, %v2342
    %v2361 = vadd.f32 %v2301, %v2345
    %v2362 = vadd.f32 %v2304, %v2348
    %v2363 = vadd.f32 %v2307, %v2351
    %v2364 = vadd.f32 %v2310, %v2354
    %v2365 = vadd.f32 %v2313, %v2357
    %v2366 = vld [vmem:[#allocation5] sm:$0x1]
    %v2368 = vlaneseq
    %v2369 = vshrl.u32 %v2368, 7
    %v2370 = vsub.s32 0, %v2369
    %v2371 = vrot.slane %v2366, %v2370
    %2372 = vset.pattern.permute.xlu0 0
    %2373 = vperm.xlu0 %2372, %v2371
    %v2374 = vpop.permute.xlu0 %2373
    %v2376 = vadd.f32 %v2358, %v2374
    %v2377 = vadd.f32 %v2359, %v2374
    %v2378 = vadd.f32 %v2360, %v2374
    %v2379 = vadd.f32 %v2361, %v2374
    %v2380 = vadd.f32 %v2362, %v2374
    %v2381 = vadd.f32 %v2363, %v2374
    %v2382 = vadd.f32 %v2364, %v2374
    %v2383 = vadd.f32 %v2365, %v2374
    %v2384 = vld [vmem:[%s2] sm:$0xff]
    %vm2385 = vcmp.gt.f32.partialorder %v2384, 0.0
    %v2394 = vlaneseq
    %v2395 = vand.u32 %v2394, 127
    %v2396 = vlaneseq
    %v2397 = vshrl.u32 %v2396, 7
    %v2398 = vsub.s32 %v2395, %v2397
    %v2399 = vrot.slane %v2376, %v2398
    %v2400 = vlaneseq
    %v2401 = vshrl.u32 %v2400, 7
    %v2402 = vsub.s32 %v2395, %v2401
    %v2403 = vrot.slane %v2377, %v2402
    %v2404 = vlaneseq
    %v2405 = vshrl.u32 %v2404, 7
    %v2406 = vsub.s32 %v2395, %v2405
    %v2407 = vrot.slane %v2378, %v2406
    %v2408 = vlaneseq
    %v2409 = vshrl.u32 %v2408, 7
    %v2410 = vsub.s32 %v2395, %v2409
    %v2411 = vrot.slane %v2379, %v2410
    %v2412 = vlaneseq
    %v2413 = vshrl.u32 %v2412, 7
    %v2414 = vsub.s32 %v2395, %v2413
    %v2415 = vrot.slane %v2380, %v2414
    %v2416 = vlaneseq
    %v2417 = vshrl.u32 %v2416, 7
    %v2418 = vsub.s32 %v2395, %v2417
    %v2419 = vrot.slane %v2381, %v2418
    %v2420 = vlaneseq
    %v2421 = vshrl.u32 %v2420, 7
    %v2422 = vsub.s32 %v2395, %v2421
    %v2423 = vrot.slane %v2382, %v2422
    %v2424 = vlaneseq
    %v2425 = vshrl.u32 %v2424, 7
    %v2426 = vsub.s32 %v2395, %v2425
    %v2427 = vrot.slane %v2383, %v2426
    %vm2428 = vcmask 1041409
    %v2429 = vsel %vm2428, %v2403, %v2399
    %vm2430 = vcmask 1042434
    %v2431 = vsel %vm2430, %v2407, %v2429
    %vm2432 = vcmask 1043459
    %v2433 = vsel %vm2432, %v2411, %v2431
    %vm2434 = vcmask 1044484
    %v2435 = vsel %vm2434, %v2415, %v2433
    %vm2436 = vcmask 1045509
    %v2437 = vsel %vm2436, %v2419, %v2435
    %vm2438 = vcmask 1046534
    %v2439 = vsel %vm2438, %v2423, %v2437
    %vm2440 = vcmask 1047559
    %v2441 = vsel %vm2440, %v2427, %v2439
    %v2443 = vsel %vm2385, %v2441, -1e+10
    %vm2444 = vcmask 64512
    %v2445 = vsel %vm2444, %v2443, -inf
    %v2446 = vrot.slane %v2445, 4
    %v2447 = vmax.f32 %v2445, %v2446
    %v2448 = vrot.slane %v2447, 2
    %v2449 = vmax.f32 %v2447, %v2448
    %v2450 = vrot.slane %v2449, 1
    %v2451 = vmax.f32 %v2449, %v2450
    %v2452 = vsub.f32 %v2443, %v2451
    %v2453 = vmul.f32 %v2452, 1.442695
    %v2454 = vpow.pop %v2453
    %v2455 = vsel %vm2444, %v2454, 0.0
    %v2456 = vrot.slane %v2455, 4
    %v2457 = vadd.f32 %v2455, %v2456
    %v2458 = vrot.slane %v2457, 2
    %v2459 = vadd.f32 %v2457, %v2458
    %v2460 = vrot.slane %v2459, 1
    %v2461 = vadd.f32 %v2459, %v2460
    %v2462 = vlog2.pop %v2461
    %v2463 = vmul.f32 %v2462, 0.6931472
    %v2464 = vsub.f32 %v2452, %v2463
    %2465 = vst.msk [vmem:[%s8] sm:$0xff] %vm2444, %v2464
    // Predicated region
    $region46: #{_qem_run.1} parent=1 // pred_check
      _
    $region47: #{_qem_run.1} parent=1 // pred_check_branch
      %2467 = sbr.rel (0) target = $region49
    $region48: #{_qem_run.1} parent=1 // pred_region
      _
    $region49: #{_qem_run.1} parent=1 // pred_fallthru
      _
    // Predicated region
    $region50: #{_qem_run.1} parent=1 // pred_check
      _
    $region51: #{_qem_run.1} parent=1 // pred_check_branch
      %2469 = sbr.rel (0) target = $region53
    $region52: #{_qem_run.1} parent=1 // pred_region
      _
    $region53: #{_qem_run.1} parent=1 // pred_fallthru
      _
    %2470 = vsyncpa [#allocation7], 1
    %2471 = vsyncpa [#allocation9], 1

</llo_original>
